<compile_context>
chip_gen: v7x
topology: tpu7x:2x2x1
jax: 0.10.0
libtpu: 0.0.40
codegen_flags: <defaults>
</compile_context>

<pallas_src>
import jax
import jax.numpy as jnp
from jax.experimental import pallas as pl
from jax.experimental.pallas import tpu as pltpu

NHEADS = 4
NEG = -1e30   # additive mask value (exp() underflows to 0, matching -inf semantics)
LN_EPS = 1e-5
HI = jax.lax.Precision.HIGHEST


def _layernorm(x, g, b):
    mu = jnp.mean(x, axis=-1, keepdims=True)
    var = jnp.mean(jnp.square(x - mu), axis=-1, keepdims=True)
    return (x - mu) * jax.lax.rsqrt(var + LN_EPS) * g + b


# ---------------------------------------------------------------------------
# Fused Pallas kernel: L post-norm encoder layers + sum over sequence, whole
# batch in one grid step (one pallas_call, weights resident in VMEM).
# ---------------------------------------------------------------------------
def fused_encoder_kernel(x_ref, bias_ref, wqkv_ref, wo_ref, w1_ref, w2_ref,
                         misc_ref, o_ref):
    B, S, E = x_ref.shape
    L = wqkv_ref.shape[0]
    F = w1_ref.shape[2]
    hd = E // NHEADS

    # Batched activations: all dense matmuls / LayerNorms run on the (B*S, E) slab.
    h2 = x_ref[...].reshape(B * S, E)

    # Key-padding additive bias, broadcast once per sample to the stacked-head
    # score shape (NHEADS*S, S).  Hoisted out of the layer loop (no CSE in JAX).
    bias_all = bias_ref[...]                                    # (B, S)
    bias2d = [jnp.broadcast_to(bias_all[b:b + 1, :], (NHEADS * S, S))
              for b in range(B)]

    for l in range(L):                                          # static, unrolled
        misc = misc_ref[l]                                      # (8, W) packed biases
        bqkv = misc[0:1, :3 * E]          # scale already folded into the Q slice
        bo   = misc[1:2, :E]
        b1   = misc[2:3, :F]
        b2   = misc[3:4, :E]
        g1   = misc[4:5, :E]
        be1  = misc[5:6, :E]
        g2   = misc[6:7, :E]
        be2  = misc[7:8, :E]
        wo_l = wo_ref[l]                                        # (E, E)

        # Fused Q/K/V projection over all B*S rows at once.
        qkv = jnp.dot(h2, wqkv_ref[l], preferred_element_type=jnp.float32) + bqkv

        attn_rows = []
        for b in range(B):                                      # tiny static loop
            rows = slice(b * S, (b + 1) * S)                    # sublane slice
            qb = qkv[rows, 0 * E:1 * E]                         # (S, E)
            kb = qkv[rows, 1 * E:2 * E]
            vb = qkv[rows, 2 * E:3 * E]
            kbT = kb.T                       # ONE transpose per (layer, sample)

            # Per-head scores stacked along sublanes -> single fused softmax.
            sc = jnp.concatenate(
                [jnp.dot(qb[:, hh * hd:(hh + 1) * hd],
                         kbT[hh * hd:(hh + 1) * hd, :],
                         preferred_element_type=jnp.float32)
                 for hh in range(NHEADS)], axis=0)              # (NHEADS*S, S)
            sc = sc + bias2d[b]                                 # mask padded keys
            m = jnp.max(sc, axis=-1, keepdims=True)
            e = jnp.exp(sc - m)
            p = e / jnp.sum(e, axis=-1, keepdims=True)          # exact divide

            # Output projection via W_O row-slices (sublane slices), no lane concat.
            attn_b = jnp.zeros((S, E), jnp.float32)
            for hh in range(NHEADS):
                pv = jnp.dot(p[hh * S:(hh + 1) * S, :],
                             vb[:, hh * hd:(hh + 1) * hd],
                             preferred_element_type=jnp.float32)        # (S, hd)
                attn_b = attn_b + jnp.dot(pv, wo_l[hh * hd:(hh + 1) * hd, :],
                                          preferred_element_type=jnp.float32)
            attn_rows.append(attn_b)

        attn = jnp.concatenate(attn_rows, axis=0) + bo          # (B*S, E)

        # residual + LayerNorm 1
        src = _layernorm(h2 + attn, g1, be1)

        # feed-forward (E -> F -> E, ReLU); dropout disabled (eval)
        hid = jnp.maximum(
            jnp.dot(src, w1_ref[l], preferred_element_type=jnp.float32) + b1, 0.0)
        ff = jnp.dot(hid, w2_ref[l], preferred_element_type=jnp.float32) + b2

        # residual + LayerNorm 2
        h2 = _layernorm(src + ff, g2, be2)

    # Final reduction: embeddings.transpose(0,1).sum(dim=1) per sample.
    sums = jnp.concatenate(
        [jnp.sum(h2[b * S:(b + 1) * S, :], axis=0, keepdims=True)
         for b in range(B)], axis=0)                            # (B, E)
    o_ref[...] = sums


def fused_forward(x, mask_bias, packed):
    """x: (B,S,E) f32, mask_bias: (B,S) f32, packed: stacked layer params."""
    B, S, E = x.shape
    L, _, F = packed["w1"].shape
    W = packed["misc"].shape[-1]

    def full(shape):                     # one block == the whole array, DMA'd once
        return pl.BlockSpec(shape, lambda i: (0,) * len(shape))

    out = pl.pallas_call(
        fused_encoder_kernel,
        out_shape=jax.ShapeDtypeStruct((B, E), jnp.float32),
        grid_spec=pltpu.PrefetchScalarGridSpec(
            num_scalar_prefetch=0,
            grid=(1,),                                # collapsed grid: one step
            in_specs=[
                full((B, S, E)),                      # x
                full((B, S)),                         # key-padding bias
                full((L, E, 3 * E)),                  # wqkv (Q scale folded)
                full((L, E, E)),                      # wo
                full((L, E, F)),                      # w1
                full((L, F, E)),                      # w2
                full((L, 8, W)),                      # packed biases / LN params
            ],
            out_specs=full((B, E)),
        ),
        compiler_params=pltpu.CompilerParams(
            dimension_semantics=("arbitrary",),
            vmem_limit_bytes=32 * 1024 * 1024),
    )(x, mask_bias, packed["wqkv"], packed["wo"], packed["w1"], packed["w2"],
      packed["misc"])
    return out                                        # (B, E)


# ---------------------------------------------------------------------------
# Pure-JAX reference (mirrors PyTorch TransformerEncoder, eval mode), run at
# Precision.HIGHEST so the tolerance check is against true f32 math.
# ---------------------------------------------------------------------------
def ref_layer(x, mask_bias, p):
    B, S, E = x.shape
    hd = E // NHEADS
    scale = 1.0 / (hd ** 0.5)
    q = jnp.dot(x, p["wq"], precision=HI) + p["bq"]
    k = jnp.dot(x, p["wk"], precision=HI) + p["bk"]
    v = jnp.dot(x, p["wv"], precision=HI) + p["bv"]
    qh = q.reshape(B, S, NHEADS, hd).transpose(0, 2, 1, 3)
    kh = k.reshape(B, S, NHEADS, hd).transpose(0, 2, 1, 3)
    vh = v.reshape(B, S, NHEADS, hd).transpose(0, 2, 1, 3)
    s = jnp.einsum("bhqd,bhkd->bhqk", qh * scale, kh, precision=HI)
    s = s + mask_bias[:, None, None, :]
    m = jnp.max(s, axis=-1, keepdims=True)
    e = jnp.exp(s - m)
    pr = e / jnp.sum(e, axis=-1, keepdims=True)
    head = jnp.einsum("bhqk,bhkd->bhqd", pr, vh, precision=HI)
    attn = jnp.dot(head.transpose(0, 2, 1, 3).reshape(B, S, E), p["wo"],
                   precision=HI) + p["bo"]
    src = _layernorm(x + attn, p["g1"], p["be1"])
    hid = jnp.maximum(jnp.dot(src, p["w1"], precision=HI) + p["b1"], 0.0)
    ff = jnp.dot(hid, p["w2"], precision=HI) + p["b2"]
    return _layernorm(src + ff, p["g2"], p["be2"])


# ---------------------------------------------------------------------------
# Parameter construction / packing (deterministic, synthetic).
# ---------------------------------------------------------------------------
def make_layer_params(key, E, F):
    ks = jax.random.split(key, 8)
    n = lambda k, s: (0.1 * jax.random.normal(k, s)).astype(jnp.float32)
    return {
        "wq": n(ks[0], (E, E)), "bq": n(ks[1], (1, E)),
        "wk": n(ks[2], (E, E)), "bk": n(ks[3], (1, E)),
        "wv": n(ks[4], (E, E)), "bv": n(ks[5], (1, E)),
        "wo": n(ks[6], (E, E)), "bo": n(ks[7], (1, E)),
        "w1": n(jax.random.fold_in(key, 101), (E, F)),
        "b1": n(jax.random.fold_in(key, 102), (1, F)),
        "w2": n(jax.random.fold_in(key, 103), (F, E)),
        "b2": n(jax.random.fold_in(key, 104), (1, E)),
        "g1": jnp.ones((1, E), jnp.float32), "be1": jnp.zeros((1, E), jnp.float32),
        "g2": jnp.ones((1, E), jnp.float32), "be2": jnp.zeros((1, E), jnp.float32),
    }


def pack_params(layer_params):
    """Stack per-layer params, fuse QKV, fold attention scale into Q, and pack the
    8 tiny bias/LN vectors into one (L, 8, W) array (static row slices in-kernel)."""
    E = layer_params[0]["wq"].shape[0]
    F = layer_params[0]["w1"].shape[1]
    hd = E // NHEADS
    scale = 1.0 / (hd ** 0.5)
    W = max(3 * E, F, E)

    def pad(v):                                   # (1, w) -> (1, W)
        return jnp.pad(v, ((0, 0), (0, W - v.shape[1])))

    def stack(fn):
        return jnp.stack([fn(p) for p in layer_params]).astype(jnp.float32)

    return {
        "wqkv": stack(lambda p: jnp.concatenate(
            [p["wq"] * scale, p["wk"], p["wv"]], axis=1)),
        "wo": stack(lambda p: p["wo"]),
        "w1": stack(lambda p: p["w1"]),
        "w2": stack(lambda p: p["w2"]),
        "misc": stack(lambda p: jnp.concatenate([
            pad(jnp.concatenate([p["bq"] * scale, p["bk"], p["bv"]], axis=1)),
            pad(p["bo"]), pad(p["b1"]), pad(p["b2"]),
            pad(p["g1"]), pad(p["be1"]), pad(p["g2"]), pad(p["be2"]),
        ], axis=0)),
    }


def forward(items, emb_table, packed):
    """items: (S, B) int32. Returns (out (B,E), x (B,S,E), mask_bias (B,S))."""
    # Embedding gather stays in the JAX wrapper (glue); a DMA-gather kernel would be
    # overkill for a (S,B) lookup.
    x_sbe = emb_table[items]                       # (S, B, E)
    x = jnp.transpose(x_sbe, (1, 0, 2))            # (B, S, E) kernel layout
    mask = (jnp.sum(x, axis=-1) == 0)              # (B, S) == binary_mask of the module
    mask_bias = jnp.where(mask, NEG, 0.0).astype(jnp.float32)   # (B, S)
    out = fused_forward(x, mask_bias, packed)      # single fused pallas_call
    return out, x, mask_bias


if __name__ == "__main__":
    V, E, F, S, B, L = 20, 32, 64, 8, 2, 2   # vocab, embed_dim, dim_feedforward, seq, batch, layers

    key = jax.random.PRNGKey(0)
    k_emb, k_items, k_layers = jax.random.split(key, 3)

    # Embedding table; row 0 acts as padding (all zeros), so x.sum(-1)==0 marks padding.
    emb_table = (0.1 * jax.random.normal(k_emb, (V, E))).astype(jnp.float32)
    emb_table = emb_table.at[0].set(0.0)

    # items: (S, B) int32, with some padding positions in batch 1.
    items = jax.random.randint(k_items, (S, B), 0, V)
    items = items.at[0, :].set(jnp.array([3, 5], dtype=items.dtype))  # at least one real token
    items = items.at[5:, 1].set(0)                                    # padded tail

    layer_params = [make_layer_params(jax.random.fold_in(k_layers, i), E, F)
                    for i in range(L)]
    packed = pack_params(layer_params)   # done once, offline (not per call)

    out, x, mask_bias = forward(items, emb_table, packed)
    out = jax.block_until_ready(out)

    # Pure-JAX reference check (exact softmax divide, HIGHEST-precision matmuls).
    href = x
    for lp in layer_params:
        href = ref_layer(href, mask_bias, lp)
    ref = jnp.sum(href, axis=1)

    max_err = float(jnp.max(jnp.abs(out - ref)))
    assert max_err < 2e-3, f"mismatch vs reference: {max_err}"
    print("KERNEL_OK")
</pallas_src>

<mosaic_0001>
module attributes {stable_mosaic.version = 11 : i64} {
  func.func @fused_encoder_kernel(%arg0: i32, %arg1: memref<2x8x32xf32, #tpu.memory_space<vmem>>, %arg2: memref<2x8xf32, #tpu.memory_space<vmem>>, %arg3: memref<2x32x96xf32, #tpu.memory_space<vmem>>, %arg4: memref<2x32x32xf32, #tpu.memory_space<vmem>>, %arg5: memref<2x32x64xf32, #tpu.memory_space<vmem>>, %arg6: memref<2x64x32xf32, #tpu.memory_space<vmem>>, %arg7: memref<2x8x96xf32, #tpu.memory_space<vmem>>, %arg8: memref<2x32xf32, #tpu.memory_space<vmem>>) attributes {dimension_semantics = [#tpu.dimension_semantics<arbitrary>], iteration_bounds = array<i64: 1>, scalar_prefetch = 0 : i64, scratch_operands = 0 : i64, tpu.core_type = #tpu.core_type<tc>, window_params = [{pipeline_mode = #tpu.pipeline_mode<synchronous>, transform_indices = @transform_0, window_bounds = array<i64: 2, 8, 32>}, {pipeline_mode = #tpu.pipeline_mode<synchronous>, transform_indices = @transform_1, window_bounds = array<i64: 2, 8>}, {pipeline_mode = #tpu.pipeline_mode<synchronous>, transform_indices = @transform_2, window_bounds = array<i64: 2, 32, 96>}, {pipeline_mode = #tpu.pipeline_mode<synchronous>, transform_indices = @transform_3, window_bounds = array<i64: 2, 32, 32>}, {pipeline_mode = #tpu.pipeline_mode<synchronous>, transform_indices = @transform_4, window_bounds = array<i64: 2, 32, 64>}, {pipeline_mode = #tpu.pipeline_mode<synchronous>, transform_indices = @transform_5, window_bounds = array<i64: 2, 64, 32>}, {pipeline_mode = #tpu.pipeline_mode<synchronous>, transform_indices = @transform_6, window_bounds = array<i64: 2, 8, 96>}, {pipeline_mode = #tpu.pipeline_mode<synchronous>, transform_indices = @transform_7, window_bounds = array<i64: 2, 32>}]} {
    %c0 = arith.constant 0 : index
    %c0_0 = arith.constant 0 : index
    %c0_1 = arith.constant 0 : index
    %0 = vector.load %arg1[%c0, %c0_0, %c0_1] : memref<2x8x32xf32, #tpu.memory_space<vmem>>, vector<2x8x32xf32>
    %1 = vector.shape_cast %0 : vector<2x8x32xf32> to vector<16x32xf32>
    %c0_2 = arith.constant 0 : index
    %c0_3 = arith.constant 0 : index
    %2 = vector.load %arg2[%c0_2, %c0_3] : memref<2x8xf32, #tpu.memory_space<vmem>>, vector<2x8xf32>
    %3 = vector.extract_strided_slice %2 {offsets = [0, 0], sizes = [1, 8], strides = [1, 1]} : vector<2x8xf32> to vector<1x8xf32>
    %4 = vector.shape_cast %3 : vector<1x8xf32> to vector<1x8xf32>
    %5 = vector.broadcast %4 : vector<1x8xf32> to vector<32x8xf32>
    %6 = vector.extract_strided_slice %2 {offsets = [1, 0], sizes = [1, 8], strides = [1, 1]} : vector<2x8xf32> to vector<1x8xf32>
    %7 = vector.shape_cast %6 : vector<1x8xf32> to vector<1x8xf32>
    %8 = vector.broadcast %7 : vector<1x8xf32> to vector<32x8xf32>
    %c0_4 = arith.constant 0 : index
    %c0_5 = arith.constant 0 : index
    %c0_6 = arith.constant 0 : index
    %9 = vector.load %arg7[%c0_4, %c0_5, %c0_6] : memref<2x8x96xf32, #tpu.memory_space<vmem>>, vector<1x8x96xf32>
    %10 = vector.shape_cast %9 : vector<1x8x96xf32> to vector<8x96xf32>
    %11 = vector.extract_strided_slice %10 {offsets = [0, 0], sizes = [1, 96], strides = [1, 1]} : vector<8x96xf32> to vector<1x96xf32>
    %12 = vector.extract_strided_slice %10 {offsets = [1, 0], sizes = [1, 32], strides = [1, 1]} : vector<8x96xf32> to vector<1x32xf32>
    %13 = vector.extract_strided_slice %10 {offsets = [2, 0], sizes = [1, 64], strides = [1, 1]} : vector<8x96xf32> to vector<1x64xf32>
    %14 = vector.extract_strided_slice %10 {offsets = [3, 0], sizes = [1, 32], strides = [1, 1]} : vector<8x96xf32> to vector<1x32xf32>
    %15 = vector.extract_strided_slice %10 {offsets = [4, 0], sizes = [1, 32], strides = [1, 1]} : vector<8x96xf32> to vector<1x32xf32>
    %16 = vector.extract_strided_slice %10 {offsets = [5, 0], sizes = [1, 32], strides = [1, 1]} : vector<8x96xf32> to vector<1x32xf32>
    %17 = vector.extract_strided_slice %10 {offsets = [6, 0], sizes = [1, 32], strides = [1, 1]} : vector<8x96xf32> to vector<1x32xf32>
    %18 = vector.extract_strided_slice %10 {offsets = [7, 0], sizes = [1, 32], strides = [1, 1]} : vector<8x96xf32> to vector<1x32xf32>
    %c0_7 = arith.constant 0 : index
    %c0_8 = arith.constant 0 : index
    %c0_9 = arith.constant 0 : index
    %19 = vector.load %arg4[%c0_7, %c0_8, %c0_9] : memref<2x32x32xf32, #tpu.memory_space<vmem>>, vector<1x32x32xf32>
    %20 = vector.shape_cast %19 : vector<1x32x32xf32> to vector<32x32xf32>
    %c0_10 = arith.constant 0 : index
    %c0_11 = arith.constant 0 : index
    %c0_12 = arith.constant 0 : index
    %21 = vector.load %arg3[%c0_10, %c0_11, %c0_12] : memref<2x32x96xf32, #tpu.memory_space<vmem>>, vector<1x32x96xf32>
    %22 = vector.shape_cast %21 : vector<1x32x96xf32> to vector<32x96xf32>
    %cst = arith.constant dense<0.000000e+00> : vector<16x96xf32>
    %23 = tpu.matmul %1, %22, %cst {dimension_numbers = #tpu.dot_dimension_numbers<[1], [0], [0], [1], [0, 0, 1, 1], [], []>} : vector<16x32xf32>, vector<32x96xf32>, vector<16x96xf32> -> vector<16x96xf32>
    %24 = vector.broadcast %11 : vector<1x96xf32> to vector<16x96xf32>
    %25 = arith.addf %23, %24 : vector<16x96xf32>
    %26 = vector.extract_strided_slice %25 {offsets = [0, 0], sizes = [8, 32], strides = [1, 1]} : vector<16x96xf32> to vector<8x32xf32>
    %27 = vector.extract_strided_slice %25 {offsets = [0, 32], sizes = [8, 32], strides = [1, 1]} : vector<16x96xf32> to vector<8x32xf32>
    %28 = vector.extract_strided_slice %25 {offsets = [0, 64], sizes = [8, 32], strides = [1, 1]} : vector<16x96xf32> to vector<8x32xf32>
    %29 = tpu.transpose %27, [1, 0] : vector<8x32xf32> -> vector<32x8xf32>
    %30 = vector.extract_strided_slice %26 {offsets = [0, 0], sizes = [8, 8], strides = [1, 1]} : vector<8x32xf32> to vector<8x8xf32>
    %31 = vector.extract_strided_slice %29 {offsets = [0, 0], sizes = [8, 8], strides = [1, 1]} : vector<32x8xf32> to vector<8x8xf32>
    %cst_13 = arith.constant dense<0.000000e+00> : vector<8x8xf32>
    %32 = tpu.matmul %30, %31, %cst_13 {dimension_numbers = #tpu.dot_dimension_numbers<[1], [0], [0], [1], [0, 0, 1, 1], [], []>} : vector<8x8xf32>, vector<8x8xf32>, vector<8x8xf32> -> vector<8x8xf32>
    %33 = vector.extract_strided_slice %26 {offsets = [0, 8], sizes = [8, 8], strides = [1, 1]} : vector<8x32xf32> to vector<8x8xf32>
    %34 = vector.extract_strided_slice %29 {offsets = [8, 0], sizes = [8, 8], strides = [1, 1]} : vector<32x8xf32> to vector<8x8xf32>
    %cst_14 = arith.constant dense<0.000000e+00> : vector<8x8xf32>
    %35 = tpu.matmul %33, %34, %cst_14 {dimension_numbers = #tpu.dot_dimension_numbers<[1], [0], [0], [1], [0, 0, 1, 1], [], []>} : vector<8x8xf32>, vector<8x8xf32>, vector<8x8xf32> -> vector<8x8xf32>
    %36 = vector.extract_strided_slice %26 {offsets = [0, 16], sizes = [8, 8], strides = [1, 1]} : vector<8x32xf32> to vector<8x8xf32>
    %37 = vector.extract_strided_slice %29 {offsets = [16, 0], sizes = [8, 8], strides = [1, 1]} : vector<32x8xf32> to vector<8x8xf32>
    %cst_15 = arith.constant dense<0.000000e+00> : vector<8x8xf32>
    %38 = tpu.matmul %36, %37, %cst_15 {dimension_numbers = #tpu.dot_dimension_numbers<[1], [0], [0], [1], [0, 0, 1, 1], [], []>} : vector<8x8xf32>, vector<8x8xf32>, vector<8x8xf32> -> vector<8x8xf32>
    %39 = vector.extract_strided_slice %26 {offsets = [0, 24], sizes = [8, 8], strides = [1, 1]} : vector<8x32xf32> to vector<8x8xf32>
    %40 = vector.extract_strided_slice %29 {offsets = [24, 0], sizes = [8, 8], strides = [1, 1]} : vector<32x8xf32> to vector<8x8xf32>
    %cst_16 = arith.constant dense<0.000000e+00> : vector<8x8xf32>
    %41 = tpu.matmul %39, %40, %cst_16 {dimension_numbers = #tpu.dot_dimension_numbers<[1], [0], [0], [1], [0, 0, 1, 1], [], []>} : vector<8x8xf32>, vector<8x8xf32>, vector<8x8xf32> -> vector<8x8xf32>
    %42 = tpu.concatenate %32, %35, %38, %41 in 0 : vector<8x8xf32>, vector<8x8xf32>, vector<8x8xf32>, vector<8x8xf32> -> vector<32x8xf32>
    %43 = arith.addf %42, %5 : vector<32x8xf32>
    %cst_17 = arith.constant dense<0xFF800000> : vector<32xf32>
    %44 = vector.multi_reduction <maximumf>, %43, %cst_17 [1] : vector<32x8xf32> to vector<32xf32>
    %45 = vector.shape_cast %44 : vector<32xf32> to vector<32x1xf32>
    %46 = vector.broadcast %45 : vector<32x1xf32> to vector<32x8xf32>
    %47 = arith.subf %43, %46 : vector<32x8xf32>
    %48 = math.exp %47 : vector<32x8xf32>
    %cst_18 = arith.constant dense<0.000000e+00> : vector<32xf32>
    %49 = vector.multi_reduction <add>, %48, %cst_18 [1] : vector<32x8xf32> to vector<32xf32>
    %50 = vector.shape_cast %49 : vector<32xf32> to vector<32x1xf32>
    %51 = vector.broadcast %50 : vector<32x1xf32> to vector<32x8xf32>
    %52 = arith.divf %48, %51 : vector<32x8xf32>
    %cst_19 = arith.constant 0.000000e+00 : f32
    %53 = vector.broadcast %cst_19 : f32 to vector<8x32xf32>
    %54 = vector.extract_strided_slice %52 {offsets = [0, 0], sizes = [8, 8], strides = [1, 1]} : vector<32x8xf32> to vector<8x8xf32>
    %55 = vector.extract_strided_slice %28 {offsets = [0, 0], sizes = [8, 8], strides = [1, 1]} : vector<8x32xf32> to vector<8x8xf32>
    %cst_20 = arith.constant dense<0.000000e+00> : vector<8x8xf32>
    %56 = tpu.matmul %54, %55, %cst_20 {dimension_numbers = #tpu.dot_dimension_numbers<[1], [0], [0], [1], [0, 0, 1, 1], [], []>} : vector<8x8xf32>, vector<8x8xf32>, vector<8x8xf32> -> vector<8x8xf32>
    %57 = vector.extract_strided_slice %20 {offsets = [0, 0], sizes = [8, 32], strides = [1, 1]} : vector<32x32xf32> to vector<8x32xf32>
    %cst_21 = arith.constant dense<0.000000e+00> : vector<8x32xf32>
    %58 = tpu.matmul %56, %57, %cst_21 {dimension_numbers = #tpu.dot_dimension_numbers<[1], [0], [0], [1], [0, 0, 1, 1], [], []>} : vector<8x8xf32>, vector<8x32xf32>, vector<8x32xf32> -> vector<8x32xf32>
    %59 = arith.addf %53, %58 : vector<8x32xf32>
    %60 = vector.extract_strided_slice %52 {offsets = [8, 0], sizes = [8, 8], strides = [1, 1]} : vector<32x8xf32> to vector<8x8xf32>
    %61 = vector.extract_strided_slice %28 {offsets = [0, 8], sizes = [8, 8], strides = [1, 1]} : vector<8x32xf32> to vector<8x8xf32>
    %cst_22 = arith.constant dense<0.000000e+00> : vector<8x8xf32>
    %62 = tpu.matmul %60, %61, %cst_22 {dimension_numbers = #tpu.dot_dimension_numbers<[1], [0], [0], [1], [0, 0, 1, 1], [], []>} : vector<8x8xf32>, vector<8x8xf32>, vector<8x8xf32> -> vector<8x8xf32>
    %63 = vector.extract_strided_slice %20 {offsets = [8, 0], sizes = [8, 32], strides = [1, 1]} : vector<32x32xf32> to vector<8x32xf32>
    %cst_23 = arith.constant dense<0.000000e+00> : vector<8x32xf32>
    %64 = tpu.matmul %62, %63, %cst_23 {dimension_numbers = #tpu.dot_dimension_numbers<[1], [0], [0], [1], [0, 0, 1, 1], [], []>} : vector<8x8xf32>, vector<8x32xf32>, vector<8x32xf32> -> vector<8x32xf32>
    %65 = arith.addf %59, %64 : vector<8x32xf32>
    %66 = vector.extract_strided_slice %52 {offsets = [16, 0], sizes = [8, 8], strides = [1, 1]} : vector<32x8xf32> to vector<8x8xf32>
    %67 = vector.extract_strided_slice %28 {offsets = [0, 16], sizes = [8, 8], strides = [1, 1]} : vector<8x32xf32> to vector<8x8xf32>
    %cst_24 = arith.constant dense<0.000000e+00> : vector<8x8xf32>
    %68 = tpu.matmul %66, %67, %cst_24 {dimension_numbers = #tpu.dot_dimension_numbers<[1], [0], [0], [1], [0, 0, 1, 1], [], []>} : vector<8x8xf32>, vector<8x8xf32>, vector<8x8xf32> -> vector<8x8xf32>
    %69 = vector.extract_strided_slice %20 {offsets = [16, 0], sizes = [8, 32], strides = [1, 1]} : vector<32x32xf32> to vector<8x32xf32>
    %cst_25 = arith.constant dense<0.000000e+00> : vector<8x32xf32>
    %70 = tpu.matmul %68, %69, %cst_25 {dimension_numbers = #tpu.dot_dimension_numbers<[1], [0], [0], [1], [0, 0, 1, 1], [], []>} : vector<8x8xf32>, vector<8x32xf32>, vector<8x32xf32> -> vector<8x32xf32>
    %71 = arith.addf %65, %70 : vector<8x32xf32>
    %72 = vector.extract_strided_slice %52 {offsets = [24, 0], sizes = [8, 8], strides = [1, 1]} : vector<32x8xf32> to vector<8x8xf32>
    %73 = vector.extract_strided_slice %28 {offsets = [0, 24], sizes = [8, 8], strides = [1, 1]} : vector<8x32xf32> to vector<8x8xf32>
    %cst_26 = arith.constant dense<0.000000e+00> : vector<8x8xf32>
    %74 = tpu.matmul %72, %73, %cst_26 {dimension_numbers = #tpu.dot_dimension_numbers<[1], [0], [0], [1], [0, 0, 1, 1], [], []>} : vector<8x8xf32>, vector<8x8xf32>, vector<8x8xf32> -> vector<8x8xf32>
    %75 = vector.extract_strided_slice %20 {offsets = [24, 0], sizes = [8, 32], strides = [1, 1]} : vector<32x32xf32> to vector<8x32xf32>
    %cst_27 = arith.constant dense<0.000000e+00> : vector<8x32xf32>
    %76 = tpu.matmul %74, %75, %cst_27 {dimension_numbers = #tpu.dot_dimension_numbers<[1], [0], [0], [1], [0, 0, 1, 1], [], []>} : vector<8x8xf32>, vector<8x32xf32>, vector<8x32xf32> -> vector<8x32xf32>
    %77 = arith.addf %71, %76 : vector<8x32xf32>
    %78 = vector.extract_strided_slice %25 {offsets = [8, 0], sizes = [8, 32], strides = [1, 1]} : vector<16x96xf32> to vector<8x32xf32>
    %79 = vector.extract_strided_slice %25 {offsets = [8, 32], sizes = [8, 32], strides = [1, 1]} : vector<16x96xf32> to vector<8x32xf32>
    %80 = vector.extract_strided_slice %25 {offsets = [8, 64], sizes = [8, 32], strides = [1, 1]} : vector<16x96xf32> to vector<8x32xf32>
    %81 = tpu.transpose %79, [1, 0] : vector<8x32xf32> -> vector<32x8xf32>
    %82 = vector.extract_strided_slice %78 {offsets = [0, 0], sizes = [8, 8], strides = [1, 1]} : vector<8x32xf32> to vector<8x8xf32>
    %83 = vector.extract_strided_slice %81 {offsets = [0, 0], sizes = [8, 8], strides = [1, 1]} : vector<32x8xf32> to vector<8x8xf32>
    %cst_28 = arith.constant dense<0.000000e+00> : vector<8x8xf32>
    %84 = tpu.matmul %82, %83, %cst_28 {dimension_numbers = #tpu.dot_dimension_numbers<[1], [0], [0], [1], [0, 0, 1, 1], [], []>} : vector<8x8xf32>, vector<8x8xf32>, vector<8x8xf32> -> vector<8x8xf32>
    %85 = vector.extract_strided_slice %78 {offsets = [0, 8], sizes = [8, 8], strides = [1, 1]} : vector<8x32xf32> to vector<8x8xf32>
    %86 = vector.extract_strided_slice %81 {offsets = [8, 0], sizes = [8, 8], strides = [1, 1]} : vector<32x8xf32> to vector<8x8xf32>
    %cst_29 = arith.constant dense<0.000000e+00> : vector<8x8xf32>
    %87 = tpu.matmul %85, %86, %cst_29 {dimension_numbers = #tpu.dot_dimension_numbers<[1], [0], [0], [1], [0, 0, 1, 1], [], []>} : vector<8x8xf32>, vector<8x8xf32>, vector<8x8xf32> -> vector<8x8xf32>
    %88 = vector.extract_strided_slice %78 {offsets = [0, 16], sizes = [8, 8], strides = [1, 1]} : vector<8x32xf32> to vector<8x8xf32>
    %89 = vector.extract_strided_slice %81 {offsets = [16, 0], sizes = [8, 8], strides = [1, 1]} : vector<32x8xf32> to vector<8x8xf32>
    %cst_30 = arith.constant dense<0.000000e+00> : vector<8x8xf32>
    %90 = tpu.matmul %88, %89, %cst_30 {dimension_numbers = #tpu.dot_dimension_numbers<[1], [0], [0], [1], [0, 0, 1, 1], [], []>} : vector<8x8xf32>, vector<8x8xf32>, vector<8x8xf32> -> vector<8x8xf32>
    %91 = vector.extract_strided_slice %78 {offsets = [0, 24], sizes = [8, 8], strides = [1, 1]} : vector<8x32xf32> to vector<8x8xf32>
    %92 = vector.extract_strided_slice %81 {offsets = [24, 0], sizes = [8, 8], strides = [1, 1]} : vector<32x8xf32> to vector<8x8xf32>
    %cst_31 = arith.constant dense<0.000000e+00> : vector<8x8xf32>
    %93 = tpu.matmul %91, %92, %cst_31 {dimension_numbers = #tpu.dot_dimension_numbers<[1], [0], [0], [1], [0, 0, 1, 1], [], []>} : vector<8x8xf32>, vector<8x8xf32>, vector<8x8xf32> -> vector<8x8xf32>
    %94 = tpu.concatenate %84, %87, %90, %93 in 0 : vector<8x8xf32>, vector<8x8xf32>, vector<8x8xf32>, vector<8x8xf32> -> vector<32x8xf32>
    %95 = arith.addf %94, %8 : vector<32x8xf32>
    %cst_32 = arith.constant dense<0xFF800000> : vector<32xf32>
    %96 = vector.multi_reduction <maximumf>, %95, %cst_32 [1] : vector<32x8xf32> to vector<32xf32>
    %97 = vector.shape_cast %96 : vector<32xf32> to vector<32x1xf32>
    %98 = vector.broadcast %97 : vector<32x1xf32> to vector<32x8xf32>
    %99 = arith.subf %95, %98 : vector<32x8xf32>
    %100 = math.exp %99 : vector<32x8xf32>
    %cst_33 = arith.constant dense<0.000000e+00> : vector<32xf32>
    %101 = vector.multi_reduction <add>, %100, %cst_33 [1] : vector<32x8xf32> to vector<32xf32>
    %102 = vector.shape_cast %101 : vector<32xf32> to vector<32x1xf32>
    %103 = vector.broadcast %102 : vector<32x1xf32> to vector<32x8xf32>
    %104 = arith.divf %100, %103 : vector<32x8xf32>
    %cst_34 = arith.constant 0.000000e+00 : f32
    %105 = vector.broadcast %cst_34 : f32 to vector<8x32xf32>
    %106 = vector.extract_strided_slice %104 {offsets = [0, 0], sizes = [8, 8], strides = [1, 1]} : vector<32x8xf32> to vector<8x8xf32>
    %107 = vector.extract_strided_slice %80 {offsets = [0, 0], sizes = [8, 8], strides = [1, 1]} : vector<8x32xf32> to vector<8x8xf32>
    %cst_35 = arith.constant dense<0.000000e+00> : vector<8x8xf32>
    %108 = tpu.matmul %106, %107, %cst_35 {dimension_numbers = #tpu.dot_dimension_numbers<[1], [0], [0], [1], [0, 0, 1, 1], [], []>} : vector<8x8xf32>, vector<8x8xf32>, vector<8x8xf32> -> vector<8x8xf32>
    %109 = vector.extract_strided_slice %20 {offsets = [0, 0], sizes = [8, 32], strides = [1, 1]} : vector<32x32xf32> to vector<8x32xf32>
    %cst_36 = arith.constant dense<0.000000e+00> : vector<8x32xf32>
    %110 = tpu.matmul %108, %109, %cst_36 {dimension_numbers = #tpu.dot_dimension_numbers<[1], [0], [0], [1], [0, 0, 1, 1], [], []>} : vector<8x8xf32>, vector<8x32xf32>, vector<8x32xf32> -> vector<8x32xf32>
    %111 = arith.addf %105, %110 : vector<8x32xf32>
    %112 = vector.extract_strided_slice %104 {offsets = [8, 0], sizes = [8, 8], strides = [1, 1]} : vector<32x8xf32> to vector<8x8xf32>
    %113 = vector.extract_strided_slice %80 {offsets = [0, 8], sizes = [8, 8], strides = [1, 1]} : vector<8x32xf32> to vector<8x8xf32>
    %cst_37 = arith.constant dense<0.000000e+00> : vector<8x8xf32>
    %114 = tpu.matmul %112, %113, %cst_37 {dimension_numbers = #tpu.dot_dimension_numbers<[1], [0], [0], [1], [0, 0, 1, 1], [], []>} : vector<8x8xf32>, vector<8x8xf32>, vector<8x8xf32> -> vector<8x8xf32>
    %115 = vector.extract_strided_slice %20 {offsets = [8, 0], sizes = [8, 32], strides = [1, 1]} : vector<32x32xf32> to vector<8x32xf32>
    %cst_38 = arith.constant dense<0.000000e+00> : vector<8x32xf32>
    %116 = tpu.matmul %114, %115, %cst_38 {dimension_numbers = #tpu.dot_dimension_numbers<[1], [0], [0], [1], [0, 0, 1, 1], [], []>} : vector<8x8xf32>, vector<8x32xf32>, vector<8x32xf32> -> vector<8x32xf32>
    %117 = arith.addf %111, %116 : vector<8x32xf32>
    %118 = vector.extract_strided_slice %104 {offsets = [16, 0], sizes = [8, 8], strides = [1, 1]} : vector<32x8xf32> to vector<8x8xf32>
    %119 = vector.extract_strided_slice %80 {offsets = [0, 16], sizes = [8, 8], strides = [1, 1]} : vector<8x32xf32> to vector<8x8xf32>
    %cst_39 = arith.constant dense<0.000000e+00> : vector<8x8xf32>
    %120 = tpu.matmul %118, %119, %cst_39 {dimension_numbers = #tpu.dot_dimension_numbers<[1], [0], [0], [1], [0, 0, 1, 1], [], []>} : vector<8x8xf32>, vector<8x8xf32>, vector<8x8xf32> -> vector<8x8xf32>
    %121 = vector.extract_strided_slice %20 {offsets = [16, 0], sizes = [8, 32], strides = [1, 1]} : vector<32x32xf32> to vector<8x32xf32>
    %cst_40 = arith.constant dense<0.000000e+00> : vector<8x32xf32>
    %122 = tpu.matmul %120, %121, %cst_40 {dimension_numbers = #tpu.dot_dimension_numbers<[1], [0], [0], [1], [0, 0, 1, 1], [], []>} : vector<8x8xf32>, vector<8x32xf32>, vector<8x32xf32> -> vector<8x32xf32>
    %123 = arith.addf %117, %122 : vector<8x32xf32>
    %124 = vector.extract_strided_slice %104 {offsets = [24, 0], sizes = [8, 8], strides = [1, 1]} : vector<32x8xf32> to vector<8x8xf32>
    %125 = vector.extract_strided_slice %80 {offsets = [0, 24], sizes = [8, 8], strides = [1, 1]} : vector<8x32xf32> to vector<8x8xf32>
    %cst_41 = arith.constant dense<0.000000e+00> : vector<8x8xf32>
    %126 = tpu.matmul %124, %125, %cst_41 {dimension_numbers = #tpu.dot_dimension_numbers<[1], [0], [0], [1], [0, 0, 1, 1], [], []>} : vector<8x8xf32>, vector<8x8xf32>, vector<8x8xf32> -> vector<8x8xf32>
    %127 = vector.extract_strided_slice %20 {offsets = [24, 0], sizes = [8, 32], strides = [1, 1]} : vector<32x32xf32> to vector<8x32xf32>
    %cst_42 = arith.constant dense<0.000000e+00> : vector<8x32xf32>
    %128 = tpu.matmul %126, %127, %cst_42 {dimension_numbers = #tpu.dot_dimension_numbers<[1], [0], [0], [1], [0, 0, 1, 1], [], []>} : vector<8x8xf32>, vector<8x32xf32>, vector<8x32xf32> -> vector<8x32xf32>
    %129 = arith.addf %123, %128 : vector<8x32xf32>
    %130 = tpu.concatenate %77, %129 in 0 : vector<8x32xf32>, vector<8x32xf32> -> vector<16x32xf32>
    %131 = vector.broadcast %12 : vector<1x32xf32> to vector<16x32xf32>
    %132 = arith.addf %130, %131 : vector<16x32xf32>
    %133 = arith.addf %1, %132 : vector<16x32xf32>
    %cst_43 = arith.constant dense<0.000000e+00> : vector<16xf32>
    %134 = vector.multi_reduction <add>, %133, %cst_43 [1] : vector<16x32xf32> to vector<16xf32>
    %135 = vector.shape_cast %134 : vector<16xf32> to vector<16x1xf32>
    %cst_44 = arith.constant 3.200000e+01 : f32
    %136 = vector.broadcast %cst_44 : f32 to vector<16x1xf32>
    %137 = arith.divf %135, %136 : vector<16x1xf32>
    %138 = vector.broadcast %137 : vector<16x1xf32> to vector<16x32xf32>
    %139 = arith.subf %133, %138 : vector<16x32xf32>
    %140 = arith.mulf %139, %139 : vector<16x32xf32>
    %cst_45 = arith.constant dense<0.000000e+00> : vector<16xf32>
    %141 = vector.multi_reduction <add>, %140, %cst_45 [1] : vector<16x32xf32> to vector<16xf32>
    %142 = vector.shape_cast %141 : vector<16xf32> to vector<16x1xf32>
    %cst_46 = arith.constant 3.200000e+01 : f32
    %143 = vector.broadcast %cst_46 : f32 to vector<16x1xf32>
    %144 = arith.divf %142, %143 : vector<16x1xf32>
    %145 = vector.broadcast %137 : vector<16x1xf32> to vector<16x32xf32>
    %146 = arith.subf %133, %145 : vector<16x32xf32>
    %cst_47 = arith.constant 9.99999974E-6 : f32
    %147 = vector.broadcast %cst_47 : f32 to vector<16x1xf32>
    %148 = arith.addf %144, %147 : vector<16x1xf32>
    %149 = math.rsqrt %148 : vector<16x1xf32>
    %150 = vector.broadcast %149 : vector<16x1xf32> to vector<16x32xf32>
    %151 = arith.mulf %146, %150 : vector<16x32xf32>
    %152 = vector.broadcast %15 : vector<1x32xf32> to vector<16x32xf32>
    %153 = arith.mulf %151, %152 : vector<16x32xf32>
    %154 = vector.broadcast %16 : vector<1x32xf32> to vector<16x32xf32>
    %155 = arith.addf %153, %154 : vector<16x32xf32>
    %c0_48 = arith.constant 0 : index
    %c0_49 = arith.constant 0 : index
    %c0_50 = arith.constant 0 : index
    %156 = vector.load %arg5[%c0_48, %c0_49, %c0_50] : memref<2x32x64xf32, #tpu.memory_space<vmem>>, vector<1x32x64xf32>
    %157 = vector.shape_cast %156 : vector<1x32x64xf32> to vector<32x64xf32>
    %cst_51 = arith.constant dense<0.000000e+00> : vector<16x64xf32>
    %158 = tpu.matmul %155, %157, %cst_51 {dimension_numbers = #tpu.dot_dimension_numbers<[1], [0], [0], [1], [0, 0, 1, 1], [], []>} : vector<16x32xf32>, vector<32x64xf32>, vector<16x64xf32> -> vector<16x64xf32>
    %159 = vector.broadcast %13 : vector<1x64xf32> to vector<16x64xf32>
    %160 = arith.addf %158, %159 : vector<16x64xf32>
    %cst_52 = arith.constant 0.000000e+00 : f32
    %161 = vector.broadcast %cst_52 : f32 to vector<16x64xf32>
    %162 = arith.maximumf %160, %161 : vector<16x64xf32>
    %c0_53 = arith.constant 0 : index
    %c0_54 = arith.constant 0 : index
    %c0_55 = arith.constant 0 : index
    %163 = vector.load %arg6[%c0_53, %c0_54, %c0_55] : memref<2x64x32xf32, #tpu.memory_space<vmem>>, vector<1x64x32xf32>
    %164 = vector.shape_cast %163 : vector<1x64x32xf32> to vector<64x32xf32>
    %cst_56 = arith.constant dense<0.000000e+00> : vector<16x32xf32>
    %165 = tpu.matmul %162, %164, %cst_56 {dimension_numbers = #tpu.dot_dimension_numbers<[1], [0], [0], [1], [0, 0, 1, 1], [], []>} : vector<16x64xf32>, vector<64x32xf32>, vector<16x32xf32> -> vector<16x32xf32>
    %166 = vector.broadcast %14 : vector<1x32xf32> to vector<16x32xf32>
    %167 = arith.addf %165, %166 : vector<16x32xf32>
    %168 = arith.addf %155, %167 : vector<16x32xf32>
    %cst_57 = arith.constant dense<0.000000e+00> : vector<16xf32>
    %169 = vector.multi_reduction <add>, %168, %cst_57 [1] : vector<16x32xf32> to vector<16xf32>
    %170 = vector.shape_cast %169 : vector<16xf32> to vector<16x1xf32>
    %cst_58 = arith.constant 3.200000e+01 : f32
    %171 = vector.broadcast %cst_58 : f32 to vector<16x1xf32>
    %172 = arith.divf %170, %171 : vector<16x1xf32>
    %173 = vector.broadcast %172 : vector<16x1xf32> to vector<16x32xf32>
    %174 = arith.subf %168, %173 : vector<16x32xf32>
    %175 = arith.mulf %174, %174 : vector<16x32xf32>
    %cst_59 = arith.constant dense<0.000000e+00> : vector<16xf32>
    %176 = vector.multi_reduction <add>, %175, %cst_59 [1] : vector<16x32xf32> to vector<16xf32>
    %177 = vector.shape_cast %176 : vector<16xf32> to vector<16x1xf32>
    %cst_60 = arith.constant 3.200000e+01 : f32
    %178 = vector.broadcast %cst_60 : f32 to vector<16x1xf32>
    %179 = arith.divf %177, %178 : vector<16x1xf32>
    %180 = vector.broadcast %172 : vector<16x1xf32> to vector<16x32xf32>
    %181 = arith.subf %168, %180 : vector<16x32xf32>
    %cst_61 = arith.constant 9.99999974E-6 : f32
    %182 = vector.broadcast %cst_61 : f32 to vector<16x1xf32>
    %183 = arith.addf %179, %182 : vector<16x1xf32>
    %184 = math.rsqrt %183 : vector<16x1xf32>
    %185 = vector.broadcast %184 : vector<16x1xf32> to vector<16x32xf32>
    %186 = arith.mulf %181, %185 : vector<16x32xf32>
    %187 = vector.broadcast %17 : vector<1x32xf32> to vector<16x32xf32>
    %188 = arith.mulf %186, %187 : vector<16x32xf32>
    %189 = vector.broadcast %18 : vector<1x32xf32> to vector<16x32xf32>
    %190 = arith.addf %188, %189 : vector<16x32xf32>
    %c1 = arith.constant 1 : index
    %c0_62 = arith.constant 0 : index
    %c0_63 = arith.constant 0 : index
    %191 = vector.load %arg7[%c1, %c0_62, %c0_63] : memref<2x8x96xf32, #tpu.memory_space<vmem>>, vector<1x8x96xf32>
    %192 = vector.shape_cast %191 : vector<1x8x96xf32> to vector<8x96xf32>
    %193 = vector.extract_strided_slice %192 {offsets = [0, 0], sizes = [1, 96], strides = [1, 1]} : vector<8x96xf32> to vector<1x96xf32>
    %194 = vector.extract_strided_slice %192 {offsets = [1, 0], sizes = [1, 32], strides = [1, 1]} : vector<8x96xf32> to vector<1x32xf32>
    %195 = vector.extract_strided_slice %192 {offsets = [2, 0], sizes = [1, 64], strides = [1, 1]} : vector<8x96xf32> to vector<1x64xf32>
    %196 = vector.extract_strided_slice %192 {offsets = [3, 0], sizes = [1, 32], strides = [1, 1]} : vector<8x96xf32> to vector<1x32xf32>
    %197 = vector.extract_strided_slice %192 {offsets = [4, 0], sizes = [1, 32], strides = [1, 1]} : vector<8x96xf32> to vector<1x32xf32>
    %198 = vector.extract_strided_slice %192 {offsets = [5, 0], sizes = [1, 32], strides = [1, 1]} : vector<8x96xf32> to vector<1x32xf32>
    %199 = vector.extract_strided_slice %192 {offsets = [6, 0], sizes = [1, 32], strides = [1, 1]} : vector<8x96xf32> to vector<1x32xf32>
    %200 = vector.extract_strided_slice %192 {offsets = [7, 0], sizes = [1, 32], strides = [1, 1]} : vector<8x96xf32> to vector<1x32xf32>
    %c1_64 = arith.constant 1 : index
    %c0_65 = arith.constant 0 : index
    %c0_66 = arith.constant 0 : index
    %201 = vector.load %arg4[%c1_64, %c0_65, %c0_66] : memref<2x32x32xf32, #tpu.memory_space<vmem>>, vector<1x32x32xf32>
    %202 = vector.shape_cast %201 : vector<1x32x32xf32> to vector<32x32xf32>
    %c1_67 = arith.constant 1 : index
    %c0_68 = arith.constant 0 : index
    %c0_69 = arith.constant 0 : index
    %203 = vector.load %arg3[%c1_67, %c0_68, %c0_69] : memref<2x32x96xf32, #tpu.memory_space<vmem>>, vector<1x32x96xf32>
    %204 = vector.shape_cast %203 : vector<1x32x96xf32> to vector<32x96xf32>
    %cst_70 = arith.constant dense<0.000000e+00> : vector<16x96xf32>
    %205 = tpu.matmul %190, %204, %cst_70 {dimension_numbers = #tpu.dot_dimension_numbers<[1], [0], [0], [1], [0, 0, 1, 1], [], []>} : vector<16x32xf32>, vector<32x96xf32>, vector<16x96xf32> -> vector<16x96xf32>
    %206 = vector.broadcast %193 : vector<1x96xf32> to vector<16x96xf32>
    %207 = arith.addf %205, %206 : vector<16x96xf32>
    %208 = vector.extract_strided_slice %207 {offsets = [0, 0], sizes = [8, 32], strides = [1, 1]} : vector<16x96xf32> to vector<8x32xf32>
    %209 = vector.extract_strided_slice %207 {offsets = [0, 32], sizes = [8, 32], strides = [1, 1]} : vector<16x96xf32> to vector<8x32xf32>
    %210 = vector.extract_strided_slice %207 {offsets = [0, 64], sizes = [8, 32], strides = [1, 1]} : vector<16x96xf32> to vector<8x32xf32>
    %211 = tpu.transpose %209, [1, 0] : vector<8x32xf32> -> vector<32x8xf32>
    %212 = vector.extract_strided_slice %208 {offsets = [0, 0], sizes = [8, 8], strides = [1, 1]} : vector<8x32xf32> to vector<8x8xf32>
    %213 = vector.extract_strided_slice %211 {offsets = [0, 0], sizes = [8, 8], strides = [1, 1]} : vector<32x8xf32> to vector<8x8xf32>
    %cst_71 = arith.constant dense<0.000000e+00> : vector<8x8xf32>
    %214 = tpu.matmul %212, %213, %cst_71 {dimension_numbers = #tpu.dot_dimension_numbers<[1], [0], [0], [1], [0, 0, 1, 1], [], []>} : vector<8x8xf32>, vector<8x8xf32>, vector<8x8xf32> -> vector<8x8xf32>
    %215 = vector.extract_strided_slice %208 {offsets = [0, 8], sizes = [8, 8], strides = [1, 1]} : vector<8x32xf32> to vector<8x8xf32>
    %216 = vector.extract_strided_slice %211 {offsets = [8, 0], sizes = [8, 8], strides = [1, 1]} : vector<32x8xf32> to vector<8x8xf32>
    %cst_72 = arith.constant dense<0.000000e+00> : vector<8x8xf32>
    %217 = tpu.matmul %215, %216, %cst_72 {dimension_numbers = #tpu.dot_dimension_numbers<[1], [0], [0], [1], [0, 0, 1, 1], [], []>} : vector<8x8xf32>, vector<8x8xf32>, vector<8x8xf32> -> vector<8x8xf32>
    %218 = vector.extract_strided_slice %208 {offsets = [0, 16], sizes = [8, 8], strides = [1, 1]} : vector<8x32xf32> to vector<8x8xf32>
    %219 = vector.extract_strided_slice %211 {offsets = [16, 0], sizes = [8, 8], strides = [1, 1]} : vector<32x8xf32> to vector<8x8xf32>
    %cst_73 = arith.constant dense<0.000000e+00> : vector<8x8xf32>
    %220 = tpu.matmul %218, %219, %cst_73 {dimension_numbers = #tpu.dot_dimension_numbers<[1], [0], [0], [1], [0, 0, 1, 1], [], []>} : vector<8x8xf32>, vector<8x8xf32>, vector<8x8xf32> -> vector<8x8xf32>
    %221 = vector.extract_strided_slice %208 {offsets = [0, 24], sizes = [8, 8], strides = [1, 1]} : vector<8x32xf32> to vector<8x8xf32>
    %222 = vector.extract_strided_slice %211 {offsets = [24, 0], sizes = [8, 8], strides = [1, 1]} : vector<32x8xf32> to vector<8x8xf32>
    %cst_74 = arith.constant dense<0.000000e+00> : vector<8x8xf32>
    %223 = tpu.matmul %221, %222, %cst_74 {dimension_numbers = #tpu.dot_dimension_numbers<[1], [0], [0], [1], [0, 0, 1, 1], [], []>} : vector<8x8xf32>, vector<8x8xf32>, vector<8x8xf32> -> vector<8x8xf32>
    %224 = tpu.concatenate %214, %217, %220, %223 in 0 : vector<8x8xf32>, vector<8x8xf32>, vector<8x8xf32>, vector<8x8xf32> -> vector<32x8xf32>
    %225 = arith.addf %224, %5 : vector<32x8xf32>
    %cst_75 = arith.constant dense<0xFF800000> : vector<32xf32>
    %226 = vector.multi_reduction <maximumf>, %225, %cst_75 [1] : vector<32x8xf32> to vector<32xf32>
    %227 = vector.shape_cast %226 : vector<32xf32> to vector<32x1xf32>
    %228 = vector.broadcast %227 : vector<32x1xf32> to vector<32x8xf32>
    %229 = arith.subf %225, %228 : vector<32x8xf32>
    %230 = math.exp %229 : vector<32x8xf32>
    %cst_76 = arith.constant dense<0.000000e+00> : vector<32xf32>
    %231 = vector.multi_reduction <add>, %230, %cst_76 [1] : vector<32x8xf32> to vector<32xf32>
    %232 = vector.shape_cast %231 : vector<32xf32> to vector<32x1xf32>
    %233 = vector.broadcast %232 : vector<32x1xf32> to vector<32x8xf32>
    %234 = arith.divf %230, %233 : vector<32x8xf32>
    %cst_77 = arith.constant 0.000000e+00 : f32
    %235 = vector.broadcast %cst_77 : f32 to vector<8x32xf32>
    %236 = vector.extract_strided_slice %234 {offsets = [0, 0], sizes = [8, 8], strides = [1, 1]} : vector<32x8xf32> to vector<8x8xf32>
    %237 = vector.extract_strided_slice %210 {offsets = [0, 0], sizes = [8, 8], strides = [1, 1]} : vector<8x32xf32> to vector<8x8xf32>
    %cst_78 = arith.constant dense<0.000000e+00> : vector<8x8xf32>
    %238 = tpu.matmul %236, %237, %cst_78 {dimension_numbers = #tpu.dot_dimension_numbers<[1], [0], [0], [1], [0, 0, 1, 1], [], []>} : vector<8x8xf32>, vector<8x8xf32>, vector<8x8xf32> -> vector<8x8xf32>
    %239 = vector.extract_strided_slice %202 {offsets = [0, 0], sizes = [8, 32], strides = [1, 1]} : vector<32x32xf32> to vector<8x32xf32>
    %cst_79 = arith.constant dense<0.000000e+00> : vector<8x32xf32>
    %240 = tpu.matmul %238, %239, %cst_79 {dimension_numbers = #tpu.dot_dimension_numbers<[1], [0], [0], [1], [0, 0, 1, 1], [], []>} : vector<8x8xf32>, vector<8x32xf32>, vector<8x32xf32> -> vector<8x32xf32>
    %241 = arith.addf %235, %240 : vector<8x32xf32>
    %242 = vector.extract_strided_slice %234 {offsets = [8, 0], sizes = [8, 8], strides = [1, 1]} : vector<32x8xf32> to vector<8x8xf32>
    %243 = vector.extract_strided_slice %210 {offsets = [0, 8], sizes = [8, 8], strides = [1, 1]} : vector<8x32xf32> to vector<8x8xf32>
    %cst_80 = arith.constant dense<0.000000e+00> : vector<8x8xf32>
    %244 = tpu.matmul %242, %243, %cst_80 {dimension_numbers = #tpu.dot_dimension_numbers<[1], [0], [0], [1], [0, 0, 1, 1], [], []>} : vector<8x8xf32>, vector<8x8xf32>, vector<8x8xf32> -> vector<8x8xf32>
    %245 = vector.extract_strided_slice %202 {offsets = [8, 0], sizes = [8, 32], strides = [1, 1]} : vector<32x32xf32> to vector<8x32xf32>
    %cst_81 = arith.constant dense<0.000000e+00> : vector<8x32xf32>
    %246 = tpu.matmul %244, %245, %cst_81 {dimension_numbers = #tpu.dot_dimension_numbers<[1], [0], [0], [1], [0, 0, 1, 1], [], []>} : vector<8x8xf32>, vector<8x32xf32>, vector<8x32xf32> -> vector<8x32xf32>
    %247 = arith.addf %241, %246 : vector<8x32xf32>
    %248 = vector.extract_strided_slice %234 {offsets = [16, 0], sizes = [8, 8], strides = [1, 1]} : vector<32x8xf32> to vector<8x8xf32>
    %249 = vector.extract_strided_slice %210 {offsets = [0, 16], sizes = [8, 8], strides = [1, 1]} : vector<8x32xf32> to vector<8x8xf32>
    %cst_82 = arith.constant dense<0.000000e+00> : vector<8x8xf32>
    %250 = tpu.matmul %248, %249, %cst_82 {dimension_numbers = #tpu.dot_dimension_numbers<[1], [0], [0], [1], [0, 0, 1, 1], [], []>} : vector<8x8xf32>, vector<8x8xf32>, vector<8x8xf32> -> vector<8x8xf32>
    %251 = vector.extract_strided_slice %202 {offsets = [16, 0], sizes = [8, 32], strides = [1, 1]} : vector<32x32xf32> to vector<8x32xf32>
    %cst_83 = arith.constant dense<0.000000e+00> : vector<8x32xf32>
    %252 = tpu.matmul %250, %251, %cst_83 {dimension_numbers = #tpu.dot_dimension_numbers<[1], [0], [0], [1], [0, 0, 1, 1], [], []>} : vector<8x8xf32>, vector<8x32xf32>, vector<8x32xf32> -> vector<8x32xf32>
    %253 = arith.addf %247, %252 : vector<8x32xf32>
    %254 = vector.extract_strided_slice %234 {offsets = [24, 0], sizes = [8, 8], strides = [1, 1]} : vector<32x8xf32> to vector<8x8xf32>
    %255 = vector.extract_strided_slice %210 {offsets = [0, 24], sizes = [8, 8], strides = [1, 1]} : vector<8x32xf32> to vector<8x8xf32>
    %cst_84 = arith.constant dense<0.000000e+00> : vector<8x8xf32>
    %256 = tpu.matmul %254, %255, %cst_84 {dimension_numbers = #tpu.dot_dimension_numbers<[1], [0], [0], [1], [0, 0, 1, 1], [], []>} : vector<8x8xf32>, vector<8x8xf32>, vector<8x8xf32> -> vector<8x8xf32>
    %257 = vector.extract_strided_slice %202 {offsets = [24, 0], sizes = [8, 32], strides = [1, 1]} : vector<32x32xf32> to vector<8x32xf32>
    %cst_85 = arith.constant dense<0.000000e+00> : vector<8x32xf32>
    %258 = tpu.matmul %256, %257, %cst_85 {dimension_numbers = #tpu.dot_dimension_numbers<[1], [0], [0], [1], [0, 0, 1, 1], [], []>} : vector<8x8xf32>, vector<8x32xf32>, vector<8x32xf32> -> vector<8x32xf32>
    %259 = arith.addf %253, %258 : vector<8x32xf32>
    %260 = vector.extract_strided_slice %207 {offsets = [8, 0], sizes = [8, 32], strides = [1, 1]} : vector<16x96xf32> to vector<8x32xf32>
    %261 = vector.extract_strided_slice %207 {offsets = [8, 32], sizes = [8, 32], strides = [1, 1]} : vector<16x96xf32> to vector<8x32xf32>
    %262 = vector.extract_strided_slice %207 {offsets = [8, 64], sizes = [8, 32], strides = [1, 1]} : vector<16x96xf32> to vector<8x32xf32>
    %263 = tpu.transpose %261, [1, 0] : vector<8x32xf32> -> vector<32x8xf32>
    %264 = vector.extract_strided_slice %260 {offsets = [0, 0], sizes = [8, 8], strides = [1, 1]} : vector<8x32xf32> to vector<8x8xf32>
    %265 = vector.extract_strided_slice %263 {offsets = [0, 0], sizes = [8, 8], strides = [1, 1]} : vector<32x8xf32> to vector<8x8xf32>
    %cst_86 = arith.constant dense<0.000000e+00> : vector<8x8xf32>
    %266 = tpu.matmul %264, %265, %cst_86 {dimension_numbers = #tpu.dot_dimension_numbers<[1], [0], [0], [1], [0, 0, 1, 1], [], []>} : vector<8x8xf32>, vector<8x8xf32>, vector<8x8xf32> -> vector<8x8xf32>
    %267 = vector.extract_strided_slice %260 {offsets = [0, 8], sizes = [8, 8], strides = [1, 1]} : vector<8x32xf32> to vector<8x8xf32>
    %268 = vector.extract_strided_slice %263 {offsets = [8, 0], sizes = [8, 8], strides = [1, 1]} : vector<32x8xf32> to vector<8x8xf32>
    %cst_87 = arith.constant dense<0.000000e+00> : vector<8x8xf32>
    %269 = tpu.matmul %267, %268, %cst_87 {dimension_numbers = #tpu.dot_dimension_numbers<[1], [0], [0], [1], [0, 0, 1, 1], [], []>} : vector<8x8xf32>, vector<8x8xf32>, vector<8x8xf32> -> vector<8x8xf32>
    %270 = vector.extract_strided_slice %260 {offsets = [0, 16], sizes = [8, 8], strides = [1, 1]} : vector<8x32xf32> to vector<8x8xf32>
    %271 = vector.extract_strided_slice %263 {offsets = [16, 0], sizes = [8, 8], strides = [1, 1]} : vector<32x8xf32> to vector<8x8xf32>
    %cst_88 = arith.constant dense<0.000000e+00> : vector<8x8xf32>
    %272 = tpu.matmul %270, %271, %cst_88 {dimension_numbers = #tpu.dot_dimension_numbers<[1], [0], [0], [1], [0, 0, 1, 1], [], []>} : vector<8x8xf32>, vector<8x8xf32>, vector<8x8xf32> -> vector<8x8xf32>
    %273 = vector.extract_strided_slice %260 {offsets = [0, 24], sizes = [8, 8], strides = [1, 1]} : vector<8x32xf32> to vector<8x8xf32>
    %274 = vector.extract_strided_slice %263 {offsets = [24, 0], sizes = [8, 8], strides = [1, 1]} : vector<32x8xf32> to vector<8x8xf32>
    %cst_89 = arith.constant dense<0.000000e+00> : vector<8x8xf32>
    %275 = tpu.matmul %273, %274, %cst_89 {dimension_numbers = #tpu.dot_dimension_numbers<[1], [0], [0], [1], [0, 0, 1, 1], [], []>} : vector<8x8xf32>, vector<8x8xf32>, vector<8x8xf32> -> vector<8x8xf32>
    %276 = tpu.concatenate %266, %269, %272, %275 in 0 : vector<8x8xf32>, vector<8x8xf32>, vector<8x8xf32>, vector<8x8xf32> -> vector<32x8xf32>
    %277 = arith.addf %276, %8 : vector<32x8xf32>
    %cst_90 = arith.constant dense<0xFF800000> : vector<32xf32>
    %278 = vector.multi_reduction <maximumf>, %277, %cst_90 [1] : vector<32x8xf32> to vector<32xf32>
    %279 = vector.shape_cast %278 : vector<32xf32> to vector<32x1xf32>
    %280 = vector.broadcast %279 : vector<32x1xf32> to vector<32x8xf32>
    %281 = arith.subf %277, %280 : vector<32x8xf32>
    %282 = math.exp %281 : vector<32x8xf32>
    %cst_91 = arith.constant dense<0.000000e+00> : vector<32xf32>
    %283 = vector.multi_reduction <add>, %282, %cst_91 [1] : vector<32x8xf32> to vector<32xf32>
    %284 = vector.shape_cast %283 : vector<32xf32> to vector<32x1xf32>
    %285 = vector.broadcast %284 : vector<32x1xf32> to vector<32x8xf32>
    %286 = arith.divf %282, %285 : vector<32x8xf32>
    %cst_92 = arith.constant 0.000000e+00 : f32
    %287 = vector.broadcast %cst_92 : f32 to vector<8x32xf32>
    %288 = vector.extract_strided_slice %286 {offsets = [0, 0], sizes = [8, 8], strides = [1, 1]} : vector<32x8xf32> to vector<8x8xf32>
    %289 = vector.extract_strided_slice %262 {offsets = [0, 0], sizes = [8, 8], strides = [1, 1]} : vector<8x32xf32> to vector<8x8xf32>
    %cst_93 = arith.constant dense<0.000000e+00> : vector<8x8xf32>
    %290 = tpu.matmul %288, %289, %cst_93 {dimension_numbers = #tpu.dot_dimension_numbers<[1], [0], [0], [1], [0, 0, 1, 1], [], []>} : vector<8x8xf32>, vector<8x8xf32>, vector<8x8xf32> -> vector<8x8xf32>
    %291 = vector.extract_strided_slice %202 {offsets = [0, 0], sizes = [8, 32], strides = [1, 1]} : vector<32x32xf32> to vector<8x32xf32>
    %cst_94 = arith.constant dense<0.000000e+00> : vector<8x32xf32>
    %292 = tpu.matmul %290, %291, %cst_94 {dimension_numbers = #tpu.dot_dimension_numbers<[1], [0], [0], [1], [0, 0, 1, 1], [], []>} : vector<8x8xf32>, vector<8x32xf32>, vector<8x32xf32> -> vector<8x32xf32>
    %293 = arith.addf %287, %292 : vector<8x32xf32>
    %294 = vector.extract_strided_slice %286 {offsets = [8, 0], sizes = [8, 8], strides = [1, 1]} : vector<32x8xf32> to vector<8x8xf32>
    %295 = vector.extract_strided_slice %262 {offsets = [0, 8], sizes = [8, 8], strides = [1, 1]} : vector<8x32xf32> to vector<8x8xf32>
    %cst_95 = arith.constant dense<0.000000e+00> : vector<8x8xf32>
    %296 = tpu.matmul %294, %295, %cst_95 {dimension_numbers = #tpu.dot_dimension_numbers<[1], [0], [0], [1], [0, 0, 1, 1], [], []>} : vector<8x8xf32>, vector<8x8xf32>, vector<8x8xf32> -> vector<8x8xf32>
    %297 = vector.extract_strided_slice %202 {offsets = [8, 0], sizes = [8, 32], strides = [1, 1]} : vector<32x32xf32> to vector<8x32xf32>
    %cst_96 = arith.constant dense<0.000000e+00> : vector<8x32xf32>
    %298 = tpu.matmul %296, %297, %cst_96 {dimension_numbers = #tpu.dot_dimension_numbers<[1], [0], [0], [1], [0, 0, 1, 1], [], []>} : vector<8x8xf32>, vector<8x32xf32>, vector<8x32xf32> -> vector<8x32xf32>
    %299 = arith.addf %293, %298 : vector<8x32xf32>
    %300 = vector.extract_strided_slice %286 {offsets = [16, 0], sizes = [8, 8], strides = [1, 1]} : vector<32x8xf32> to vector<8x8xf32>
    %301 = vector.extract_strided_slice %262 {offsets = [0, 16], sizes = [8, 8], strides = [1, 1]} : vector<8x32xf32> to vector<8x8xf32>
    %cst_97 = arith.constant dense<0.000000e+00> : vector<8x8xf32>
    %302 = tpu.matmul %300, %301, %cst_97 {dimension_numbers = #tpu.dot_dimension_numbers<[1], [0], [0], [1], [0, 0, 1, 1], [], []>} : vector<8x8xf32>, vector<8x8xf32>, vector<8x8xf32> -> vector<8x8xf32>
    %303 = vector.extract_strided_slice %202 {offsets = [16, 0], sizes = [8, 32], strides = [1, 1]} : vector<32x32xf32> to vector<8x32xf32>
    %cst_98 = arith.constant dense<0.000000e+00> : vector<8x32xf32>
    %304 = tpu.matmul %302, %303, %cst_98 {dimension_numbers = #tpu.dot_dimension_numbers<[1], [0], [0], [1], [0, 0, 1, 1], [], []>} : vector<8x8xf32>, vector<8x32xf32>, vector<8x32xf32> -> vector<8x32xf32>
    %305 = arith.addf %299, %304 : vector<8x32xf32>
    %306 = vector.extract_strided_slice %286 {offsets = [24, 0], sizes = [8, 8], strides = [1, 1]} : vector<32x8xf32> to vector<8x8xf32>
    %307 = vector.extract_strided_slice %262 {offsets = [0, 24], sizes = [8, 8], strides = [1, 1]} : vector<8x32xf32> to vector<8x8xf32>
    %cst_99 = arith.constant dense<0.000000e+00> : vector<8x8xf32>
    %308 = tpu.matmul %306, %307, %cst_99 {dimension_numbers = #tpu.dot_dimension_numbers<[1], [0], [0], [1], [0, 0, 1, 1], [], []>} : vector<8x8xf32>, vector<8x8xf32>, vector<8x8xf32> -> vector<8x8xf32>
    %309 = vector.extract_strided_slice %202 {offsets = [24, 0], sizes = [8, 32], strides = [1, 1]} : vector<32x32xf32> to vector<8x32xf32>
    %cst_100 = arith.constant dense<0.000000e+00> : vector<8x32xf32>
    %310 = tpu.matmul %308, %309, %cst_100 {dimension_numbers = #tpu.dot_dimension_numbers<[1], [0], [0], [1], [0, 0, 1, 1], [], []>} : vector<8x8xf32>, vector<8x32xf32>, vector<8x32xf32> -> vector<8x32xf32>
    %311 = arith.addf %305, %310 : vector<8x32xf32>
    %312 = tpu.concatenate %259, %311 in 0 : vector<8x32xf32>, vector<8x32xf32> -> vector<16x32xf32>
    %313 = vector.broadcast %194 : vector<1x32xf32> to vector<16x32xf32>
    %314 = arith.addf %312, %313 : vector<16x32xf32>
    %315 = arith.addf %190, %314 : vector<16x32xf32>
    %cst_101 = arith.constant dense<0.000000e+00> : vector<16xf32>
    %316 = vector.multi_reduction <add>, %315, %cst_101 [1] : vector<16x32xf32> to vector<16xf32>
    %317 = vector.shape_cast %316 : vector<16xf32> to vector<16x1xf32>
    %cst_102 = arith.constant 3.200000e+01 : f32
    %318 = vector.broadcast %cst_102 : f32 to vector<16x1xf32>
    %319 = arith.divf %317, %318 : vector<16x1xf32>
    %320 = vector.broadcast %319 : vector<16x1xf32> to vector<16x32xf32>
    %321 = arith.subf %315, %320 : vector<16x32xf32>
    %322 = arith.mulf %321, %321 : vector<16x32xf32>
    %cst_103 = arith.constant dense<0.000000e+00> : vector<16xf32>
    %323 = vector.multi_reduction <add>, %322, %cst_103 [1] : vector<16x32xf32> to vector<16xf32>
    %324 = vector.shape_cast %323 : vector<16xf32> to vector<16x1xf32>
    %cst_104 = arith.constant 3.200000e+01 : f32
    %325 = vector.broadcast %cst_104 : f32 to vector<16x1xf32>
    %326 = arith.divf %324, %325 : vector<16x1xf32>
    %327 = vector.broadcast %319 : vector<16x1xf32> to vector<16x32xf32>
    %328 = arith.subf %315, %327 : vector<16x32xf32>
    %cst_105 = arith.constant 9.99999974E-6 : f32
    %329 = vector.broadcast %cst_105 : f32 to vector<16x1xf32>
    %330 = arith.addf %326, %329 : vector<16x1xf32>
    %331 = math.rsqrt %330 : vector<16x1xf32>
    %332 = vector.broadcast %331 : vector<16x1xf32> to vector<16x32xf32>
    %333 = arith.mulf %328, %332 : vector<16x32xf32>
    %334 = vector.broadcast %197 : vector<1x32xf32> to vector<16x32xf32>
    %335 = arith.mulf %333, %334 : vector<16x32xf32>
    %336 = vector.broadcast %198 : vector<1x32xf32> to vector<16x32xf32>
    %337 = arith.addf %335, %336 : vector<16x32xf32>
    %c1_106 = arith.constant 1 : index
    %c0_107 = arith.constant 0 : index
    %c0_108 = arith.constant 0 : index
    %338 = vector.load %arg5[%c1_106, %c0_107, %c0_108] : memref<2x32x64xf32, #tpu.memory_space<vmem>>, vector<1x32x64xf32>
    %339 = vector.shape_cast %338 : vector<1x32x64xf32> to vector<32x64xf32>
    %cst_109 = arith.constant dense<0.000000e+00> : vector<16x64xf32>
    %340 = tpu.matmul %337, %339, %cst_109 {dimension_numbers = #tpu.dot_dimension_numbers<[1], [0], [0], [1], [0, 0, 1, 1], [], []>} : vector<16x32xf32>, vector<32x64xf32>, vector<16x64xf32> -> vector<16x64xf32>
    %341 = vector.broadcast %195 : vector<1x64xf32> to vector<16x64xf32>
    %342 = arith.addf %340, %341 : vector<16x64xf32>
    %cst_110 = arith.constant 0.000000e+00 : f32
    %343 = vector.broadcast %cst_110 : f32 to vector<16x64xf32>
    %344 = arith.maximumf %342, %343 : vector<16x64xf32>
    %c1_111 = arith.constant 1 : index
    %c0_112 = arith.constant 0 : index
    %c0_113 = arith.constant 0 : index
    %345 = vector.load %arg6[%c1_111, %c0_112, %c0_113] : memref<2x64x32xf32, #tpu.memory_space<vmem>>, vector<1x64x32xf32>
    %346 = vector.shape_cast %345 : vector<1x64x32xf32> to vector<64x32xf32>
    %cst_114 = arith.constant dense<0.000000e+00> : vector<16x32xf32>
    %347 = tpu.matmul %344, %346, %cst_114 {dimension_numbers = #tpu.dot_dimension_numbers<[1], [0], [0], [1], [0, 0, 1, 1], [], []>} : vector<16x64xf32>, vector<64x32xf32>, vector<16x32xf32> -> vector<16x32xf32>
    %348 = vector.broadcast %196 : vector<1x32xf32> to vector<16x32xf32>
    %349 = arith.addf %347, %348 : vector<16x32xf32>
    %350 = arith.addf %337, %349 : vector<16x32xf32>
    %cst_115 = arith.constant dense<0.000000e+00> : vector<16xf32>
    %351 = vector.multi_reduction <add>, %350, %cst_115 [1] : vector<16x32xf32> to vector<16xf32>
    %352 = vector.shape_cast %351 : vector<16xf32> to vector<16x1xf32>
    %cst_116 = arith.constant 3.200000e+01 : f32
    %353 = vector.broadcast %cst_116 : f32 to vector<16x1xf32>
    %354 = arith.divf %352, %353 : vector<16x1xf32>
    %355 = vector.broadcast %354 : vector<16x1xf32> to vector<16x32xf32>
    %356 = arith.subf %350, %355 : vector<16x32xf32>
    %357 = arith.mulf %356, %356 : vector<16x32xf32>
    %cst_117 = arith.constant dense<0.000000e+00> : vector<16xf32>
    %358 = vector.multi_reduction <add>, %357, %cst_117 [1] : vector<16x32xf32> to vector<16xf32>
    %359 = vector.shape_cast %358 : vector<16xf32> to vector<16x1xf32>
    %cst_118 = arith.constant 3.200000e+01 : f32
    %360 = vector.broadcast %cst_118 : f32 to vector<16x1xf32>
    %361 = arith.divf %359, %360 : vector<16x1xf32>
    %362 = vector.broadcast %354 : vector<16x1xf32> to vector<16x32xf32>
    %363 = arith.subf %350, %362 : vector<16x32xf32>
    %cst_119 = arith.constant 9.99999974E-6 : f32
    %364 = vector.broadcast %cst_119 : f32 to vector<16x1xf32>
    %365 = arith.addf %361, %364 : vector<16x1xf32>
    %366 = math.rsqrt %365 : vector<16x1xf32>
    %367 = vector.broadcast %366 : vector<16x1xf32> to vector<16x32xf32>
    %368 = arith.mulf %363, %367 : vector<16x32xf32>
    %369 = vector.broadcast %199 : vector<1x32xf32> to vector<16x32xf32>
    %370 = arith.mulf %368, %369 : vector<16x32xf32>
    %371 = vector.broadcast %200 : vector<1x32xf32> to vector<16x32xf32>
    %372 = arith.addf %370, %371 : vector<16x32xf32>
    %373 = vector.extract_strided_slice %372 {offsets = [0, 0], sizes = [8, 32], strides = [1, 1]} : vector<16x32xf32> to vector<8x32xf32>
    %cst_120 = arith.constant dense<0.000000e+00> : vector<32xf32>
    %374 = vector.multi_reduction <add>, %373, %cst_120 [0] : vector<8x32xf32> to vector<32xf32>
    %375 = vector.shape_cast %374 : vector<32xf32> to vector<1x32xf32>
    %376 = vector.extract_strided_slice %372 {offsets = [8, 0], sizes = [8, 32], strides = [1, 1]} : vector<16x32xf32> to vector<8x32xf32>
    %cst_121 = arith.constant dense<0.000000e+00> : vector<32xf32>
    %377 = vector.multi_reduction <add>, %376, %cst_121 [0] : vector<8x32xf32> to vector<32xf32>
    %378 = vector.shape_cast %377 : vector<32xf32> to vector<1x32xf32>
    %379 = tpu.concatenate %375, %378 in 0 : vector<1x32xf32>, vector<1x32xf32> -> vector<2x32xf32>
    %c0_122 = arith.constant 0 : index
    %c0_123 = arith.constant 0 : index
    %380 = vector.load %arg8[%c0_122, %c0_123] : memref<2x32xf32, #tpu.memory_space<vmem>>, vector<2x32xf32>
    tpu.vector_store %arg8[%c0_122, %c0_123], %379 {strides = array<i32>} : memref<2x32xf32, #tpu.memory_space<vmem>>, vector<2x32xf32>,
    return
  }
  func.func @transform_0(%arg0: i32) -> (i32, i32, i32) {
    %c0_i32 = arith.constant 0 : i32
    %c0_i32_0 = arith.constant 0 : i32
    %c0_i32_1 = arith.constant 0 : i32
    %c0_i32_2 = arith.constant 0 : i32
    return %c0_i32, %c0_i32_0, %c0_i32_1 : i32, i32, i32
  }
  func.func @transform_1(%arg0: i32) -> (i32, i32) {
    %c0_i32 = arith.constant 0 : i32
    %c0_i32_0 = arith.constant 0 : i32
    %c0_i32_1 = arith.constant 0 : i32
    return %c0_i32, %c0_i32_0 : i32, i32
  }
  func.func @transform_2(%arg0: i32) -> (i32, i32, i32) {
    %c0_i32 = arith.constant 0 : i32
    %c0_i32_0 = arith.constant 0 : i32
    %c0_i32_1 = arith.constant 0 : i32
    %c0_i32_2 = arith.constant 0 : i32
    return %c0_i32, %c0_i32_0, %c0_i32_1 : i32, i32, i32
  }
  func.func @transform_3(%arg0: i32) -> (i32, i32, i32) {
    %c0_i32 = arith.constant 0 : i32
    %c0_i32_0 = arith.constant 0 : i32
    %c0_i32_1 = arith.constant 0 : i32
    %c0_i32_2 = arith.constant 0 : i32
    return %c0_i32, %c0_i32_0, %c0_i32_1 : i32, i32, i32
  }
  func.func @transform_4(%arg0: i32) -> (i32, i32, i32) {
    %c0_i32 = arith.constant 0 : i32
    %c0_i32_0 = arith.constant 0 : i32
    %c0_i32_1 = arith.constant 0 : i32
    %c0_i32_2 = arith.constant 0 : i32
    return %c0_i32, %c0_i32_0, %c0_i32_1 : i32, i32, i32
  }
  func.func @transform_5(%arg0: i32) -> (i32, i32, i32) {
    %c0_i32 = arith.constant 0 : i32
    %c0_i32_0 = arith.constant 0 : i32
    %c0_i32_1 = arith.constant 0 : i32
    %c0_i32_2 = arith.constant 0 : i32
    return %c0_i32, %c0_i32_0, %c0_i32_1 : i32, i32, i32
  }
  func.func @transform_6(%arg0: i32) -> (i32, i32, i32) {
    %c0_i32 = arith.constant 0 : i32
    %c0_i32_0 = arith.constant 0 : i32
    %c0_i32_1 = arith.constant 0 : i32
    %c0_i32_2 = arith.constant 0 : i32
    return %c0_i32, %c0_i32_0, %c0_i32_1 : i32, i32, i32
  }
  func.func @transform_7(%arg0: i32) -> (i32, i32) {
    %c0_i32 = arith.constant 0 : i32
    %c0_i32_0 = arith.constant 0 : i32
    %c0_i32_1 = arith.constant 0 : i32
    return %c0_i32, %c0_i32_0 : i32, i32
  }
}

</mosaic_0001>

<llo_original>
// kernel: tpu_custom_call.1
$region0: #{tpu_custom_call.1}
  #allocation0 [shape = 'u32[]', space=smem, size = 0x4, offset = 0x4, fixed_abs, tag = 'smem constant byte address 0x4 - core index']
  #allocation1 [shape = 'u32[144,128]{1,0:T(1,128)}', space=vmem, size = 0x12000, scoped, tag = 'internal scratch']
  %s0 = inlined_call_operand.hbm [shape: f32[2,8,32], index: 0, kind: input, shape index: {}]
  %s1 = inlined_call_operand.vmem [shape: f32[2,8], index: 1, kind: input, shape index: {}]
  %s2 = inlined_call_operand.vmem [shape: f32[2,32,96], index: 2, kind: input, shape index: {}]
  %s3 = inlined_call_operand.vmem [shape: f32[2,32,32], index: 3, kind: input, shape index: {}]
  %s4 = inlined_call_operand.vmem [shape: f32[2,32,64], index: 4, kind: input, shape index: {}]
  %s5 = inlined_call_operand.vmem [shape: f32[2,64,32], index: 5, kind: input, shape index: {}]
  %s6 = inlined_call_operand.vmem [shape: f32[2,8,96], index: 6, kind: input, shape index: {}]
  %s7 = inlined_call_operand.hbm [shape: f32[2,32], index: 7, kind: output, shape index: {}]
  %s8 = sld [smem:[#allocation0]]
  $region42: #{tpu_custom_call.1} parent=0
    _
  %s10 = ssub.s32 1, %s8
  %s11 = scalar_select 0, %s10, %s8
  $region1: #{tpu_custom_call.1} parent=0
    #allocation2 [shape = 'u8[8192]{0}', space=vmem, size = 0x2000, scoped, tag = 'input window, operand 0, single buffered']
    #allocation3 [shape = 's32[1]{0}', space=sflag, size = 0x4, scoped, tag = 'scoped memory for tpu_custom_call.1']
    #allocation4 [shape = 's32[1]{0}', space=sflag, size = 0x4, scoped, tag = 'scoped memory for tpu_custom_call.1']
    #allocation5 [shape = 'u8[1024]{0}', space=vmem, size = 0x400, scoped, tag = 'output window, operand 0, single buffered']
    %12 = vsyncpa [#allocation3], 0
    %13 = vsyncpa [#allocation4], 0
    // Predicated region
    $region2: #{tpu_custom_call.1} parent=1 // pred_check
      _
    $region3: #{tpu_custom_call.1} parent=1 // pred_check_branch
      %15 = sbr.rel (0) target = $region5
    $region4: #{tpu_custom_call.1} parent=1 // pred_region
      %s17 = ssub.s32 256, 256
      %18 = vsyncadd [#allocation3], %s17
      %s19 = sshll.u32 [#allocation2], 4
      %s20 = int_to_ptr.vmem [resolvable:$true] %s19
      %25 = dma.hbm_to_vmem [thread:$0]  %s0, 256, %s20, [#allocation3], 128, 128, 8
    $region5: #{tpu_custom_call.1} parent=1 // pred_fallthru
      _
    // Predicated region
    $region6: #{tpu_custom_call.1} parent=1 // pred_check
      _
    $region7: #{tpu_custom_call.1} parent=1 // pred_check_branch
      %27 = sbr.rel (0) target = $region9
    $region8: #{tpu_custom_call.1} parent=1 // pred_region
      _
    $region9: #{tpu_custom_call.1} parent=1 // pred_fallthru
      _
    // Predicated region
    $region10: #{tpu_custom_call.1} parent=1 // pred_check
      _
    $region11: #{tpu_custom_call.1} parent=1 // pred_check_branch
      %29 = sbr.rel (0) target = $region13
    $region12: #{tpu_custom_call.1} parent=1 // pred_region
      _
    $region13: #{tpu_custom_call.1} parent=1 // pred_fallthru
      _
    // Predicated region
    $region14: #{tpu_custom_call.1} parent=1 // pred_check
      _
    $region15: #{tpu_custom_call.1} parent=1 // pred_check_branch
      %31 = sbr.rel (0) target = $region17
    $region16: #{tpu_custom_call.1} parent=1 // pred_region
      _
    $region17: #{tpu_custom_call.1} parent=1 // pred_fallthru
      _
    // Predicated region
    $region18: #{tpu_custom_call.1} parent=1 // pred_check
      _
    $region19: #{tpu_custom_call.1} parent=1 // pred_check_branch
      %33 = sbr.rel (0) target = $region21
    $region20: #{tpu_custom_call.1} parent=1 // pred_region
      _
    $region21: #{tpu_custom_call.1} parent=1 // pred_fallthru
      _
    // Predicated region
    $region22: #{tpu_custom_call.1} parent=1 // pred_check
      _
    $region23: #{tpu_custom_call.1} parent=1 // pred_check_branch
      %35 = sbr.rel (0) target = $region25
    $region24: #{tpu_custom_call.1} parent=1 // pred_region
      _
    $region25: #{tpu_custom_call.1} parent=1 // pred_fallthru
      _
    // Predicated region
    $region26: #{tpu_custom_call.1} parent=1 // pred_check
      _
    $region27: #{tpu_custom_call.1} parent=1 // pred_check_branch
      %37 = sbr.rel (0) target = $region29
    $region28: #{tpu_custom_call.1} parent=1 // pred_region
      _
    $region29: #{tpu_custom_call.1} parent=1 // pred_fallthru
      _
    // Predicated region
    $region30: #{tpu_custom_call.1} parent=1 // pred_check
      _
    $region31: #{tpu_custom_call.1} parent=1 // pred_check_branch
      %39 = sbr.rel (0) target = $region33
    $region32: #{tpu_custom_call.1} parent=1 // pred_region
      %40 = dma.done [#allocation3], 256
    $region33: #{tpu_custom_call.1} parent=1 // pred_fallthru
      _
    %v41 = vld [vmem:[#allocation2] sm:$0xff]
    %v42 = vld [vmem:[#allocation2 + $0x8] sm:$0xff]
    %v43 = vld [vmem:[%s1] sm:$0x3]
    %v44 = vlaneseq
    %v45 = vshrl.u32 %v44, 7
    %v46 = vsub.s32 0, %v45
    %v47 = vrot.slane %v43, %v46
    %v48 = vlaneseq
    %v49 = vshrl.u32 %v48, 7
    %v50 = vsub.s32 1, %v49
    %v51 = vrot.slane %v43, %v50
    %v52 = vld [vmem:[%s6] sm:$0xff]
    %v53 = vld [vmem:[%s3] sm:$0xff]
    %v54 = vld [vmem:[%s3 + $0x8] sm:$0xff]
    %v55 = vld [vmem:[%s3 + $0x10] sm:$0xff]
    %v56 = vld [vmem:[%s3 + $0x18] sm:$0xff]
    %v57 = vld [vmem:[%s2] sm:$0xff]
    %v58 = vld [vmem:[%s2 + $0x8] sm:$0xff]
    %v59 = vld [vmem:[%s2 + $0x10] sm:$0xff]
    %v60 = vld [vmem:[%s2 + $0x18] sm:$0xff]
    %v61 = vlaneseq
    %v62 = vshrl.u32 %v61, 7
    %v63 = vsub.s32 0, %v62
    %v64 = vrot.slane %v52, %v63
    %vm65 = vcmask 261120
    %v67 = vsel %vm65, %v41, 0
    %v70 = vsel %vm65, %v42, 0
    %72 = vmatprep.subr.mxu0 0.0
    %73 = vmatpush1.msra.mxu0 %v57
    %74 = vmatprep.subr.mxu0 0.0
    %75 = vmatpush1.msra.mxu0 %v58
    %76 = vmatprep.subr.mxu0 0.0
    %77 = vmatpush1.msra.mxu0 %v59
    %78 = vmatprep.subr.mxu0 0.0
    %79 = vmatpush1.msra.mxu0 %v60
    %80 = vmatprep.subr.mxu0 0.0
    %81 = vmatpush1.msra.mxu0 0.0
    %82 = vmatprep.subr.mxu0 0.0
    %83 = vmatpush1.msra.mxu0 0.0
    %84 = vmatprep.subr.mxu0 0.0
    %85 = vmatpush1.msra.mxu0 0.0
    %86 = vmatprep.subr.mxu0 0.0
    %87 = vmatpush1.msra.mxu0 0.0
    %88 = vmatprep.subr.mxu0 0.0
    %89 = vmatpush1.msra.mxu0 0.0
    %90 = vmatprep.subr.mxu0 0.0
    %91 = vmatpush1.msra.mxu0 0.0
    %92 = vmatprep.subr.mxu0 0.0
    %93 = vmatpush1.msra.mxu0 0.0
    %94 = vmatprep.subr.mxu0 0.0
    %95 = vmatpush1.msra.mxu0 0.0
    %96 = vmatprep.subr.mxu0 0.0
    %97 = vmatpush1.msra.mxu0 0.0
    %98 = vmatprep.subr.mxu0 0.0
    %99 = vmatpush1.msra.mxu0 0.0
    %100 = vmatprep.subr.mxu0 0.0
    %101 = vmatpush1.msra.mxu0 0.0
    %102 = vmatprep.subr.mxu0 0.0
    %103 = vmatpush1.msra.mxu0 0.0
    %104 = vmatprep.subr.mxu0 0.0
    %105 = vmatpush1.msra.mxu0 0.0
    %106 = vmatprep.subr.mxu0 0.0
    %107 = vmatpush1.msra.mxu0 0.0
    %108 = vmatprep.subr.mxu0 0.0
    %109 = vmatpush1.msra.mxu0 0.0
    %110 = vmatprep.subr.mxu0 0.0
    %111 = vmatpush1.msra.mxu0 0.0
    %112 = vmatprep.subr.mxu0 0.0
    %113 = vmatpush1.msra.mxu0 0.0
    %114 = vmatprep.subr.mxu0 0.0
    %115 = vmatpush1.msra.mxu0 0.0
    %116 = vmatprep.subr.mxu0 0.0
    %117 = vmatpush1.msra.mxu0 0.0
    %118 = vmatprep.subr.mxu0 0.0
    %119 = vmatpush1.msra.mxu0 0.0
    %120 = vmatprep.subr.mxu0 0.0
    %121 = vmatpush1.msra.mxu0 0.0
    %122 = vmatprep.subr.mxu0 0.0
    %123 = vmatpush1.msra.mxu0 0.0
    %124 = vmatprep.subr.mxu0 0.0
    %125 = vmatpush1.msra.mxu0 0.0
    %126 = vmatprep.subr.mxu0 0.0
    %127 = vmatpush1.msra.mxu0 0.0
    %128 = vmatprep.subr.mxu0 0.0
    %129 = vmatpush1.msra.mxu0 0.0
    %130 = vmatprep.subr.mxu0 0.0
    %131 = vmatpush1.msra.mxu0 0.0
    %132 = vmatprep.subr.mxu0 0.0
    %133 = vmatpush1.msra.mxu0 0.0
    %134 = vmatprep.subr.mxu0 0.0
    %135 = vmatpush1.msra.mxu0 0.0
    %136 = vmatprep.mubr.f32.mxu0 0.0
    %137 = vmatmul.mubr.f32.gmra.mrb[0].mxu0 %v67
    %v138 = vpop.f32.mrb[0].mxu0
    %v139 = vadd.f32 %v64, %v138
    %v140 = vpop.f32.mrb[0].mxu0
    %141 = vmatprep.mubr.f32.mxu0 0.0
    %142 = vmatmul.mubr.f32.gmra.mrb[0].mxu0 %v70
    %v143 = vpop.f32.mrb[0].mxu0
    %v144 = vadd.f32 %v64, %v143
    %v145 = vpop.f32.mrb[0].mxu0
    %146 = vdwg.mxu0
    %148 = vrot.lane.b32.xlu0 %v139, 96
    %v149 = vpop.permute.xlu0 %148
    %vm150 = vcmask 64512
    %v151 = vsel %vm150, %v139, 0
    %v153 = vsel %vm150, %v149, 0
    %155 = vmatprep.subr.mxu0 0.0
    %156 = vmatpush1.xpose.msra.mxu0 %v153
    %157 = vmatprep.subr.mxu0 0.0
    %158 = vmatpush1.xpose.msra.mxu0 0.0
    %159 = vmatprep.subr.mxu0 0.0
    %160 = vmatpush1.xpose.msra.mxu0 0.0
    %161 = vmatprep.subr.mxu0 0.0
    %162 = vmatpush1.xpose.msra.mxu0 0.0
    %163 = vmatprep.subr.mxu0 0.0
    %164 = vmatpush1.xpose.msra.mxu0 0.0
    %165 = vmatprep.subr.mxu0 0.0
    %166 = vmatpush1.xpose.msra.mxu0 0.0
    %167 = vmatprep.subr.mxu0 0.0
    %168 = vmatpush1.xpose.msra.mxu0 0.0
    %169 = vmatprep.subr.mxu0 0.0
    %170 = vmatpush1.xpose.msra.mxu0 0.0
    %171 = vmatprep.subr.mxu0 0.0
    %172 = vmatpush1.xpose.msra.mxu0 0.0
    %173 = vmatprep.subr.mxu0 0.0
    %174 = vmatpush1.xpose.msra.mxu0 0.0
    %175 = vmatprep.subr.mxu0 0.0
    %176 = vmatpush1.xpose.msra.mxu0 0.0
    %177 = vmatprep.subr.mxu0 0.0
    %178 = vmatpush1.xpose.msra.mxu0 0.0
    %179 = vmatprep.subr.mxu0 0.0
    %180 = vmatpush1.xpose.msra.mxu0 0.0
    %181 = vmatprep.subr.mxu0 0.0
    %182 = vmatpush1.xpose.msra.mxu0 0.0
    %183 = vmatprep.subr.mxu0 0.0
    %184 = vmatpush1.xpose.msra.mxu0 0.0
    %185 = vmatprep.subr.mxu0 0.0
    %186 = vmatpush1.xpose.msra.mxu0 0.0
    %187 = vmatprep.subr.mxu0 0.0
    %188 = vmatpush1.xpose.msra.mxu0 0.0
    %189 = vmatprep.subr.mxu0 0.0
    %190 = vmatpush1.xpose.msra.mxu0 0.0
    %191 = vmatprep.subr.mxu0 0.0
    %192 = vmatpush1.xpose.msra.mxu0 0.0
    %193 = vmatprep.subr.mxu0 0.0
    %194 = vmatpush1.xpose.msra.mxu0 0.0
    %195 = vmatprep.subr.mxu0 0.0
    %196 = vmatpush1.xpose.msra.mxu0 0.0
    %197 = vmatprep.subr.mxu0 0.0
    %198 = vmatpush1.xpose.msra.mxu0 0.0
    %199 = vmatprep.subr.mxu0 0.0
    %200 = vmatpush1.xpose.msra.mxu0 0.0
    %201 = vmatprep.subr.mxu0 0.0
    %202 = vmatpush1.xpose.msra.mxu0 0.0
    %203 = vmatprep.subr.mxu0 0.0
    %204 = vmatpush1.xpose.msra.mxu0 0.0
    %205 = vmatprep.subr.mxu0 0.0
    %206 = vmatpush1.xpose.msra.mxu0 0.0
    %207 = vmatprep.subr.mxu0 0.0
    %208 = vmatpush1.xpose.msra.mxu0 0.0
    %209 = vmatprep.subr.mxu0 0.0
    %210 = vmatpush1.xpose.msra.mxu0 0.0
    %211 = vmatprep.subr.mxu0 0.0
    %212 = vmatpush1.xpose.msra.mxu0 0.0
    %213 = vmatprep.subr.mxu0 0.0
    %214 = vmatpush1.xpose.msra.mxu0 0.0
    %215 = vmatprep.subr.mxu0 0.0
    %216 = vmatpush1.xpose.msra.mxu0 0.0
    %217 = vmatprep.subr.mxu0 0.0
    %218 = vmatpush1.xpose.msra.mxu0 0.0
    %219 = vmatprep.mubr.f32.mxu0 0.0
    %220 = vmatmul.mubr.f32.gmra.mrb[0].mxu0 %v151
    %v221 = vpop.f32.mrb[0].mxu0
    %v222 = vadd.f32 0.0, %v221
    %v223 = vpop.f32.mrb[0].mxu0
    %224 = vdwg.mxu0
    %225 = vrot.lane.b32.xlu0 %v139, 120
    %v226 = vpop.permute.xlu0 %225
    %227 = vrot.lane.b32.xlu0 %v139, 88
    %v228 = vpop.permute.xlu0 %227
    %v229 = vsel %vm150, %v226, 0
    %v231 = vsel %vm150, %v228, 0
    %233 = vmatprep.subr.mxu0 0.0
    %234 = vmatpush1.xpose.msra.mxu0 %v231
    %235 = vmatprep.subr.mxu0 0.0
    %236 = vmatpush1.xpose.msra.mxu0 0.0
    %237 = vmatprep.subr.mxu0 0.0
    %238 = vmatpush1.xpose.msra.mxu0 0.0
    %239 = vmatprep.subr.mxu0 0.0
    %240 = vmatpush1.xpose.msra.mxu0 0.0
    %241 = vmatprep.subr.mxu0 0.0
    %242 = vmatpush1.xpose.msra.mxu0 0.0
    %243 = vmatprep.subr.mxu0 0.0
    %244 = vmatpush1.xpose.msra.mxu0 0.0
    %245 = vmatprep.subr.mxu0 0.0
    %246 = vmatpush1.xpose.msra.mxu0 0.0
    %247 = vmatprep.subr.mxu0 0.0
    %248 = vmatpush1.xpose.msra.mxu0 0.0
    %249 = vmatprep.subr.mxu0 0.0
    %250 = vmatpush1.xpose.msra.mxu0 0.0
    %251 = vmatprep.subr.mxu0 0.0
    %252 = vmatpush1.xpose.msra.mxu0 0.0
    %253 = vmatprep.subr.mxu0 0.0
    %254 = vmatpush1.xpose.msra.mxu0 0.0
    %255 = vmatprep.subr.mxu0 0.0
    %256 = vmatpush1.xpose.msra.mxu0 0.0
    %257 = vmatprep.subr.mxu0 0.0
    %258 = vmatpush1.xpose.msra.mxu0 0.0
    %259 = vmatprep.subr.mxu0 0.0
    %260 = vmatpush1.xpose.msra.mxu0 0.0
    %261 = vmatprep.subr.mxu0 0.0
    %262 = vmatpush1.xpose.msra.mxu0 0.0
    %263 = vmatprep.subr.mxu0 0.0
    %264 = vmatpush1.xpose.msra.mxu0 0.0
    %265 = vmatprep.subr.mxu0 0.0
    %266 = vmatpush1.xpose.msra.mxu0 0.0
    %267 = vmatprep.subr.mxu0 0.0
    %268 = vmatpush1.xpose.msra.mxu0 0.0
    %269 = vmatprep.subr.mxu0 0.0
    %270 = vmatpush1.xpose.msra.mxu0 0.0
    %271 = vmatprep.subr.mxu0 0.0
    %272 = vmatpush1.xpose.msra.mxu0 0.0
    %273 = vmatprep.subr.mxu0 0.0
    %274 = vmatpush1.xpose.msra.mxu0 0.0
    %275 = vmatprep.subr.mxu0 0.0
    %276 = vmatpush1.xpose.msra.mxu0 0.0
    %277 = vmatprep.subr.mxu0 0.0
    %278 = vmatpush1.xpose.msra.mxu0 0.0
    %279 = vmatprep.subr.mxu0 0.0
    %280 = vmatpush1.xpose.msra.mxu0 0.0
    %281 = vmatprep.subr.mxu0 0.0
    %282 = vmatpush1.xpose.msra.mxu0 0.0
    %283 = vmatprep.subr.mxu0 0.0
    %284 = vmatpush1.xpose.msra.mxu0 0.0
    %285 = vmatprep.subr.mxu0 0.0
    %286 = vmatpush1.xpose.msra.mxu0 0.0
    %287 = vmatprep.subr.mxu0 0.0
    %288 = vmatpush1.xpose.msra.mxu0 0.0
    %289 = vmatprep.subr.mxu0 0.0
    %290 = vmatpush1.xpose.msra.mxu0 0.0
    %291 = vmatprep.subr.mxu0 0.0
    %292 = vmatpush1.xpose.msra.mxu0 0.0
    %293 = vmatprep.subr.mxu0 0.0
    %294 = vmatpush1.xpose.msra.mxu0 0.0
    %295 = vmatprep.subr.mxu0 0.0
    %296 = vmatpush1.xpose.msra.mxu0 0.0
    %297 = vmatprep.mubr.f32.mxu0 0.0
    %298 = vmatmul.mubr.f32.gmra.mrb[0].mxu0 %v229
    %v299 = vpop.f32.mrb[0].mxu0
    %v300 = vadd.f32 0.0, %v299
    %v301 = vpop.f32.mrb[0].mxu0
    %302 = vdwg.mxu0
    %303 = vrot.lane.b32.xlu0 %v139, 112
    %v304 = vpop.permute.xlu0 %303
    %305 = vrot.lane.b32.xlu0 %v139, 80
    %v306 = vpop.permute.xlu0 %305
    %v307 = vsel %vm150, %v304, 0
    %v309 = vsel %vm150, %v306, 0
    %311 = vmatprep.subr.mxu0 0.0
    %312 = vmatpush1.xpose.msra.mxu0 %v309
    %313 = vmatprep.subr.mxu0 0.0
    %314 = vmatpush1.xpose.msra.mxu0 0.0
    %315 = vmatprep.subr.mxu0 0.0
    %316 = vmatpush1.xpose.msra.mxu0 0.0
    %317 = vmatprep.subr.mxu0 0.0
    %318 = vmatpush1.xpose.msra.mxu0 0.0
    %319 = vmatprep.subr.mxu0 0.0
    %320 = vmatpush1.xpose.msra.mxu0 0.0
    %321 = vmatprep.subr.mxu0 0.0
    %322 = vmatpush1.xpose.msra.mxu0 0.0
    %323 = vmatprep.subr.mxu0 0.0
    %324 = vmatpush1.xpose.msra.mxu0 0.0
    %325 = vmatprep.subr.mxu0 0.0
    %326 = vmatpush1.xpose.msra.mxu0 0.0
    %327 = vmatprep.subr.mxu0 0.0
    %328 = vmatpush1.xpose.msra.mxu0 0.0
    %329 = vmatprep.subr.mxu0 0.0
    %330 = vmatpush1.xpose.msra.mxu0 0.0
    %331 = vmatprep.subr.mxu0 0.0
    %332 = vmatpush1.xpose.msra.mxu0 0.0
    %333 = vmatprep.subr.mxu0 0.0
    %334 = vmatpush1.xpose.msra.mxu0 0.0
    %335 = vmatprep.subr.mxu0 0.0
    %336 = vmatpush1.xpose.msra.mxu0 0.0
    %337 = vmatprep.subr.mxu0 0.0
    %338 = vmatpush1.xpose.msra.mxu0 0.0
    %339 = vmatprep.subr.mxu0 0.0
    %340 = vmatpush1.xpose.msra.mxu0 0.0
    %341 = vmatprep.subr.mxu0 0.0
    %342 = vmatpush1.xpose.msra.mxu0 0.0
    %343 = vmatprep.subr.mxu0 0.0
    %344 = vmatpush1.xpose.msra.mxu0 0.0
    %345 = vmatprep.subr.mxu0 0.0
    %346 = vmatpush1.xpose.msra.mxu0 0.0
    %347 = vmatprep.subr.mxu0 0.0
    %348 = vmatpush1.xpose.msra.mxu0 0.0
    %349 = vmatprep.subr.mxu0 0.0
    %350 = vmatpush1.xpose.msra.mxu0 0.0
    %351 = vmatprep.subr.mxu0 0.0
    %352 = vmatpush1.xpose.msra.mxu0 0.0
    %353 = vmatprep.subr.mxu0 0.0
    %354 = vmatpush1.xpose.msra.mxu0 0.0
    %355 = vmatprep.subr.mxu0 0.0
    %356 = vmatpush1.xpose.msra.mxu0 0.0
    %357 = vmatprep.subr.mxu0 0.0
    %358 = vmatpush1.xpose.msra.mxu0 0.0
    %359 = vmatprep.subr.mxu0 0.0
    %360 = vmatpush1.xpose.msra.mxu0 0.0
    %361 = vmatprep.subr.mxu0 0.0
    %362 = vmatpush1.xpose.msra.mxu0 0.0
    %363 = vmatprep.subr.mxu0 0.0
    %364 = vmatpush1.xpose.msra.mxu0 0.0
    %365 = vmatprep.subr.mxu0 0.0
    %366 = vmatpush1.xpose.msra.mxu0 0.0
    %367 = vmatprep.subr.mxu0 0.0
    %368 = vmatpush1.xpose.msra.mxu0 0.0
    %369 = vmatprep.subr.mxu0 0.0
    %370 = vmatpush1.xpose.msra.mxu0 0.0
    %371 = vmatprep.subr.mxu0 0.0
    %372 = vmatpush1.xpose.msra.mxu0 0.0
    %373 = vmatprep.subr.mxu0 0.0
    %374 = vmatpush1.xpose.msra.mxu0 0.0
    %375 = vmatprep.mubr.f32.mxu0 0.0
    %376 = vmatmul.mubr.f32.gmra.mrb[0].mxu0 %v307
    %v377 = vpop.f32.mrb[0].mxu0
    %v378 = vadd.f32 0.0, %v377
    %v379 = vpop.f32.mrb[0].mxu0
    %380 = vdwg.mxu0
    %381 = vrot.lane.b32.xlu0 %v139, 104
    %v382 = vpop.permute.xlu0 %381
    %383 = vrot.lane.b32.xlu0 %v139, 72
    %v384 = vpop.permute.xlu0 %383
    %v385 = vsel %vm150, %v382, 0
    %v387 = vsel %vm150, %v384, 0
    %389 = vmatprep.subr.mxu0 0.0
    %390 = vmatpush1.xpose.msra.mxu0 %v387
    %391 = vmatprep.subr.mxu0 0.0
    %392 = vmatpush1.xpose.msra.mxu0 0.0
    %393 = vmatprep.subr.mxu0 0.0
    %394 = vmatpush1.xpose.msra.mxu0 0.0
    %395 = vmatprep.subr.mxu0 0.0
    %396 = vmatpush1.xpose.msra.mxu0 0.0
    %397 = vmatprep.subr.mxu0 0.0
    %398 = vmatpush1.xpose.msra.mxu0 0.0
    %399 = vmatprep.subr.mxu0 0.0
    %400 = vmatpush1.xpose.msra.mxu0 0.0
    %401 = vmatprep.subr.mxu0 0.0
    %402 = vmatpush1.xpose.msra.mxu0 0.0
    %403 = vmatprep.subr.mxu0 0.0
    %404 = vmatpush1.xpose.msra.mxu0 0.0
    %405 = vmatprep.subr.mxu0 0.0
    %406 = vmatpush1.xpose.msra.mxu0 0.0
    %407 = vmatprep.subr.mxu0 0.0
    %408 = vmatpush1.xpose.msra.mxu0 0.0
    %409 = vmatprep.subr.mxu0 0.0
    %410 = vmatpush1.xpose.msra.mxu0 0.0
    %411 = vmatprep.subr.mxu0 0.0
    %412 = vmatpush1.xpose.msra.mxu0 0.0
    %413 = vmatprep.subr.mxu0 0.0
    %414 = vmatpush1.xpose.msra.mxu0 0.0
    %415 = vmatprep.subr.mxu0 0.0
    %416 = vmatpush1.xpose.msra.mxu0 0.0
    %417 = vmatprep.subr.mxu0 0.0
    %418 = vmatpush1.xpose.msra.mxu0 0.0
    %419 = vmatprep.subr.mxu0 0.0
    %420 = vmatpush1.xpose.msra.mxu0 0.0
    %421 = vmatprep.subr.mxu0 0.0
    %422 = vmatpush1.xpose.msra.mxu0 0.0
    %423 = vmatprep.subr.mxu0 0.0
    %424 = vmatpush1.xpose.msra.mxu0 0.0
    %425 = vmatprep.subr.mxu0 0.0
    %426 = vmatpush1.xpose.msra.mxu0 0.0
    %427 = vmatprep.subr.mxu0 0.0
    %428 = vmatpush1.xpose.msra.mxu0 0.0
    %429 = vmatprep.subr.mxu0 0.0
    %430 = vmatpush1.xpose.msra.mxu0 0.0
    %431 = vmatprep.subr.mxu0 0.0
    %432 = vmatpush1.xpose.msra.mxu0 0.0
    %433 = vmatprep.subr.mxu0 0.0
    %434 = vmatpush1.xpose.msra.mxu0 0.0
    %435 = vmatprep.subr.mxu0 0.0
    %436 = vmatpush1.xpose.msra.mxu0 0.0
    %437 = vmatprep.subr.mxu0 0.0
    %438 = vmatpush1.xpose.msra.mxu0 0.0
    %439 = vmatprep.subr.mxu0 0.0
    %440 = vmatpush1.xpose.msra.mxu0 0.0
    %441 = vmatprep.subr.mxu0 0.0
    %442 = vmatpush1.xpose.msra.mxu0 0.0
    %443 = vmatprep.subr.mxu0 0.0
    %444 = vmatpush1.xpose.msra.mxu0 0.0
    %445 = vmatprep.subr.mxu0 0.0
    %446 = vmatpush1.xpose.msra.mxu0 0.0
    %447 = vmatprep.subr.mxu0 0.0
    %448 = vmatpush1.xpose.msra.mxu0 0.0
    %449 = vmatprep.subr.mxu0 0.0
    %450 = vmatpush1.xpose.msra.mxu0 0.0
    %451 = vmatprep.subr.mxu0 0.0
    %452 = vmatpush1.xpose.msra.mxu0 0.0
    %453 = vmatprep.mubr.f32.mxu0 0.0
    %454 = vmatmul.mubr.f32.gmra.mrb[0].mxu0 %v385
    %v455 = vpop.f32.mrb[0].mxu0
    %v456 = vadd.f32 0.0, %v455
    %v457 = vpop.f32.mrb[0].mxu0
    %458 = vdwg.mxu0
    %v459 = vadd.f32 %v222, %v47
    %v460 = vadd.f32 %v300, %v47
    %v461 = vadd.f32 %v378, %v47
    %v462 = vadd.f32 %v456, %v47
    %v463 = vsel %vm150, %v459, -inf
    %464 = vmax.xlane.f32.xlu0 %v463
    %v465 = vpop.xlane.xlu0 %464
    %v466 = vsel %vm150, %v460, -inf
    %467 = vmax.xlane.f32.xlu0 %v466
    %v468 = vpop.xlane.xlu0 %467
    %v469 = vsel %vm150, %v461, -inf
    %470 = vmax.xlane.f32.xlu0 %v469
    %v471 = vpop.xlane.xlu0 %470
    %v472 = vsel %vm150, %v462, -inf
    %473 = vmax.xlane.f32.xlu0 %v472
    %v474 = vpop.xlane.xlu0 %473
    %v475 = vsub.f32 %v459, %v465
    %v476 = vsub.f32 %v460, %v468
    %v477 = vsub.f32 %v461, %v471
    %v478 = vsub.f32 %v462, %v474
    %v479 = vmul.f32 %v475, 1.442695
    %v480 = vpow.pop %v479
    %v481 = vmul.f32 %v476, 1.442695
    %v482 = vpow.pop %v481
    %v483 = vmul.f32 %v477, 1.442695
    %v484 = vpow.pop %v483
    %v485 = vmul.f32 %v478, 1.442695
    %v486 = vpow.pop %v485
    %v487 = vsel %vm150, %v480, 0.0
    %488 = vadd.xlane.f32.xlu0 %v487
    %v489 = vpop.xlane.xlu0 %488
    %v490 = vsel %vm150, %v482, 0.0
    %491 = vadd.xlane.f32.xlu0 %v490
    %v492 = vpop.xlane.xlu0 %491
    %v493 = vsel %vm150, %v484, 0.0
    %494 = vadd.xlane.f32.xlu0 %v493
    %v495 = vpop.xlane.xlu0 %494
    %v496 = vsel %vm150, %v486, 0.0
    %497 = vadd.xlane.f32.xlu0 %v496
    %v498 = vpop.xlane.xlu0 %497
    %v499 = vrcp.pop %v489
    %v500 = vmul.f32 %v480, %v499
    %v501 = vrcp.pop %v492
    %v502 = vmul.f32 %v482, %v501
    %v503 = vrcp.pop %v495
    %v504 = vmul.f32 %v484, %v503
    %v505 = vrcp.pop %v498
    %v506 = vmul.f32 %v486, %v505
    %507 = vrot.lane.b32.xlu0 %v139, 64
    %v508 = vpop.permute.xlu0 %507
    %v511 = vsel %vm150, %v500, 0
    %513 = vmatprep.subr.mxu0 0.0
    %514 = vmatpush1.msra.mxu0 %v508
    %515 = vmatprep.subr.mxu0 0.0
    %516 = vmatpush1.msra.mxu0 0.0
    %517 = vmatprep.subr.mxu0 0.0
    %518 = vmatpush1.msra.mxu0 0.0
    %519 = vmatprep.subr.mxu0 0.0
    %520 = vmatpush1.msra.mxu0 0.0
    %521 = vmatprep.subr.mxu0 0.0
    %522 = vmatpush1.msra.mxu0 0.0
    %523 = vmatprep.subr.mxu0 0.0
    %524 = vmatpush1.msra.mxu0 0.0
    %525 = vmatprep.subr.mxu0 0.0
    %526 = vmatpush1.msra.mxu0 0.0
    %527 = vmatprep.subr.mxu0 0.0
    %528 = vmatpush1.msra.mxu0 0.0
    %529 = vmatprep.subr.mxu0 0.0
    %530 = vmatpush1.msra.mxu0 0.0
    %531 = vmatprep.subr.mxu0 0.0
    %532 = vmatpush1.msra.mxu0 0.0
    %533 = vmatprep.subr.mxu0 0.0
    %534 = vmatpush1.msra.mxu0 0.0
    %535 = vmatprep.subr.mxu0 0.0
    %536 = vmatpush1.msra.mxu0 0.0
    %537 = vmatprep.subr.mxu0 0.0
    %538 = vmatpush1.msra.mxu0 0.0
    %539 = vmatprep.subr.mxu0 0.0
    %540 = vmatpush1.msra.mxu0 0.0
    %541 = vmatprep.subr.mxu0 0.0
    %542 = vmatpush1.msra.mxu0 0.0
    %543 = vmatprep.subr.mxu0 0.0
    %544 = vmatpush1.msra.mxu0 0.0
    %545 = vmatprep.subr.mxu0 0.0
    %546 = vmatpush1.msra.mxu0 0.0
    %547 = vmatprep.subr.mxu0 0.0
    %548 = vmatpush1.msra.mxu0 0.0
    %549 = vmatprep.subr.mxu0 0.0
    %550 = vmatpush1.msra.mxu0 0.0
    %551 = vmatprep.subr.mxu0 0.0
    %552 = vmatpush1.msra.mxu0 0.0
    %553 = vmatprep.subr.mxu0 0.0
    %554 = vmatpush1.msra.mxu0 0.0
    %555 = vmatprep.subr.mxu0 0.0
    %556 = vmatpush1.msra.mxu0 0.0
    %557 = vmatprep.subr.mxu0 0.0
    %558 = vmatpush1.msra.mxu0 0.0
    %559 = vmatprep.subr.mxu0 0.0
    %560 = vmatpush1.msra.mxu0 0.0
    %561 = vmatprep.subr.mxu0 0.0
    %562 = vmatpush1.msra.mxu0 0.0
    %563 = vmatprep.subr.mxu0 0.0
    %564 = vmatpush1.msra.mxu0 0.0
    %565 = vmatprep.subr.mxu0 0.0
    %566 = vmatpush1.msra.mxu0 0.0
    %567 = vmatprep.subr.mxu0 0.0
    %568 = vmatpush1.msra.mxu0 0.0
    %569 = vmatprep.subr.mxu0 0.0
    %570 = vmatpush1.msra.mxu0 0.0
    %571 = vmatprep.subr.mxu0 0.0
    %572 = vmatpush1.msra.mxu0 0.0
    %573 = vmatprep.subr.mxu0 0.0
    %574 = vmatpush1.msra.mxu0 0.0
    %575 = vmatprep.subr.mxu0 0.0
    %576 = vmatpush1.msra.mxu0 0.0
    %577 = vmatprep.mubr.f32.mxu0 0.0
    %578 = vmatmul.mubr.f32.gmra.mrb[0].mxu0 %v511
    %v579 = vpop.f32.mrb[0].mxu0
    %v580 = vadd.f32 0.0, %v579
    %v581 = vpop.f32.mrb[0].mxu0
    %582 = vdwg.mxu0
    %583 = vrot.lane.b32.xlu0 %v139, 56
    %v584 = vpop.permute.xlu0 %583
    %v587 = vsel %vm150, %v502, 0
    %589 = vmatprep.subr.mxu0 0.0
    %590 = vmatpush1.msra.mxu0 %v584
    %591 = vmatprep.subr.mxu0 0.0
    %592 = vmatpush1.msra.mxu0 0.0
    %593 = vmatprep.subr.mxu0 0.0
    %594 = vmatpush1.msra.mxu0 0.0
    %595 = vmatprep.subr.mxu0 0.0
    %596 = vmatpush1.msra.mxu0 0.0
    %597 = vmatprep.subr.mxu0 0.0
    %598 = vmatpush1.msra.mxu0 0.0
    %599 = vmatprep.subr.mxu0 0.0
    %600 = vmatpush1.msra.mxu0 0.0
    %601 = vmatprep.subr.mxu0 0.0
    %602 = vmatpush1.msra.mxu0 0.0
    %603 = vmatprep.subr.mxu0 0.0
    %604 = vmatpush1.msra.mxu0 0.0
    %605 = vmatprep.subr.mxu0 0.0
    %606 = vmatpush1.msra.mxu0 0.0
    %607 = vmatprep.subr.mxu0 0.0
    %608 = vmatpush1.msra.mxu0 0.0
    %609 = vmatprep.subr.mxu0 0.0
    %610 = vmatpush1.msra.mxu0 0.0
    %611 = vmatprep.subr.mxu0 0.0
    %612 = vmatpush1.msra.mxu0 0.0
    %613 = vmatprep.subr.mxu0 0.0
    %614 = vmatpush1.msra.mxu0 0.0
    %615 = vmatprep.subr.mxu0 0.0
    %616 = vmatpush1.msra.mxu0 0.0
    %617 = vmatprep.subr.mxu0 0.0
    %618 = vmatpush1.msra.mxu0 0.0
    %619 = vmatprep.subr.mxu0 0.0
    %620 = vmatpush1.msra.mxu0 0.0
    %621 = vmatprep.subr.mxu0 0.0
    %622 = vmatpush1.msra.mxu0 0.0
    %623 = vmatprep.subr.mxu0 0.0
    %624 = vmatpush1.msra.mxu0 0.0
    %625 = vmatprep.subr.mxu0 0.0
    %626 = vmatpush1.msra.mxu0 0.0
    %627 = vmatprep.subr.mxu0 0.0
    %628 = vmatpush1.msra.mxu0 0.0
    %629 = vmatprep.subr.mxu0 0.0
    %630 = vmatpush1.msra.mxu0 0.0
    %631 = vmatprep.subr.mxu0 0.0
    %632 = vmatpush1.msra.mxu0 0.0
    %633 = vmatprep.subr.mxu0 0.0
    %634 = vmatpush1.msra.mxu0 0.0
    %635 = vmatprep.subr.mxu0 0.0
    %636 = vmatpush1.msra.mxu0 0.0
    %637 = vmatprep.subr.mxu0 0.0
    %638 = vmatpush1.msra.mxu0 0.0
    %639 = vmatprep.subr.mxu0 0.0
    %640 = vmatpush1.msra.mxu0 0.0
    %641 = vmatprep.subr.mxu0 0.0
    %642 = vmatpush1.msra.mxu0 0.0
    %643 = vmatprep.subr.mxu0 0.0
    %644 = vmatpush1.msra.mxu0 0.0
    %645 = vmatprep.subr.mxu0 0.0
    %646 = vmatpush1.msra.mxu0 0.0
    %647 = vmatprep.subr.mxu0 0.0
    %648 = vmatpush1.msra.mxu0 0.0
    %649 = vmatprep.subr.mxu0 0.0
    %650 = vmatpush1.msra.mxu0 0.0
    %651 = vmatprep.subr.mxu0 0.0
    %652 = vmatpush1.msra.mxu0 0.0
    %653 = vmatprep.mubr.f32.mxu0 0.0
    %654 = vmatmul.mubr.f32.gmra.mrb[0].mxu0 %v587
    %v655 = vpop.f32.mrb[0].mxu0
    %v656 = vadd.f32 0.0, %v655
    %v657 = vpop.f32.mrb[0].mxu0
    %658 = vdwg.mxu0
    %v660 = vsel %vm150, %v656, 0
    %662 = vmatprep.subr.mxu0 0.0
    %663 = vmatpush1.msra.mxu0 %v54
    %664 = vmatprep.subr.mxu0 0.0
    %665 = vmatpush1.msra.mxu0 0.0
    %666 = vmatprep.subr.mxu0 0.0
    %667 = vmatpush1.msra.mxu0 0.0
    %668 = vmatprep.subr.mxu0 0.0
    %669 = vmatpush1.msra.mxu0 0.0
    %670 = vmatprep.subr.mxu0 0.0
    %671 = vmatpush1.msra.mxu0 0.0
    %672 = vmatprep.subr.mxu0 0.0
    %673 = vmatpush1.msra.mxu0 0.0
    %674 = vmatprep.subr.mxu0 0.0
    %675 = vmatpush1.msra.mxu0 0.0
    %676 = vmatprep.subr.mxu0 0.0
    %677 = vmatpush1.msra.mxu0 0.0
    %678 = vmatprep.subr.mxu0 0.0
    %679 = vmatpush1.msra.mxu0 0.0
    %680 = vmatprep.subr.mxu0 0.0
    %681 = vmatpush1.msra.mxu0 0.0
    %682 = vmatprep.subr.mxu0 0.0
    %683 = vmatpush1.msra.mxu0 0.0
    %684 = vmatprep.subr.mxu0 0.0
    %685 = vmatpush1.msra.mxu0 0.0
    %686 = vmatprep.subr.mxu0 0.0
    %687 = vmatpush1.msra.mxu0 0.0
    %688 = vmatprep.subr.mxu0 0.0
    %689 = vmatpush1.msra.mxu0 0.0
    %690 = vmatprep.subr.mxu0 0.0
    %691 = vmatpush1.msra.mxu0 0.0
    %692 = vmatprep.subr.mxu0 0.0
    %693 = vmatpush1.msra.mxu0 0.0
    %694 = vmatprep.subr.mxu0 0.0
    %695 = vmatpush1.msra.mxu0 0.0
    %696 = vmatprep.subr.mxu0 0.0
    %697 = vmatpush1.msra.mxu0 0.0
    %698 = vmatprep.subr.mxu0 0.0
    %699 = vmatpush1.msra.mxu0 0.0
    %700 = vmatprep.subr.mxu0 0.0
    %701 = vmatpush1.msra.mxu0 0.0
    %702 = vmatprep.subr.mxu0 0.0
    %703 = vmatpush1.msra.mxu0 0.0
    %704 = vmatprep.subr.mxu0 0.0
    %705 = vmatpush1.msra.mxu0 0.0
    %706 = vmatprep.subr.mxu0 0.0
    %707 = vmatpush1.msra.mxu0 0.0
    %708 = vmatprep.subr.mxu0 0.0
    %709 = vmatpush1.msra.mxu0 0.0
    %710 = vmatprep.subr.mxu0 0.0
    %711 = vmatpush1.msra.mxu0 0.0
    %712 = vmatprep.subr.mxu0 0.0
    %713 = vmatpush1.msra.mxu0 0.0
    %714 = vmatprep.subr.mxu0 0.0
    %715 = vmatpush1.msra.mxu0 0.0
    %716 = vmatprep.subr.mxu0 0.0
    %717 = vmatpush1.msra.mxu0 0.0
    %718 = vmatprep.subr.mxu0 0.0
    %719 = vmatpush1.msra.mxu0 0.0
    %720 = vmatprep.subr.mxu0 0.0
    %721 = vmatpush1.msra.mxu0 0.0
    %722 = vmatprep.subr.mxu0 0.0
    %723 = vmatpush1.msra.mxu0 0.0
    %724 = vmatprep.subr.mxu0 0.0
    %725 = vmatpush1.msra.mxu0 0.0
    %726 = vmatprep.mubr.f32.mxu0 0.0
    %727 = vmatmul.mubr.f32.gmra.mrb[0].mxu0 %v660
    %v728 = vpop.f32.mrb[0].mxu0
    %v729 = vadd.f32 0.0, %v728
    %v730 = vpop.f32.mrb[0].mxu0
    %731 = vdwg.mxu0
    %v733 = vsel %vm150, %v580, 0
    %735 = vmatprep.subr.mxu0 0.0
    %736 = vmatpush1.msra.mxu0 %v53
    %737 = vmatprep.subr.mxu0 0.0
    %738 = vmatpush1.msra.mxu0 0.0
    %739 = vmatprep.subr.mxu0 0.0
    %740 = vmatpush1.msra.mxu0 0.0
    %741 = vmatprep.subr.mxu0 0.0
    %742 = vmatpush1.msra.mxu0 0.0
    %743 = vmatprep.subr.mxu0 0.0
    %744 = vmatpush1.msra.mxu0 0.0
    %745 = vmatprep.subr.mxu0 0.0
    %746 = vmatpush1.msra.mxu0 0.0
    %747 = vmatprep.subr.mxu0 0.0
    %748 = vmatpush1.msra.mxu0 0.0
    %749 = vmatprep.subr.mxu0 0.0
    %750 = vmatpush1.msra.mxu0 0.0
    %751 = vmatprep.subr.mxu0 0.0
    %752 = vmatpush1.msra.mxu0 0.0
    %753 = vmatprep.subr.mxu0 0.0
    %754 = vmatpush1.msra.mxu0 0.0
    %755 = vmatprep.subr.mxu0 0.0
    %756 = vmatpush1.msra.mxu0 0.0
    %757 = vmatprep.subr.mxu0 0.0
    %758 = vmatpush1.msra.mxu0 0.0
    %759 = vmatprep.subr.mxu0 0.0
    %760 = vmatpush1.msra.mxu0 0.0
    %761 = vmatprep.subr.mxu0 0.0
    %762 = vmatpush1.msra.mxu0 0.0
    %763 = vmatprep.subr.mxu0 0.0
    %764 = vmatpush1.msra.mxu0 0.0
    %765 = vmatprep.subr.mxu0 0.0
    %766 = vmatpush1.msra.mxu0 0.0
    %767 = vmatprep.subr.mxu0 0.0
    %768 = vmatpush1.msra.mxu0 0.0
    %769 = vmatprep.subr.mxu0 0.0
    %770 = vmatpush1.msra.mxu0 0.0
    %771 = vmatprep.subr.mxu0 0.0
    %772 = vmatpush1.msra.mxu0 0.0
    %773 = vmatprep.subr.mxu0 0.0
    %774 = vmatpush1.msra.mxu0 0.0
    %775 = vmatprep.subr.mxu0 0.0
    %776 = vmatpush1.msra.mxu0 0.0
    %777 = vmatprep.subr.mxu0 0.0
    %778 = vmatpush1.msra.mxu0 0.0
    %779 = vmatprep.subr.mxu0 0.0
    %780 = vmatpush1.msra.mxu0 0.0
    %781 = vmatprep.subr.mxu0 0.0
    %782 = vmatpush1.msra.mxu0 0.0
    %783 = vmatprep.subr.mxu0 0.0
    %784 = vmatpush1.msra.mxu0 0.0
    %785 = vmatprep.subr.mxu0 0.0
    %786 = vmatpush1.msra.mxu0 0.0
    %787 = vmatprep.subr.mxu0 0.0
    %788 = vmatpush1.msra.mxu0 0.0
    %789 = vmatprep.subr.mxu0 0.0
    %790 = vmatpush1.msra.mxu0 0.0
    %791 = vmatprep.subr.mxu0 0.0
    %792 = vmatpush1.msra.mxu0 0.0
    %793 = vmatprep.subr.mxu0 0.0
    %794 = vmatpush1.msra.mxu0 0.0
    %795 = vmatprep.subr.mxu0 0.0
    %796 = vmatpush1.msra.mxu0 0.0
    %797 = vmatprep.subr.mxu0 0.0
    %798 = vmatpush1.msra.mxu0 0.0
    %799 = vmatprep.mubr.f32.mxu0 0.0
    %800 = vmatmul.mubr.f32.gmra.mrb[0].mxu0 %v733
    %v801 = vpop.f32.mrb[0].mxu0
    %v802 = vadd.f32 %v729, %v801
    %v803 = vpop.f32.mrb[0].mxu0
    %804 = vdwg.mxu0
    %805 = vrot.lane.b32.xlu0 %v139, 48
    %v806 = vpop.permute.xlu0 %805
    %v809 = vsel %vm150, %v504, 0
    %811 = vmatprep.subr.mxu0 0.0
    %812 = vmatpush1.msra.mxu0 %v806
    %813 = vmatprep.subr.mxu0 0.0
    %814 = vmatpush1.msra.mxu0 0.0
    %815 = vmatprep.subr.mxu0 0.0
    %816 = vmatpush1.msra.mxu0 0.0
    %817 = vmatprep.subr.mxu0 0.0
    %818 = vmatpush1.msra.mxu0 0.0
    %819 = vmatprep.subr.mxu0 0.0
    %820 = vmatpush1.msra.mxu0 0.0
    %821 = vmatprep.subr.mxu0 0.0
    %822 = vmatpush1.msra.mxu0 0.0
    %823 = vmatprep.subr.mxu0 0.0
    %824 = vmatpush1.msra.mxu0 0.0
    %825 = vmatprep.subr.mxu0 0.0
    %826 = vmatpush1.msra.mxu0 0.0
    %827 = vmatprep.subr.mxu0 0.0
    %828 = vmatpush1.msra.mxu0 0.0
    %829 = vmatprep.subr.mxu0 0.0
    %830 = vmatpush1.msra.mxu0 0.0
    %831 = vmatprep.subr.mxu0 0.0
    %832 = vmatpush1.msra.mxu0 0.0
    %833 = vmatprep.subr.mxu0 0.0
    %834 = vmatpush1.msra.mxu0 0.0
    %835 = vmatprep.subr.mxu0 0.0
    %836 = vmatpush1.msra.mxu0 0.0
    %837 = vmatprep.subr.mxu0 0.0
    %838 = vmatpush1.msra.mxu0 0.0
    %839 = vmatprep.subr.mxu0 0.0
    %840 = vmatpush1.msra.mxu0 0.0
    %841 = vmatprep.subr.mxu0 0.0
    %842 = vmatpush1.msra.mxu0 0.0
    %843 = vmatprep.subr.mxu0 0.0
    %844 = vmatpush1.msra.mxu0 0.0
    %845 = vmatprep.subr.mxu0 0.0
    %846 = vmatpush1.msra.mxu0 0.0
    %847 = vmatprep.subr.mxu0 0.0
    %848 = vmatpush1.msra.mxu0 0.0
    %849 = vmatprep.subr.mxu0 0.0
    %850 = vmatpush1.msra.mxu0 0.0
    %851 = vmatprep.subr.mxu0 0.0
    %852 = vmatpush1.msra.mxu0 0.0
    %853 = vmatprep.subr.mxu0 0.0
    %854 = vmatpush1.msra.mxu0 0.0
    %855 = vmatprep.subr.mxu0 0.0
    %856 = vmatpush1.msra.mxu0 0.0
    %857 = vmatprep.subr.mxu0 0.0
    %858 = vmatpush1.msra.mxu0 0.0
    %859 = vmatprep.subr.mxu0 0.0
    %860 = vmatpush1.msra.mxu0 0.0
    %861 = vmatprep.subr.mxu0 0.0
    %862 = vmatpush1.msra.mxu0 0.0
    %863 = vmatprep.subr.mxu0 0.0
    %864 = vmatpush1.msra.mxu0 0.0
    %865 = vmatprep.subr.mxu0 0.0
    %866 = vmatpush1.msra.mxu0 0.0
    %867 = vmatprep.subr.mxu0 0.0
    %868 = vmatpush1.msra.mxu0 0.0
    %869 = vmatprep.subr.mxu0 0.0
    %870 = vmatpush1.msra.mxu0 0.0
    %871 = vmatprep.subr.mxu0 0.0
    %872 = vmatpush1.msra.mxu0 0.0
    %873 = vmatprep.subr.mxu0 0.0
    %874 = vmatpush1.msra.mxu0 0.0
    %875 = vmatprep.mubr.f32.mxu0 0.0
    %876 = vmatmul.mubr.f32.gmra.mrb[0].mxu0 %v809
    %v877 = vpop.f32.mrb[0].mxu0
    %v878 = vadd.f32 0.0, %v877
    %v879 = vpop.f32.mrb[0].mxu0
    %880 = vdwg.mxu0
    %v882 = vsel %vm150, %v878, 0
    %884 = vmatprep.subr.mxu0 0.0
    %885 = vmatpush1.msra.mxu0 %v55
    %886 = vmatprep.subr.mxu0 0.0
    %887 = vmatpush1.msra.mxu0 0.0
    %888 = vmatprep.subr.mxu0 0.0
    %889 = vmatpush1.msra.mxu0 0.0
    %890 = vmatprep.subr.mxu0 0.0
    %891 = vmatpush1.msra.mxu0 0.0
    %892 = vmatprep.subr.mxu0 0.0
    %893 = vmatpush1.msra.mxu0 0.0
    %894 = vmatprep.subr.mxu0 0.0
    %895 = vmatpush1.msra.mxu0 0.0
    %896 = vmatprep.subr.mxu0 0.0
    %897 = vmatpush1.msra.mxu0 0.0
    %898 = vmatprep.subr.mxu0 0.0
    %899 = vmatpush1.msra.mxu0 0.0
    %900 = vmatprep.subr.mxu0 0.0
    %901 = vmatpush1.msra.mxu0 0.0
    %902 = vmatprep.subr.mxu0 0.0
    %903 = vmatpush1.msra.mxu0 0.0
    %904 = vmatprep.subr.mxu0 0.0
    %905 = vmatpush1.msra.mxu0 0.0
    %906 = vmatprep.subr.mxu0 0.0
    %907 = vmatpush1.msra.mxu0 0.0
    %908 = vmatprep.subr.mxu0 0.0
    %909 = vmatpush1.msra.mxu0 0.0
    %910 = vmatprep.subr.mxu0 0.0
    %911 = vmatpush1.msra.mxu0 0.0
    %912 = vmatprep.subr.mxu0 0.0
    %913 = vmatpush1.msra.mxu0 0.0
    %914 = vmatprep.subr.mxu0 0.0
    %915 = vmatpush1.msra.mxu0 0.0
    %916 = vmatprep.subr.mxu0 0.0
    %917 = vmatpush1.msra.mxu0 0.0
    %918 = vmatprep.subr.mxu0 0.0
    %919 = vmatpush1.msra.mxu0 0.0
    %920 = vmatprep.subr.mxu0 0.0
    %921 = vmatpush1.msra.mxu0 0.0
    %922 = vmatprep.subr.mxu0 0.0
    %923 = vmatpush1.msra.mxu0 0.0
    %924 = vmatprep.subr.mxu0 0.0
    %925 = vmatpush1.msra.mxu0 0.0
    %926 = vmatprep.subr.mxu0 0.0
    %927 = vmatpush1.msra.mxu0 0.0
    %928 = vmatprep.subr.mxu0 0.0
    %929 = vmatpush1.msra.mxu0 0.0
    %930 = vmatprep.subr.mxu0 0.0
    %931 = vmatpush1.msra.mxu0 0.0
    %932 = vmatprep.subr.mxu0 0.0
    %933 = vmatpush1.msra.mxu0 0.0
    %934 = vmatprep.subr.mxu0 0.0
    %935 = vmatpush1.msra.mxu0 0.0
    %936 = vmatprep.subr.mxu0 0.0
    %937 = vmatpush1.msra.mxu0 0.0
    %938 = vmatprep.subr.mxu0 0.0
    %939 = vmatpush1.msra.mxu0 0.0
    %940 = vmatprep.subr.mxu0 0.0
    %941 = vmatpush1.msra.mxu0 0.0
    %942 = vmatprep.subr.mxu0 0.0
    %943 = vmatpush1.msra.mxu0 0.0
    %944 = vmatprep.subr.mxu0 0.0
    %945 = vmatpush1.msra.mxu0 0.0
    %946 = vmatprep.subr.mxu0 0.0
    %947 = vmatpush1.msra.mxu0 0.0
    %948 = vmatprep.mubr.f32.mxu0 0.0
    %949 = vmatmul.mubr.f32.gmra.mrb[0].mxu0 %v882
    %v950 = vpop.f32.mrb[0].mxu0
    %v951 = vadd.f32 0.0, %v950
    %v952 = vpop.f32.mrb[0].mxu0
    %953 = vdwg.mxu0
    %v954 = vadd.f32 %v802, %v951
    %955 = vrot.lane.b32.xlu0 %v139, 40
    %v956 = vpop.permute.xlu0 %955
    %v959 = vsel %vm150, %v506, 0
    %961 = vmatprep.subr.mxu0 0.0
    %962 = vmatpush1.msra.mxu0 %v956
    %963 = vmatprep.subr.mxu0 0.0
    %964 = vmatpush1.msra.mxu0 0.0
    %965 = vmatprep.subr.mxu0 0.0
    %966 = vmatpush1.msra.mxu0 0.0
    %967 = vmatprep.subr.mxu0 0.0
    %968 = vmatpush1.msra.mxu0 0.0
    %969 = vmatprep.subr.mxu0 0.0
    %970 = vmatpush1.msra.mxu0 0.0
    %971 = vmatprep.subr.mxu0 0.0
    %972 = vmatpush1.msra.mxu0 0.0
    %973 = vmatprep.subr.mxu0 0.0
    %974 = vmatpush1.msra.mxu0 0.0
    %975 = vmatprep.subr.mxu0 0.0
    %976 = vmatpush1.msra.mxu0 0.0
    %977 = vmatprep.subr.mxu0 0.0
    %978 = vmatpush1.msra.mxu0 0.0
    %979 = vmatprep.subr.mxu0 0.0
    %980 = vmatpush1.msra.mxu0 0.0
    %981 = vmatprep.subr.mxu0 0.0
    %982 = vmatpush1.msra.mxu0 0.0
    %983 = vmatprep.subr.mxu0 0.0
    %984 = vmatpush1.msra.mxu0 0.0
    %985 = vmatprep.subr.mxu0 0.0
    %986 = vmatpush1.msra.mxu0 0.0
    %987 = vmatprep.subr.mxu0 0.0
    %988 = vmatpush1.msra.mxu0 0.0
    %989 = vmatprep.subr.mxu0 0.0
    %990 = vmatpush1.msra.mxu0 0.0
    %991 = vmatprep.subr.mxu0 0.0
    %992 = vmatpush1.msra.mxu0 0.0
    %993 = vmatprep.subr.mxu0 0.0
    %994 = vmatpush1.msra.mxu0 0.0
    %995 = vmatprep.subr.mxu0 0.0
    %996 = vmatpush1.msra.mxu0 0.0
    %997 = vmatprep.subr.mxu0 0.0
    %998 = vmatpush1.msra.mxu0 0.0
    %999 = vmatprep.subr.mxu0 0.0
    %1000 = vmatpush1.msra.mxu0 0.0
    %1001 = vmatprep.subr.mxu0 0.0
    %1002 = vmatpush1.msra.mxu0 0.0
    %1003 = vmatprep.subr.mxu0 0.0
    %1004 = vmatpush1.msra.mxu0 0.0
    %1005 = vmatprep.subr.mxu0 0.0
    %1006 = vmatpush1.msra.mxu0 0.0
    %1007 = vmatprep.subr.mxu0 0.0
    %1008 = vmatpush1.msra.mxu0 0.0
    %1009 = vmatprep.subr.mxu0 0.0
    %1010 = vmatpush1.msra.mxu0 0.0
    %1011 = vmatprep.subr.mxu0 0.0
    %1012 = vmatpush1.msra.mxu0 0.0
    %1013 = vmatprep.subr.mxu0 0.0
    %1014 = vmatpush1.msra.mxu0 0.0
    %1015 = vmatprep.subr.mxu0 0.0
    %1016 = vmatpush1.msra.mxu0 0.0
    %1017 = vmatprep.subr.mxu0 0.0
    %1018 = vmatpush1.msra.mxu0 0.0
    %1019 = vmatprep.subr.mxu0 0.0
    %1020 = vmatpush1.msra.mxu0 0.0
    %1021 = vmatprep.subr.mxu0 0.0
    %1022 = vmatpush1.msra.mxu0 0.0
    %1023 = vmatprep.subr.mxu0 0.0
    %1024 = vmatpush1.msra.mxu0 0.0
    %1025 = vmatprep.mubr.f32.mxu0 0.0
    %1026 = vmatmul.mubr.f32.gmra.mrb[0].mxu0 %v959
    %v1027 = vpop.f32.mrb[0].mxu0
    %v1028 = vadd.f32 0.0, %v1027
    %v1029 = vpop.f32.mrb[0].mxu0
    %1030 = vdwg.mxu0
    %v1032 = vsel %vm150, %v1028, 0
    %1034 = vmatprep.subr.mxu0 0.0
    %1035 = vmatpush1.msra.mxu0 %v56
    %1036 = vmatprep.subr.mxu0 0.0
    %1037 = vmatpush1.msra.mxu0 0.0
    %1038 = vmatprep.subr.mxu0 0.0
    %1039 = vmatpush1.msra.mxu0 0.0
    %1040 = vmatprep.subr.mxu0 0.0
    %1041 = vmatpush1.msra.mxu0 0.0
    %1042 = vmatprep.subr.mxu0 0.0
    %1043 = vmatpush1.msra.mxu0 0.0
    %1044 = vmatprep.subr.mxu0 0.0
    %1045 = vmatpush1.msra.mxu0 0.0
    %1046 = vmatprep.subr.mxu0 0.0
    %1047 = vmatpush1.msra.mxu0 0.0
    %1048 = vmatprep.subr.mxu0 0.0
    %1049 = vmatpush1.msra.mxu0 0.0
    %1050 = vmatprep.subr.mxu0 0.0
    %1051 = vmatpush1.msra.mxu0 0.0
    %1052 = vmatprep.subr.mxu0 0.0
    %1053 = vmatpush1.msra.mxu0 0.0
    %1054 = vmatprep.subr.mxu0 0.0
    %1055 = vmatpush1.msra.mxu0 0.0
    %1056 = vmatprep.subr.mxu0 0.0
    %1057 = vmatpush1.msra.mxu0 0.0
    %1058 = vmatprep.subr.mxu0 0.0
    %1059 = vmatpush1.msra.mxu0 0.0
    %1060 = vmatprep.subr.mxu0 0.0
    %1061 = vmatpush1.msra.mxu0 0.0
    %1062 = vmatprep.subr.mxu0 0.0
    %1063 = vmatpush1.msra.mxu0 0.0
    %1064 = vmatprep.subr.mxu0 0.0
    %1065 = vmatpush1.msra.mxu0 0.0
    %1066 = vmatprep.subr.mxu0 0.0
    %1067 = vmatpush1.msra.mxu0 0.0
    %1068 = vmatprep.subr.mxu0 0.0
    %1069 = vmatpush1.msra.mxu0 0.0
    %1070 = vmatprep.subr.mxu0 0.0
    %1071 = vmatpush1.msra.mxu0 0.0
    %1072 = vmatprep.subr.mxu0 0.0
    %1073 = vmatpush1.msra.mxu0 0.0
    %1074 = vmatprep.subr.mxu0 0.0
    %1075 = vmatpush1.msra.mxu0 0.0
    %1076 = vmatprep.subr.mxu0 0.0
    %1077 = vmatpush1.msra.mxu0 0.0
    %1078 = vmatprep.subr.mxu0 0.0
    %1079 = vmatpush1.msra.mxu0 0.0
    %1080 = vmatprep.subr.mxu0 0.0
    %1081 = vmatpush1.msra.mxu0 0.0
    %1082 = vmatprep.subr.mxu0 0.0
    %1083 = vmatpush1.msra.mxu0 0.0
    %1084 = vmatprep.subr.mxu0 0.0
    %1085 = vmatpush1.msra.mxu0 0.0
    %1086 = vmatprep.subr.mxu0 0.0
    %1087 = vmatpush1.msra.mxu0 0.0
    %1088 = vmatprep.subr.mxu0 0.0
    %1089 = vmatpush1.msra.mxu0 0.0
    %1090 = vmatprep.subr.mxu0 0.0
    %1091 = vmatpush1.msra.mxu0 0.0
    %1092 = vmatprep.subr.mxu0 0.0
    %1093 = vmatpush1.msra.mxu0 0.0
    %1094 = vmatprep.subr.mxu0 0.0
    %1095 = vmatpush1.msra.mxu0 0.0
    %1096 = vmatprep.subr.mxu0 0.0
    %1097 = vmatpush1.msra.mxu0 0.0
    %1098 = vmatprep.mubr.f32.mxu0 0.0
    %1099 = vmatmul.mubr.f32.gmra.mrb[0].mxu0 %v1032
    %v1100 = vpop.f32.mrb[0].mxu0
    %v1101 = vadd.f32 0.0, %v1100
    %v1102 = vpop.f32.mrb[0].mxu0
    %1103 = vdwg.mxu0
    %v1104 = vadd.f32 %v954, %v1101
    %1106 = vrot.lane.b32.xlu0 %v144, 96
    %v1107 = vpop.permute.xlu0 %1106
    %v1108 = vsel %vm150, %v144, 0
    %v1110 = vsel %vm150, %v1107, 0
    %1112 = vmatprep.subr.mxu0 0.0
    %1113 = vmatpush1.xpose.msra.mxu0 %v1110
    %1114 = vmatprep.subr.mxu0 0.0
    %1115 = vmatpush1.xpose.msra.mxu0 0.0
    %1116 = vmatprep.subr.mxu0 0.0
    %1117 = vmatpush1.xpose.msra.mxu0 0.0
    %1118 = vmatprep.subr.mxu0 0.0
    %1119 = vmatpush1.xpose.msra.mxu0 0.0
    %1120 = vmatprep.subr.mxu0 0.0
    %1121 = vmatpush1.xpose.msra.mxu0 0.0
    %1122 = vmatprep.subr.mxu0 0.0
    %1123 = vmatpush1.xpose.msra.mxu0 0.0
    %1124 = vmatprep.subr.mxu0 0.0
    %1125 = vmatpush1.xpose.msra.mxu0 0.0
    %1126 = vmatprep.subr.mxu0 0.0
    %1127 = vmatpush1.xpose.msra.mxu0 0.0
    %1128 = vmatprep.subr.mxu0 0.0
    %1129 = vmatpush1.xpose.msra.mxu0 0.0
    %1130 = vmatprep.subr.mxu0 0.0
    %1131 = vmatpush1.xpose.msra.mxu0 0.0
    %1132 = vmatprep.subr.mxu0 0.0
    %1133 = vmatpush1.xpose.msra.mxu0 0.0
    %1134 = vmatprep.subr.mxu0 0.0
    %1135 = vmatpush1.xpose.msra.mxu0 0.0
    %1136 = vmatprep.subr.mxu0 0.0
    %1137 = vmatpush1.xpose.msra.mxu0 0.0
    %1138 = vmatprep.subr.mxu0 0.0
    %1139 = vmatpush1.xpose.msra.mxu0 0.0
    %1140 = vmatprep.subr.mxu0 0.0
    %1141 = vmatpush1.xpose.msra.mxu0 0.0
    %1142 = vmatprep.subr.mxu0 0.0
    %1143 = vmatpush1.xpose.msra.mxu0 0.0
    %1144 = vmatprep.subr.mxu0 0.0
    %1145 = vmatpush1.xpose.msra.mxu0 0.0
    %1146 = vmatprep.subr.mxu0 0.0
    %1147 = vmatpush1.xpose.msra.mxu0 0.0
    %1148 = vmatprep.subr.mxu0 0.0
    %1149 = vmatpush1.xpose.msra.mxu0 0.0
    %1150 = vmatprep.subr.mxu0 0.0
    %1151 = vmatpush1.xpose.msra.mxu0 0.0
    %1152 = vmatprep.subr.mxu0 0.0
    %1153 = vmatpush1.xpose.msra.mxu0 0.0
    %1154 = vmatprep.subr.mxu0 0.0
    %1155 = vmatpush1.xpose.msra.mxu0 0.0
    %1156 = vmatprep.subr.mxu0 0.0
    %1157 = vmatpush1.xpose.msra.mxu0 0.0
    %1158 = vmatprep.subr.mxu0 0.0
    %1159 = vmatpush1.xpose.msra.mxu0 0.0
    %1160 = vmatprep.subr.mxu0 0.0
    %1161 = vmatpush1.xpose.msra.mxu0 0.0
    %1162 = vmatprep.subr.mxu0 0.0
    %1163 = vmatpush1.xpose.msra.mxu0 0.0
    %1164 = vmatprep.subr.mxu0 0.0
    %1165 = vmatpush1.xpose.msra.mxu0 0.0
    %1166 = vmatprep.subr.mxu0 0.0
    %1167 = vmatpush1.xpose.msra.mxu0 0.0
    %1168 = vmatprep.subr.mxu0 0.0
    %1169 = vmatpush1.xpose.msra.mxu0 0.0
    %1170 = vmatprep.subr.mxu0 0.0
    %1171 = vmatpush1.xpose.msra.mxu0 0.0
    %1172 = vmatprep.subr.mxu0 0.0
    %1173 = vmatpush1.xpose.msra.mxu0 0.0
    %1174 = vmatprep.subr.mxu0 0.0
    %1175 = vmatpush1.xpose.msra.mxu0 0.0
    %1176 = vmatprep.mubr.f32.mxu0 0.0
    %1177 = vmatmul.mubr.f32.gmra.mrb[0].mxu0 %v1108
    %v1178 = vpop.f32.mrb[0].mxu0
    %v1179 = vadd.f32 0.0, %v1178
    %v1180 = vpop.f32.mrb[0].mxu0
    %1181 = vdwg.mxu0
    %1182 = vrot.lane.b32.xlu0 %v144, 120
    %v1183 = vpop.permute.xlu0 %1182
    %1184 = vrot.lane.b32.xlu0 %v144, 88
    %v1185 = vpop.permute.xlu0 %1184
    %v1186 = vsel %vm150, %v1183, 0
    %v1188 = vsel %vm150, %v1185, 0
    %1190 = vmatprep.subr.mxu0 0.0
    %1191 = vmatpush1.xpose.msra.mxu0 %v1188
    %1192 = vmatprep.subr.mxu0 0.0
    %1193 = vmatpush1.xpose.msra.mxu0 0.0
    %1194 = vmatprep.subr.mxu0 0.0
    %1195 = vmatpush1.xpose.msra.mxu0 0.0
    %1196 = vmatprep.subr.mxu0 0.0
    %1197 = vmatpush1.xpose.msra.mxu0 0.0
    %1198 = vmatprep.subr.mxu0 0.0
    %1199 = vmatpush1.xpose.msra.mxu0 0.0
    %1200 = vmatprep.subr.mxu0 0.0
    %1201 = vmatpush1.xpose.msra.mxu0 0.0
    %1202 = vmatprep.subr.mxu0 0.0
    %1203 = vmatpush1.xpose.msra.mxu0 0.0
    %1204 = vmatprep.subr.mxu0 0.0
    %1205 = vmatpush1.xpose.msra.mxu0 0.0
    %1206 = vmatprep.subr.mxu0 0.0
    %1207 = vmatpush1.xpose.msra.mxu0 0.0
    %1208 = vmatprep.subr.mxu0 0.0
    %1209 = vmatpush1.xpose.msra.mxu0 0.0
    %1210 = vmatprep.subr.mxu0 0.0
    %1211 = vmatpush1.xpose.msra.mxu0 0.0
    %1212 = vmatprep.subr.mxu0 0.0
    %1213 = vmatpush1.xpose.msra.mxu0 0.0
    %1214 = vmatprep.subr.mxu0 0.0
    %1215 = vmatpush1.xpose.msra.mxu0 0.0
    %1216 = vmatprep.subr.mxu0 0.0
    %1217 = vmatpush1.xpose.msra.mxu0 0.0
    %1218 = vmatprep.subr.mxu0 0.0
    %1219 = vmatpush1.xpose.msra.mxu0 0.0
    %1220 = vmatprep.subr.mxu0 0.0
    %1221 = vmatpush1.xpose.msra.mxu0 0.0
    %1222 = vmatprep.subr.mxu0 0.0
    %1223 = vmatpush1.xpose.msra.mxu0 0.0
    %1224 = vmatprep.subr.mxu0 0.0
    %1225 = vmatpush1.xpose.msra.mxu0 0.0
    %1226 = vmatprep.subr.mxu0 0.0
    %1227 = vmatpush1.xpose.msra.mxu0 0.0
    %1228 = vmatprep.subr.mxu0 0.0
    %1229 = vmatpush1.xpose.msra.mxu0 0.0
    %1230 = vmatprep.subr.mxu0 0.0
    %1231 = vmatpush1.xpose.msra.mxu0 0.0
    %1232 = vmatprep.subr.mxu0 0.0
    %1233 = vmatpush1.xpose.msra.mxu0 0.0
    %1234 = vmatprep.subr.mxu0 0.0
    %1235 = vmatpush1.xpose.msra.mxu0 0.0
    %1236 = vmatprep.subr.mxu0 0.0
    %1237 = vmatpush1.xpose.msra.mxu0 0.0
    %1238 = vmatprep.subr.mxu0 0.0
    %1239 = vmatpush1.xpose.msra.mxu0 0.0
    %1240 = vmatprep.subr.mxu0 0.0
    %1241 = vmatpush1.xpose.msra.mxu0 0.0
    %1242 = vmatprep.subr.mxu0 0.0
    %1243 = vmatpush1.xpose.msra.mxu0 0.0
    %1244 = vmatprep.subr.mxu0 0.0
    %1245 = vmatpush1.xpose.msra.mxu0 0.0
    %1246 = vmatprep.subr.mxu0 0.0
    %1247 = vmatpush1.xpose.msra.mxu0 0.0
    %1248 = vmatprep.subr.mxu0 0.0
    %1249 = vmatpush1.xpose.msra.mxu0 0.0
    %1250 = vmatprep.subr.mxu0 0.0
    %1251 = vmatpush1.xpose.msra.mxu0 0.0
    %1252 = vmatprep.subr.mxu0 0.0
    %1253 = vmatpush1.xpose.msra.mxu0 0.0
    %1254 = vmatprep.mubr.f32.mxu0 0.0
    %1255 = vmatmul.mubr.f32.gmra.mrb[0].mxu0 %v1186
    %v1256 = vpop.f32.mrb[0].mxu0
    %v1257 = vadd.f32 0.0, %v1256
    %v1258 = vpop.f32.mrb[0].mxu0
    %1259 = vdwg.mxu0
    %1260 = vrot.lane.b32.xlu0 %v144, 112
    %v1261 = vpop.permute.xlu0 %1260
    %1262 = vrot.lane.b32.xlu0 %v144, 80
    %v1263 = vpop.permute.xlu0 %1262
    %v1264 = vsel %vm150, %v1261, 0
    %v1266 = vsel %vm150, %v1263, 0
    %1268 = vmatprep.subr.mxu0 0.0
    %1269 = vmatpush1.xpose.msra.mxu0 %v1266
    %1270 = vmatprep.subr.mxu0 0.0
    %1271 = vmatpush1.xpose.msra.mxu0 0.0
    %1272 = vmatprep.subr.mxu0 0.0
    %1273 = vmatpush1.xpose.msra.mxu0 0.0
    %1274 = vmatprep.subr.mxu0 0.0
    %1275 = vmatpush1.xpose.msra.mxu0 0.0
    %1276 = vmatprep.subr.mxu0 0.0
    %1277 = vmatpush1.xpose.msra.mxu0 0.0
    %1278 = vmatprep.subr.mxu0 0.0
    %1279 = vmatpush1.xpose.msra.mxu0 0.0
    %1280 = vmatprep.subr.mxu0 0.0
    %1281 = vmatpush1.xpose.msra.mxu0 0.0
    %1282 = vmatprep.subr.mxu0 0.0
    %1283 = vmatpush1.xpose.msra.mxu0 0.0
    %1284 = vmatprep.subr.mxu0 0.0
    %1285 = vmatpush1.xpose.msra.mxu0 0.0
    %1286 = vmatprep.subr.mxu0 0.0
    %1287 = vmatpush1.xpose.msra.mxu0 0.0
    %1288 = vmatprep.subr.mxu0 0.0
    %1289 = vmatpush1.xpose.msra.mxu0 0.0
    %1290 = vmatprep.subr.mxu0 0.0
    %1291 = vmatpush1.xpose.msra.mxu0 0.0
    %1292 = vmatprep.subr.mxu0 0.0
    %1293 = vmatpush1.xpose.msra.mxu0 0.0
    %1294 = vmatprep.subr.mxu0 0.0
    %1295 = vmatpush1.xpose.msra.mxu0 0.0
    %1296 = vmatprep.subr.mxu0 0.0
    %1297 = vmatpush1.xpose.msra.mxu0 0.0
    %1298 = vmatprep.subr.mxu0 0.0
    %1299 = vmatpush1.xpose.msra.mxu0 0.0
    %1300 = vmatprep.subr.mxu0 0.0
    %1301 = vmatpush1.xpose.msra.mxu0 0.0
    %1302 = vmatprep.subr.mxu0 0.0
    %1303 = vmatpush1.xpose.msra.mxu0 0.0
    %1304 = vmatprep.subr.mxu0 0.0
    %1305 = vmatpush1.xpose.msra.mxu0 0.0
    %1306 = vmatprep.subr.mxu0 0.0
    %1307 = vmatpush1.xpose.msra.mxu0 0.0
    %1308 = vmatprep.subr.mxu0 0.0
    %1309 = vmatpush1.xpose.msra.mxu0 0.0
    %1310 = vmatprep.subr.mxu0 0.0
    %1311 = vmatpush1.xpose.msra.mxu0 0.0
    %1312 = vmatprep.subr.mxu0 0.0
    %1313 = vmatpush1.xpose.msra.mxu0 0.0
    %1314 = vmatprep.subr.mxu0 0.0
    %1315 = vmatpush1.xpose.msra.mxu0 0.0
    %1316 = vmatprep.subr.mxu0 0.0
    %1317 = vmatpush1.xpose.msra.mxu0 0.0
    %1318 = vmatprep.subr.mxu0 0.0
    %1319 = vmatpush1.xpose.msra.mxu0 0.0
    %1320 = vmatprep.subr.mxu0 0.0
    %1321 = vmatpush1.xpose.msra.mxu0 0.0
    %1322 = vmatprep.subr.mxu0 0.0
    %1323 = vmatpush1.xpose.msra.mxu0 0.0
    %1324 = vmatprep.subr.mxu0 0.0
    %1325 = vmatpush1.xpose.msra.mxu0 0.0
    %1326 = vmatprep.subr.mxu0 0.0
    %1327 = vmatpush1.xpose.msra.mxu0 0.0
    %1328 = vmatprep.subr.mxu0 0.0
    %1329 = vmatpush1.xpose.msra.mxu0 0.0
    %1330 = vmatprep.subr.mxu0 0.0
    %1331 = vmatpush1.xpose.msra.mxu0 0.0
    %1332 = vmatprep.mubr.f32.mxu0 0.0
    %1333 = vmatmul.mubr.f32.gmra.mrb[0].mxu0 %v1264
    %v1334 = vpop.f32.mrb[0].mxu0
    %v1335 = vadd.f32 0.0, %v1334
    %v1336 = vpop.f32.mrb[0].mxu0
    %1337 = vdwg.mxu0
    %1338 = vrot.lane.b32.xlu0 %v144, 104
    %v1339 = vpop.permute.xlu0 %1338
    %1340 = vrot.lane.b32.xlu0 %v144, 72
    %v1341 = vpop.permute.xlu0 %1340
    %v1342 = vsel %vm150, %v1339, 0
    %v1344 = vsel %vm150, %v1341, 0
    %1346 = vmatprep.subr.mxu0 0.0
    %1347 = vmatpush1.xpose.msra.mxu0 %v1344
    %1348 = vmatprep.subr.mxu0 0.0
    %1349 = vmatpush1.xpose.msra.mxu0 0.0
    %1350 = vmatprep.subr.mxu0 0.0
    %1351 = vmatpush1.xpose.msra.mxu0 0.0
    %1352 = vmatprep.subr.mxu0 0.0
    %1353 = vmatpush1.xpose.msra.mxu0 0.0
    %1354 = vmatprep.subr.mxu0 0.0
    %1355 = vmatpush1.xpose.msra.mxu0 0.0
    %1356 = vmatprep.subr.mxu0 0.0
    %1357 = vmatpush1.xpose.msra.mxu0 0.0
    %1358 = vmatprep.subr.mxu0 0.0
    %1359 = vmatpush1.xpose.msra.mxu0 0.0
    %1360 = vmatprep.subr.mxu0 0.0
    %1361 = vmatpush1.xpose.msra.mxu0 0.0
    %1362 = vmatprep.subr.mxu0 0.0
    %1363 = vmatpush1.xpose.msra.mxu0 0.0
    %1364 = vmatprep.subr.mxu0 0.0
    %1365 = vmatpush1.xpose.msra.mxu0 0.0
    %1366 = vmatprep.subr.mxu0 0.0
    %1367 = vmatpush1.xpose.msra.mxu0 0.0
    %1368 = vmatprep.subr.mxu0 0.0
    %1369 = vmatpush1.xpose.msra.mxu0 0.0
    %1370 = vmatprep.subr.mxu0 0.0
    %1371 = vmatpush1.xpose.msra.mxu0 0.0
    %1372 = vmatprep.subr.mxu0 0.0
    %1373 = vmatpush1.xpose.msra.mxu0 0.0
    %1374 = vmatprep.subr.mxu0 0.0
    %1375 = vmatpush1.xpose.msra.mxu0 0.0
    %1376 = vmatprep.subr.mxu0 0.0
    %1377 = vmatpush1.xpose.msra.mxu0 0.0
    %1378 = vmatprep.subr.mxu0 0.0
    %1379 = vmatpush1.xpose.msra.mxu0 0.0
    %1380 = vmatprep.subr.mxu0 0.0
    %1381 = vmatpush1.xpose.msra.mxu0 0.0
    %1382 = vmatprep.subr.mxu0 0.0
    %1383 = vmatpush1.xpose.msra.mxu0 0.0
    %1384 = vmatprep.subr.mxu0 0.0
    %1385 = vmatpush1.xpose.msra.mxu0 0.0
    %1386 = vmatprep.subr.mxu0 0.0
    %1387 = vmatpush1.xpose.msra.mxu0 0.0
    %1388 = vmatprep.subr.mxu0 0.0
    %1389 = vmatpush1.xpose.msra.mxu0 0.0
    %1390 = vmatprep.subr.mxu0 0.0
    %1391 = vmatpush1.xpose.msra.mxu0 0.0
    %1392 = vmatprep.subr.mxu0 0.0
    %1393 = vmatpush1.xpose.msra.mxu0 0.0
    %1394 = vmatprep.subr.mxu0 0.0
    %1395 = vmatpush1.xpose.msra.mxu0 0.0
    %1396 = vmatprep.subr.mxu0 0.0
    %1397 = vmatpush1.xpose.msra.mxu0 0.0
    %1398 = vmatprep.subr.mxu0 0.0
    %1399 = vmatpush1.xpose.msra.mxu0 0.0
    %1400 = vmatprep.subr.mxu0 0.0
    %1401 = vmatpush1.xpose.msra.mxu0 0.0
    %1402 = vmatprep.subr.mxu0 0.0
    %1403 = vmatpush1.xpose.msra.mxu0 0.0
    %1404 = vmatprep.subr.mxu0 0.0
    %1405 = vmatpush1.xpose.msra.mxu0 0.0
    %1406 = vmatprep.subr.mxu0 0.0
    %1407 = vmatpush1.xpose.msra.mxu0 0.0
    %1408 = vmatprep.subr.mxu0 0.0
    %1409 = vmatpush1.xpose.msra.mxu0 0.0
    %1410 = vmatprep.mubr.f32.mxu0 0.0
    %1411 = vmatmul.mubr.f32.gmra.mrb[0].mxu0 %v1342
    %v1412 = vpop.f32.mrb[0].mxu0
    %v1413 = vadd.f32 0.0, %v1412
    %v1414 = vpop.f32.mrb[0].mxu0
    %1415 = vdwg.mxu0
    %v1416 = vadd.f32 %v1179, %v51
    %v1417 = vadd.f32 %v1257, %v51
    %v1418 = vadd.f32 %v1335, %v51
    %v1419 = vadd.f32 %v1413, %v51
    %v1420 = vsel %vm150, %v1416, -inf
    %1421 = vmax.xlane.f32.xlu0 %v1420
    %v1422 = vpop.xlane.xlu0 %1421
    %v1423 = vsel %vm150, %v1417, -inf
    %1424 = vmax.xlane.f32.xlu0 %v1423
    %v1425 = vpop.xlane.xlu0 %1424
    %v1426 = vsel %vm150, %v1418, -inf
    %1427 = vmax.xlane.f32.xlu0 %v1426
    %v1428 = vpop.xlane.xlu0 %1427
    %v1429 = vsel %vm150, %v1419, -inf
    %1430 = vmax.xlane.f32.xlu0 %v1429
    %v1431 = vpop.xlane.xlu0 %1430
    %v1432 = vsub.f32 %v1416, %v1422
    %v1433 = vsub.f32 %v1417, %v1425
    %v1434 = vsub.f32 %v1418, %v1428
    %v1435 = vsub.f32 %v1419, %v1431
    %v1436 = vmul.f32 %v1432, 1.442695
    %v1437 = vpow.pop %v1436
    %v1438 = vmul.f32 %v1433, 1.442695
    %v1439 = vpow.pop %v1438
    %v1440 = vmul.f32 %v1434, 1.442695
    %v1441 = vpow.pop %v1440
    %v1442 = vmul.f32 %v1435, 1.442695
    %v1443 = vpow.pop %v1442
    %v1444 = vsel %vm150, %v1437, 0.0
    %1445 = vadd.xlane.f32.xlu0 %v1444
    %v1446 = vpop.xlane.xlu0 %1445
    %v1447 = vsel %vm150, %v1439, 0.0
    %1448 = vadd.xlane.f32.xlu0 %v1447
    %v1449 = vpop.xlane.xlu0 %1448
    %v1450 = vsel %vm150, %v1441, 0.0
    %1451 = vadd.xlane.f32.xlu0 %v1450
    %v1452 = vpop.xlane.xlu0 %1451
    %v1453 = vsel %vm150, %v1443, 0.0
    %1454 = vadd.xlane.f32.xlu0 %v1453
    %v1455 = vpop.xlane.xlu0 %1454
    %v1456 = vrcp.pop %v1446
    %v1457 = vmul.f32 %v1437, %v1456
    %v1458 = vrcp.pop %v1449
    %v1459 = vmul.f32 %v1439, %v1458
    %v1460 = vrcp.pop %v1452
    %v1461 = vmul.f32 %v1441, %v1460
    %v1462 = vrcp.pop %v1455
    %v1463 = vmul.f32 %v1443, %v1462
    %1464 = vrot.lane.b32.xlu0 %v144, 64
    %v1465 = vpop.permute.xlu0 %1464
    %v1468 = vsel %vm150, %v1457, 0
    %1470 = vmatprep.subr.mxu0 0.0
    %1471 = vmatpush1.msra.mxu0 %v1465
    %1472 = vmatprep.subr.mxu0 0.0
    %1473 = vmatpush1.msra.mxu0 0.0
    %1474 = vmatprep.subr.mxu0 0.0
    %1475 = vmatpush1.msra.mxu0 0.0
    %1476 = vmatprep.subr.mxu0 0.0
    %1477 = vmatpush1.msra.mxu0 0.0
    %1478 = vmatprep.subr.mxu0 0.0
    %1479 = vmatpush1.msra.mxu0 0.0
    %1480 = vmatprep.subr.mxu0 0.0
    %1481 = vmatpush1.msra.mxu0 0.0
    %1482 = vmatprep.subr.mxu0 0.0
    %1483 = vmatpush1.msra.mxu0 0.0
    %1484 = vmatprep.subr.mxu0 0.0
    %1485 = vmatpush1.msra.mxu0 0.0
    %1486 = vmatprep.subr.mxu0 0.0
    %1487 = vmatpush1.msra.mxu0 0.0
    %1488 = vmatprep.subr.mxu0 0.0
    %1489 = vmatpush1.msra.mxu0 0.0
    %1490 = vmatprep.subr.mxu0 0.0
    %1491 = vmatpush1.msra.mxu0 0.0
    %1492 = vmatprep.subr.mxu0 0.0
    %1493 = vmatpush1.msra.mxu0 0.0
    %1494 = vmatprep.subr.mxu0 0.0
    %1495 = vmatpush1.msra.mxu0 0.0
    %1496 = vmatprep.subr.mxu0 0.0
    %1497 = vmatpush1.msra.mxu0 0.0
    %1498 = vmatprep.subr.mxu0 0.0
    %1499 = vmatpush1.msra.mxu0 0.0
    %1500 = vmatprep.subr.mxu0 0.0
    %1501 = vmatpush1.msra.mxu0 0.0
    %1502 = vmatprep.subr.mxu0 0.0
    %1503 = vmatpush1.msra.mxu0 0.0
    %1504 = vmatprep.subr.mxu0 0.0
    %1505 = vmatpush1.msra.mxu0 0.0
    %1506 = vmatprep.subr.mxu0 0.0
    %1507 = vmatpush1.msra.mxu0 0.0
    %1508 = vmatprep.subr.mxu0 0.0
    %1509 = vmatpush1.msra.mxu0 0.0
    %1510 = vmatprep.subr.mxu0 0.0
    %1511 = vmatpush1.msra.mxu0 0.0
    %1512 = vmatprep.subr.mxu0 0.0
    %1513 = vmatpush1.msra.mxu0 0.0
    %1514 = vmatprep.subr.mxu0 0.0
    %1515 = vmatpush1.msra.mxu0 0.0
    %1516 = vmatprep.subr.mxu0 0.0
    %1517 = vmatpush1.msra.mxu0 0.0
    %1518 = vmatprep.subr.mxu0 0.0
    %1519 = vmatpush1.msra.mxu0 0.0
    %1520 = vmatprep.subr.mxu0 0.0
    %1521 = vmatpush1.msra.mxu0 0.0
    %1522 = vmatprep.subr.mxu0 0.0
    %1523 = vmatpush1.msra.mxu0 0.0
    %1524 = vmatprep.subr.mxu0 0.0
    %1525 = vmatpush1.msra.mxu0 0.0
    %1526 = vmatprep.subr.mxu0 0.0
    %1527 = vmatpush1.msra.mxu0 0.0
    %1528 = vmatprep.subr.mxu0 0.0
    %1529 = vmatpush1.msra.mxu0 0.0
    %1530 = vmatprep.subr.mxu0 0.0
    %1531 = vmatpush1.msra.mxu0 0.0
    %1532 = vmatprep.subr.mxu0 0.0
    %1533 = vmatpush1.msra.mxu0 0.0
    %1534 = vmatprep.mubr.f32.mxu0 0.0
    %1535 = vmatmul.mubr.f32.gmra.mrb[0].mxu0 %v1468
    %v1536 = vpop.f32.mrb[0].mxu0
    %v1537 = vadd.f32 0.0, %v1536
    %v1538 = vpop.f32.mrb[0].mxu0
    %1539 = vdwg.mxu0
    %1540 = vrot.lane.b32.xlu0 %v144, 56
    %v1541 = vpop.permute.xlu0 %1540
    %v1544 = vsel %vm150, %v1459, 0
    %1546 = vmatprep.subr.mxu0 0.0
    %1547 = vmatpush1.msra.mxu0 %v1541
    %1548 = vmatprep.subr.mxu0 0.0
    %1549 = vmatpush1.msra.mxu0 0.0
    %1550 = vmatprep.subr.mxu0 0.0
    %1551 = vmatpush1.msra.mxu0 0.0
    %1552 = vmatprep.subr.mxu0 0.0
    %1553 = vmatpush1.msra.mxu0 0.0
    %1554 = vmatprep.subr.mxu0 0.0
    %1555 = vmatpush1.msra.mxu0 0.0
    %1556 = vmatprep.subr.mxu0 0.0
    %1557 = vmatpush1.msra.mxu0 0.0
    %1558 = vmatprep.subr.mxu0 0.0
    %1559 = vmatpush1.msra.mxu0 0.0
    %1560 = vmatprep.subr.mxu0 0.0
    %1561 = vmatpush1.msra.mxu0 0.0
    %1562 = vmatprep.subr.mxu0 0.0
    %1563 = vmatpush1.msra.mxu0 0.0
    %1564 = vmatprep.subr.mxu0 0.0
    %1565 = vmatpush1.msra.mxu0 0.0
    %1566 = vmatprep.subr.mxu0 0.0
    %1567 = vmatpush1.msra.mxu0 0.0
    %1568 = vmatprep.subr.mxu0 0.0
    %1569 = vmatpush1.msra.mxu0 0.0
    %1570 = vmatprep.subr.mxu0 0.0
    %1571 = vmatpush1.msra.mxu0 0.0
    %1572 = vmatprep.subr.mxu0 0.0
    %1573 = vmatpush1.msra.mxu0 0.0
    %1574 = vmatprep.subr.mxu0 0.0
    %1575 = vmatpush1.msra.mxu0 0.0
    %1576 = vmatprep.subr.mxu0 0.0
    %1577 = vmatpush1.msra.mxu0 0.0
    %1578 = vmatprep.subr.mxu0 0.0
    %1579 = vmatpush1.msra.mxu0 0.0
    %1580 = vmatprep.subr.mxu0 0.0
    %1581 = vmatpush1.msra.mxu0 0.0
    %1582 = vmatprep.subr.mxu0 0.0
    %1583 = vmatpush1.msra.mxu0 0.0
    %1584 = vmatprep.subr.mxu0 0.0
    %1585 = vmatpush1.msra.mxu0 0.0
    %1586 = vmatprep.subr.mxu0 0.0
    %1587 = vmatpush1.msra.mxu0 0.0
    %1588 = vmatprep.subr.mxu0 0.0
    %1589 = vmatpush1.msra.mxu0 0.0
    %1590 = vmatprep.subr.mxu0 0.0
    %1591 = vmatpush1.msra.mxu0 0.0
    %1592 = vmatprep.subr.mxu0 0.0
    %1593 = vmatpush1.msra.mxu0 0.0
    %1594 = vmatprep.subr.mxu0 0.0
    %1595 = vmatpush1.msra.mxu0 0.0
    %1596 = vmatprep.subr.mxu0 0.0
    %1597 = vmatpush1.msra.mxu0 0.0
    %1598 = vmatprep.subr.mxu0 0.0
    %1599 = vmatpush1.msra.mxu0 0.0
    %1600 = vmatprep.subr.mxu0 0.0
    %1601 = vmatpush1.msra.mxu0 0.0
    %1602 = vmatprep.subr.mxu0 0.0
    %1603 = vmatpush1.msra.mxu0 0.0
    %1604 = vmatprep.subr.mxu0 0.0
    %1605 = vmatpush1.msra.mxu0 0.0
    %1606 = vmatprep.subr.mxu0 0.0
    %1607 = vmatpush1.msra.mxu0 0.0
    %1608 = vmatprep.subr.mxu0 0.0
    %1609 = vmatpush1.msra.mxu0 0.0
    %1610 = vmatprep.mubr.f32.mxu0 0.0
    %1611 = vmatmul.mubr.f32.gmra.mrb[0].mxu0 %v1544
    %v1612 = vpop.f32.mrb[0].mxu0
    %v1613 = vadd.f32 0.0, %v1612
    %v1614 = vpop.f32.mrb[0].mxu0
    %1615 = vdwg.mxu0
    %v1617 = vsel %vm150, %v1613, 0
    %1619 = vmatprep.subr.mxu0 0.0
    %1620 = vmatpush1.msra.mxu0 %v54
    %1621 = vmatprep.subr.mxu0 0.0
    %1622 = vmatpush1.msra.mxu0 0.0
    %1623 = vmatprep.subr.mxu0 0.0
    %1624 = vmatpush1.msra.mxu0 0.0
    %1625 = vmatprep.subr.mxu0 0.0
    %1626 = vmatpush1.msra.mxu0 0.0
    %1627 = vmatprep.subr.mxu0 0.0
    %1628 = vmatpush1.msra.mxu0 0.0
    %1629 = vmatprep.subr.mxu0 0.0
    %1630 = vmatpush1.msra.mxu0 0.0
    %1631 = vmatprep.subr.mxu0 0.0
    %1632 = vmatpush1.msra.mxu0 0.0
    %1633 = vmatprep.subr.mxu0 0.0
    %1634 = vmatpush1.msra.mxu0 0.0
    %1635 = vmatprep.subr.mxu0 0.0
    %1636 = vmatpush1.msra.mxu0 0.0
    %1637 = vmatprep.subr.mxu0 0.0
    %1638 = vmatpush1.msra.mxu0 0.0
    %1639 = vmatprep.subr.mxu0 0.0
    %1640 = vmatpush1.msra.mxu0 0.0
    %1641 = vmatprep.subr.mxu0 0.0
    %1642 = vmatpush1.msra.mxu0 0.0
    %1643 = vmatprep.subr.mxu0 0.0
    %1644 = vmatpush1.msra.mxu0 0.0
    %1645 = vmatprep.subr.mxu0 0.0
    %1646 = vmatpush1.msra.mxu0 0.0
    %1647 = vmatprep.subr.mxu0 0.0
    %1648 = vmatpush1.msra.mxu0 0.0
    %1649 = vmatprep.subr.mxu0 0.0
    %1650 = vmatpush1.msra.mxu0 0.0
    %1651 = vmatprep.subr.mxu0 0.0
    %1652 = vmatpush1.msra.mxu0 0.0
    %1653 = vmatprep.subr.mxu0 0.0
    %1654 = vmatpush1.msra.mxu0 0.0
    %1655 = vmatprep.subr.mxu0 0.0
    %1656 = vmatpush1.msra.mxu0 0.0
    %1657 = vmatprep.subr.mxu0 0.0
    %1658 = vmatpush1.msra.mxu0 0.0
    %1659 = vmatprep.subr.mxu0 0.0
    %1660 = vmatpush1.msra.mxu0 0.0
    %1661 = vmatprep.subr.mxu0 0.0
    %1662 = vmatpush1.msra.mxu0 0.0
    %1663 = vmatprep.subr.mxu0 0.0
    %1664 = vmatpush1.msra.mxu0 0.0
    %1665 = vmatprep.subr.mxu0 0.0
    %1666 = vmatpush1.msra.mxu0 0.0
    %1667 = vmatprep.subr.mxu0 0.0
    %1668 = vmatpush1.msra.mxu0 0.0
    %1669 = vmatprep.subr.mxu0 0.0
    %1670 = vmatpush1.msra.mxu0 0.0
    %1671 = vmatprep.subr.mxu0 0.0
    %1672 = vmatpush1.msra.mxu0 0.0
    %1673 = vmatprep.subr.mxu0 0.0
    %1674 = vmatpush1.msra.mxu0 0.0
    %1675 = vmatprep.subr.mxu0 0.0
    %1676 = vmatpush1.msra.mxu0 0.0
    %1677 = vmatprep.subr.mxu0 0.0
    %1678 = vmatpush1.msra.mxu0 0.0
    %1679 = vmatprep.subr.mxu0 0.0
    %1680 = vmatpush1.msra.mxu0 0.0
    %1681 = vmatprep.subr.mxu0 0.0
    %1682 = vmatpush1.msra.mxu0 0.0
    %1683 = vmatprep.mubr.f32.mxu0 0.0
    %1684 = vmatmul.mubr.f32.gmra.mrb[0].mxu0 %v1617
    %v1685 = vpop.f32.mrb[0].mxu0
    %v1686 = vadd.f32 0.0, %v1685
    %v1687 = vpop.f32.mrb[0].mxu0
    %1688 = vdwg.mxu0
    %v1690 = vsel %vm150, %v1537, 0
    %1692 = vmatprep.subr.mxu0 0.0
    %1693 = vmatpush1.msra.mxu0 %v53
    %1694 = vmatprep.subr.mxu0 0.0
    %1695 = vmatpush1.msra.mxu0 0.0
    %1696 = vmatprep.subr.mxu0 0.0
    %1697 = vmatpush1.msra.mxu0 0.0
    %1698 = vmatprep.subr.mxu0 0.0
    %1699 = vmatpush1.msra.mxu0 0.0
    %1700 = vmatprep.subr.mxu0 0.0
    %1701 = vmatpush1.msra.mxu0 0.0
    %1702 = vmatprep.subr.mxu0 0.0
    %1703 = vmatpush1.msra.mxu0 0.0
    %1704 = vmatprep.subr.mxu0 0.0
    %1705 = vmatpush1.msra.mxu0 0.0
    %1706 = vmatprep.subr.mxu0 0.0
    %1707 = vmatpush1.msra.mxu0 0.0
    %1708 = vmatprep.subr.mxu0 0.0
    %1709 = vmatpush1.msra.mxu0 0.0
    %1710 = vmatprep.subr.mxu0 0.0
    %1711 = vmatpush1.msra.mxu0 0.0
    %1712 = vmatprep.subr.mxu0 0.0
    %1713 = vmatpush1.msra.mxu0 0.0
    %1714 = vmatprep.subr.mxu0 0.0
    %1715 = vmatpush1.msra.mxu0 0.0
    %1716 = vmatprep.subr.mxu0 0.0
    %1717 = vmatpush1.msra.mxu0 0.0
    %1718 = vmatprep.subr.mxu0 0.0
    %1719 = vmatpush1.msra.mxu0 0.0
    %1720 = vmatprep.subr.mxu0 0.0
    %1721 = vmatpush1.msra.mxu0 0.0
    %1722 = vmatprep.subr.mxu0 0.0
    %1723 = vmatpush1.msra.mxu0 0.0
    %1724 = vmatprep.subr.mxu0 0.0
    %1725 = vmatpush1.msra.mxu0 0.0
    %1726 = vmatprep.subr.mxu0 0.0
    %1727 = vmatpush1.msra.mxu0 0.0
    %1728 = vmatprep.subr.mxu0 0.0
    %1729 = vmatpush1.msra.mxu0 0.0
    %1730 = vmatprep.subr.mxu0 0.0
    %1731 = vmatpush1.msra.mxu0 0.0
    %1732 = vmatprep.subr.mxu0 0.0
    %1733 = vmatpush1.msra.mxu0 0.0
    %1734 = vmatprep.subr.mxu0 0.0
    %1735 = vmatpush1.msra.mxu0 0.0
    %1736 = vmatprep.subr.mxu0 0.0
    %1737 = vmatpush1.msra.mxu0 0.0
    %1738 = vmatprep.subr.mxu0 0.0
    %1739 = vmatpush1.msra.mxu0 0.0
    %1740 = vmatprep.subr.mxu0 0.0
    %1741 = vmatpush1.msra.mxu0 0.0
    %1742 = vmatprep.subr.mxu0 0.0
    %1743 = vmatpush1.msra.mxu0 0.0
    %1744 = vmatprep.subr.mxu0 0.0
    %1745 = vmatpush1.msra.mxu0 0.0
    %1746 = vmatprep.subr.mxu0 0.0
    %1747 = vmatpush1.msra.mxu0 0.0
    %1748 = vmatprep.subr.mxu0 0.0
    %1749 = vmatpush1.msra.mxu0 0.0
    %1750 = vmatprep.subr.mxu0 0.0
    %1751 = vmatpush1.msra.mxu0 0.0
    %1752 = vmatprep.subr.mxu0 0.0
    %1753 = vmatpush1.msra.mxu0 0.0
    %1754 = vmatprep.subr.mxu0 0.0
    %1755 = vmatpush1.msra.mxu0 0.0
    %1756 = vmatprep.mubr.f32.mxu0 0.0
    %1757 = vmatmul.mubr.f32.gmra.mrb[0].mxu0 %v1690
    %v1758 = vpop.f32.mrb[0].mxu0
    %v1759 = vadd.f32 %v1686, %v1758
    %v1760 = vpop.f32.mrb[0].mxu0
    %1761 = vdwg.mxu0
    %1762 = vrot.lane.b32.xlu0 %v144, 48
    %v1763 = vpop.permute.xlu0 %1762
    %v1766 = vsel %vm150, %v1461, 0
    %1768 = vmatprep.subr.mxu0 0.0
    %1769 = vmatpush1.msra.mxu0 %v1763
    %1770 = vmatprep.subr.mxu0 0.0
    %1771 = vmatpush1.msra.mxu0 0.0
    %1772 = vmatprep.subr.mxu0 0.0
    %1773 = vmatpush1.msra.mxu0 0.0
    %1774 = vmatprep.subr.mxu0 0.0
    %1775 = vmatpush1.msra.mxu0 0.0
    %1776 = vmatprep.subr.mxu0 0.0
    %1777 = vmatpush1.msra.mxu0 0.0
    %1778 = vmatprep.subr.mxu0 0.0
    %1779 = vmatpush1.msra.mxu0 0.0
    %1780 = vmatprep.subr.mxu0 0.0
    %1781 = vmatpush1.msra.mxu0 0.0
    %1782 = vmatprep.subr.mxu0 0.0
    %1783 = vmatpush1.msra.mxu0 0.0
    %1784 = vmatprep.subr.mxu0 0.0
    %1785 = vmatpush1.msra.mxu0 0.0
    %1786 = vmatprep.subr.mxu0 0.0
    %1787 = vmatpush1.msra.mxu0 0.0
    %1788 = vmatprep.subr.mxu0 0.0
    %1789 = vmatpush1.msra.mxu0 0.0
    %1790 = vmatprep.subr.mxu0 0.0
    %1791 = vmatpush1.msra.mxu0 0.0
    %1792 = vmatprep.subr.mxu0 0.0
    %1793 = vmatpush1.msra.mxu0 0.0
    %1794 = vmatprep.subr.mxu0 0.0
    %1795 = vmatpush1.msra.mxu0 0.0
    %1796 = vmatprep.subr.mxu0 0.0
    %1797 = vmatpush1.msra.mxu0 0.0
    %1798 = vmatprep.subr.mxu0 0.0
    %1799 = vmatpush1.msra.mxu0 0.0
    %1800 = vmatprep.subr.mxu0 0.0
    %1801 = vmatpush1.msra.mxu0 0.0
    %1802 = vmatprep.subr.mxu0 0.0
    %1803 = vmatpush1.msra.mxu0 0.0
    %1804 = vmatprep.subr.mxu0 0.0
    %1805 = vmatpush1.msra.mxu0 0.0
    %1806 = vmatprep.subr.mxu0 0.0
    %1807 = vmatpush1.msra.mxu0 0.0
    %1808 = vmatprep.subr.mxu0 0.0
    %1809 = vmatpush1.msra.mxu0 0.0
    %1810 = vmatprep.subr.mxu0 0.0
    %1811 = vmatpush1.msra.mxu0 0.0
    %1812 = vmatprep.subr.mxu0 0.0
    %1813 = vmatpush1.msra.mxu0 0.0
    %1814 = vmatprep.subr.mxu0 0.0
    %1815 = vmatpush1.msra.mxu0 0.0
    %1816 = vmatprep.subr.mxu0 0.0
    %1817 = vmatpush1.msra.mxu0 0.0
    %1818 = vmatprep.subr.mxu0 0.0
    %1819 = vmatpush1.msra.mxu0 0.0
    %1820 = vmatprep.subr.mxu0 0.0
    %1821 = vmatpush1.msra.mxu0 0.0
    %1822 = vmatprep.subr.mxu0 0.0
    %1823 = vmatpush1.msra.mxu0 0.0
    %1824 = vmatprep.subr.mxu0 0.0
    %1825 = vmatpush1.msra.mxu0 0.0
    %1826 = vmatprep.subr.mxu0 0.0
    %1827 = vmatpush1.msra.mxu0 0.0
    %1828 = vmatprep.subr.mxu0 0.0
    %1829 = vmatpush1.msra.mxu0 0.0
    %1830 = vmatprep.subr.mxu0 0.0
    %1831 = vmatpush1.msra.mxu0 0.0
    %1832 = vmatprep.mubr.f32.mxu0 0.0
    %1833 = vmatmul.mubr.f32.gmra.mrb[0].mxu0 %v1766
    %v1834 = vpop.f32.mrb[0].mxu0
    %v1835 = vadd.f32 0.0, %v1834
    %v1836 = vpop.f32.mrb[0].mxu0
    %1837 = vdwg.mxu0
    %v1839 = vsel %vm150, %v1835, 0
    %1841 = vmatprep.subr.mxu0 0.0
    %1842 = vmatpush1.msra.mxu0 %v55
    %1843 = vmatprep.subr.mxu0 0.0
    %1844 = vmatpush1.msra.mxu0 0.0
    %1845 = vmatprep.subr.mxu0 0.0
    %1846 = vmatpush1.msra.mxu0 0.0
    %1847 = vmatprep.subr.mxu0 0.0
    %1848 = vmatpush1.msra.mxu0 0.0
    %1849 = vmatprep.subr.mxu0 0.0
    %1850 = vmatpush1.msra.mxu0 0.0
    %1851 = vmatprep.subr.mxu0 0.0
    %1852 = vmatpush1.msra.mxu0 0.0
    %1853 = vmatprep.subr.mxu0 0.0
    %1854 = vmatpush1.msra.mxu0 0.0
    %1855 = vmatprep.subr.mxu0 0.0
    %1856 = vmatpush1.msra.mxu0 0.0
    %1857 = vmatprep.subr.mxu0 0.0
    %1858 = vmatpush1.msra.mxu0 0.0
    %1859 = vmatprep.subr.mxu0 0.0
    %1860 = vmatpush1.msra.mxu0 0.0
    %1861 = vmatprep.subr.mxu0 0.0
    %1862 = vmatpush1.msra.mxu0 0.0
    %1863 = vmatprep.subr.mxu0 0.0
    %1864 = vmatpush1.msra.mxu0 0.0
    %1865 = vmatprep.subr.mxu0 0.0
    %1866 = vmatpush1.msra.mxu0 0.0
    %1867 = vmatprep.subr.mxu0 0.0
    %1868 = vmatpush1.msra.mxu0 0.0
    %1869 = vmatprep.subr.mxu0 0.0
    %1870 = vmatpush1.msra.mxu0 0.0
    %1871 = vmatprep.subr.mxu0 0.0
    %1872 = vmatpush1.msra.mxu0 0.0
    %1873 = vmatprep.subr.mxu0 0.0
    %1874 = vmatpush1.msra.mxu0 0.0
    %1875 = vmatprep.subr.mxu0 0.0
    %1876 = vmatpush1.msra.mxu0 0.0
    %1877 = vmatprep.subr.mxu0 0.0
    %1878 = vmatpush1.msra.mxu0 0.0
    %1879 = vmatprep.subr.mxu0 0.0
    %1880 = vmatpush1.msra.mxu0 0.0
    %1881 = vmatprep.subr.mxu0 0.0
    %1882 = vmatpush1.msra.mxu0 0.0
    %1883 = vmatprep.subr.mxu0 0.0
    %1884 = vmatpush1.msra.mxu0 0.0
    %1885 = vmatprep.subr.mxu0 0.0
    %1886 = vmatpush1.msra.mxu0 0.0
    %1887 = vmatprep.subr.mxu0 0.0
    %1888 = vmatpush1.msra.mxu0 0.0
    %1889 = vmatprep.subr.mxu0 0.0
    %1890 = vmatpush1.msra.mxu0 0.0
    %1891 = vmatprep.subr.mxu0 0.0
    %1892 = vmatpush1.msra.mxu0 0.0
    %1893 = vmatprep.subr.mxu0 0.0
    %1894 = vmatpush1.msra.mxu0 0.0
    %1895 = vmatprep.subr.mxu0 0.0
    %1896 = vmatpush1.msra.mxu0 0.0
    %1897 = vmatprep.subr.mxu0 0.0
    %1898 = vmatpush1.msra.mxu0 0.0
    %1899 = vmatprep.subr.mxu0 0.0
    %1900 = vmatpush1.msra.mxu0 0.0
    %1901 = vmatprep.subr.mxu0 0.0
    %1902 = vmatpush1.msra.mxu0 0.0
    %1903 = vmatprep.subr.mxu0 0.0
    %1904 = vmatpush1.msra.mxu0 0.0
    %1905 = vmatprep.mubr.f32.mxu0 0.0
    %1906 = vmatmul.mubr.f32.gmra.mrb[0].mxu0 %v1839
    %v1907 = vpop.f32.mrb[0].mxu0
    %v1908 = vadd.f32 0.0, %v1907
    %v1909 = vpop.f32.mrb[0].mxu0
    %1910 = vdwg.mxu0
    %v1911 = vadd.f32 %v1759, %v1908
    %1912 = vrot.lane.b32.xlu0 %v144, 40
    %v1913 = vpop.permute.xlu0 %1912
    %v1916 = vsel %vm150, %v1463, 0
    %1918 = vmatprep.subr.mxu0 0.0
    %1919 = vmatpush1.msra.mxu0 %v1913
    %1920 = vmatprep.subr.mxu0 0.0
    %1921 = vmatpush1.msra.mxu0 0.0
    %1922 = vmatprep.subr.mxu0 0.0
    %1923 = vmatpush1.msra.mxu0 0.0
    %1924 = vmatprep.subr.mxu0 0.0
    %1925 = vmatpush1.msra.mxu0 0.0
    %1926 = vmatprep.subr.mxu0 0.0
    %1927 = vmatpush1.msra.mxu0 0.0
    %1928 = vmatprep.subr.mxu0 0.0
    %1929 = vmatpush1.msra.mxu0 0.0
    %1930 = vmatprep.subr.mxu0 0.0
    %1931 = vmatpush1.msra.mxu0 0.0
    %1932 = vmatprep.subr.mxu0 0.0
    %1933 = vmatpush1.msra.mxu0 0.0
    %1934 = vmatprep.subr.mxu0 0.0
    %1935 = vmatpush1.msra.mxu0 0.0
    %1936 = vmatprep.subr.mxu0 0.0
    %1937 = vmatpush1.msra.mxu0 0.0
    %1938 = vmatprep.subr.mxu0 0.0
    %1939 = vmatpush1.msra.mxu0 0.0
    %1940 = vmatprep.subr.mxu0 0.0
    %1941 = vmatpush1.msra.mxu0 0.0
    %1942 = vmatprep.subr.mxu0 0.0
    %1943 = vmatpush1.msra.mxu0 0.0
    %1944 = vmatprep.subr.mxu0 0.0
    %1945 = vmatpush1.msra.mxu0 0.0
    %1946 = vmatprep.subr.mxu0 0.0
    %1947 = vmatpush1.msra.mxu0 0.0
    %1948 = vmatprep.subr.mxu0 0.0
    %1949 = vmatpush1.msra.mxu0 0.0
    %1950 = vmatprep.subr.mxu0 0.0
    %1951 = vmatpush1.msra.mxu0 0.0
    %1952 = vmatprep.subr.mxu0 0.0
    %1953 = vmatpush1.msra.mxu0 0.0
    %1954 = vmatprep.subr.mxu0 0.0
    %1955 = vmatpush1.msra.mxu0 0.0
    %1956 = vmatprep.subr.mxu0 0.0
    %1957 = vmatpush1.msra.mxu0 0.0
    %1958 = vmatprep.subr.mxu0 0.0
    %1959 = vmatpush1.msra.mxu0 0.0
    %1960 = vmatprep.subr.mxu0 0.0
    %1961 = vmatpush1.msra.mxu0 0.0
    %1962 = vmatprep.subr.mxu0 0.0
    %1963 = vmatpush1.msra.mxu0 0.0
    %1964 = vmatprep.subr.mxu0 0.0
    %1965 = vmatpush1.msra.mxu0 0.0
    %1966 = vmatprep.subr.mxu0 0.0
    %1967 = vmatpush1.msra.mxu0 0.0
    %1968 = vmatprep.subr.mxu0 0.0
    %1969 = vmatpush1.msra.mxu0 0.0
    %1970 = vmatprep.subr.mxu0 0.0
    %1971 = vmatpush1.msra.mxu0 0.0
    %1972 = vmatprep.subr.mxu0 0.0
    %1973 = vmatpush1.msra.mxu0 0.0
    %1974 = vmatprep.subr.mxu0 0.0
    %1975 = vmatpush1.msra.mxu0 0.0
    %1976 = vmatprep.subr.mxu0 0.0
    %1977 = vmatpush1.msra.mxu0 0.0
    %1978 = vmatprep.subr.mxu0 0.0
    %1979 = vmatpush1.msra.mxu0 0.0
    %1980 = vmatprep.subr.mxu0 0.0
    %1981 = vmatpush1.msra.mxu0 0.0
    %1982 = vmatprep.mubr.f32.mxu0 0.0
    %1983 = vmatmul.mubr.f32.gmra.mrb[0].mxu0 %v1916
    %v1984 = vpop.f32.mrb[0].mxu0
    %v1985 = vadd.f32 0.0, %v1984
    %v1986 = vpop.f32.mrb[0].mxu0
    %1987 = vdwg.mxu0
    %v1989 = vsel %vm150, %v1985, 0
    %1991 = vmatprep.subr.mxu0 0.0
    %1992 = vmatpush1.msra.mxu0 %v56
    %1993 = vmatprep.subr.mxu0 0.0
    %1994 = vmatpush1.msra.mxu0 0.0
    %1995 = vmatprep.subr.mxu0 0.0
    %1996 = vmatpush1.msra.mxu0 0.0
    %1997 = vmatprep.subr.mxu0 0.0
    %1998 = vmatpush1.msra.mxu0 0.0
    %1999 = vmatprep.subr.mxu0 0.0
    %2000 = vmatpush1.msra.mxu0 0.0
    %2001 = vmatprep.subr.mxu0 0.0
    %2002 = vmatpush1.msra.mxu0 0.0
    %2003 = vmatprep.subr.mxu0 0.0
    %2004 = vmatpush1.msra.mxu0 0.0
    %2005 = vmatprep.subr.mxu0 0.0
    %2006 = vmatpush1.msra.mxu0 0.0
    %2007 = vmatprep.subr.mxu0 0.0
    %2008 = vmatpush1.msra.mxu0 0.0
    %2009 = vmatprep.subr.mxu0 0.0
    %2010 = vmatpush1.msra.mxu0 0.0
    %2011 = vmatprep.subr.mxu0 0.0
    %2012 = vmatpush1.msra.mxu0 0.0
    %2013 = vmatprep.subr.mxu0 0.0
    %2014 = vmatpush1.msra.mxu0 0.0
    %2015 = vmatprep.subr.mxu0 0.0
    %2016 = vmatpush1.msra.mxu0 0.0
    %2017 = vmatprep.subr.mxu0 0.0
    %2018 = vmatpush1.msra.mxu0 0.0
    %2019 = vmatprep.subr.mxu0 0.0
    %2020 = vmatpush1.msra.mxu0 0.0
    %2021 = vmatprep.subr.mxu0 0.0
    %2022 = vmatpush1.msra.mxu0 0.0
    %2023 = vmatprep.subr.mxu0 0.0
    %2024 = vmatpush1.msra.mxu0 0.0
    %2025 = vmatprep.subr.mxu0 0.0
    %2026 = vmatpush1.msra.mxu0 0.0
    %2027 = vmatprep.subr.mxu0 0.0
    %2028 = vmatpush1.msra.mxu0 0.0
    %2029 = vmatprep.subr.mxu0 0.0
    %2030 = vmatpush1.msra.mxu0 0.0
    %2031 = vmatprep.subr.mxu0 0.0
    %2032 = vmatpush1.msra.mxu0 0.0
    %2033 = vmatprep.subr.mxu0 0.0
    %2034 = vmatpush1.msra.mxu0 0.0
    %2035 = vmatprep.subr.mxu0 0.0
    %2036 = vmatpush1.msra.mxu0 0.0
    %2037 = vmatprep.subr.mxu0 0.0
    %2038 = vmatpush1.msra.mxu0 0.0
    %2039 = vmatprep.subr.mxu0 0.0
    %2040 = vmatpush1.msra.mxu0 0.0
    %2041 = vmatprep.subr.mxu0 0.0
    %2042 = vmatpush1.msra.mxu0 0.0
    %2043 = vmatprep.subr.mxu0 0.0
    %2044 = vmatpush1.msra.mxu0 0.0
    %2045 = vmatprep.subr.mxu0 0.0
    %2046 = vmatpush1.msra.mxu0 0.0
    %2047 = vmatprep.subr.mxu0 0.0
    %2048 = vmatpush1.msra.mxu0 0.0
    %2049 = vmatprep.subr.mxu0 0.0
    %2050 = vmatpush1.msra.mxu0 0.0
    %2051 = vmatprep.subr.mxu0 0.0
    %2052 = vmatpush1.msra.mxu0 0.0
    %2053 = vmatprep.subr.mxu0 0.0
    %2054 = vmatpush1.msra.mxu0 0.0
    %2055 = vmatprep.mubr.f32.mxu0 0.0
    %2056 = vmatmul.mubr.f32.gmra.mrb[0].mxu0 %v1989
    %v2057 = vpop.f32.mrb[0].mxu0
    %v2058 = vadd.f32 0.0, %v2057
    %v2059 = vpop.f32.mrb[0].mxu0
    %2060 = vdwg.mxu0
    %v2061 = vadd.f32 %v1911, %v2058
    %v2062 = vlaneseq
    %v2063 = vshrl.u32 %v2062, 7
    %v2064 = vsub.s32 1, %v2063
    %v2065 = vrot.slane %v52, %v2064
    %v2066 = vadd.f32 %v1104, %v2065
    %v2067 = vadd.f32 %v2061, %v2065
    %v2068 = vadd.f32 %v41, %v2066
    %v2069 = vadd.f32 %v42, %v2067
    %v2070 = vsel %vm65, %v2068, 0.0
    %2071 = vadd.xlane.f32.xlu0 %v2070
    %v2072 = vpop.xlane.xlu0 %2071
    %v2073 = vsel %vm65, %v2069, 0.0
    %2074 = vadd.xlane.f32.xlu0 %v2073
    %v2075 = vpop.xlane.xlu0 %2074
    %v2076 = vrcp.pop 32.0
    %v2077 = vmul.f32 %v2072, %v2076
    %v2078 = vmul.f32 %v2075, %v2076
    %v2079 = vsub.f32 %v2068, %v2077
    %v2080 = vsub.f32 %v2069, %v2078
    %v2081 = vmul.f32 %v2079, %v2079
    %v2082 = vmul.f32 %v2080, %v2080
    %v2083 = vsel %vm65, %v2081, 0.0
    %2084 = vadd.xlane.f32.xlu0 %v2083
    %v2085 = vpop.xlane.xlu0 %2084
    %v2086 = vsel %vm65, %v2082, 0.0
    %2087 = vadd.xlane.f32.xlu0 %v2086
    %v2088 = vpop.xlane.xlu0 %2087
    %v2089 = vmul.f32 %v2085, %v2076
    %v2090 = vmul.f32 %v2088, %v2076
    %v2091 = vadd.f32 %v2089, 1e-05
    %v2092 = vadd.f32 %v2090, 1e-05
    %v2093 = vrsqrt.pop %v2091
    %v2094 = vrsqrt.pop %v2092
    %v2095 = vmul.f32 %v2079, %v2093
    %v2096 = vmul.f32 %v2080, %v2094
    %v2097 = vlaneseq
    %v2098 = vshrl.u32 %v2097, 7
    %v2099 = vsub.s32 4, %v2098
    %v2100 = vrot.slane %v52, %v2099
    %v2101 = vmul.f32 %v2095, %v2100
    %v2102 = vmul.f32 %v2096, %v2100
    %v2103 = vlaneseq
    %v2104 = vshrl.u32 %v2103, 7
    %v2105 = vsub.s32 5, %v2104
    %v2106 = vrot.slane %v52, %v2105
    %v2107 = vadd.f32 %v2101, %v2106
    %v2108 = vadd.f32 %v2102, %v2106
    %v2109 = vld [vmem:[%s4] sm:$0xff]
    %v2110 = vld [vmem:[%s4 + $0x8] sm:$0xff]
    %v2111 = vld [vmem:[%s4 + $0x10] sm:$0xff]
    %v2112 = vld [vmem:[%s4 + $0x18] sm:$0xff]
    %v2113 = vlaneseq
    %v2114 = vshrl.u32 %v2113, 7
    %v2115 = vsub.s32 2, %v2114
    %v2116 = vrot.slane %v52, %v2115
    %v2118 = vsel %vm65, %v2107, 0
    %v2121 = vsel %vm65, %v2108, 0
    %2123 = vmatprep.subr.mxu0 0.0
    %2124 = vmatpush1.msra.mxu0 %v2109
    %2125 = vmatprep.subr.mxu0 0.0
    %2126 = vmatpush1.msra.mxu0 %v2110
    %2127 = vmatprep.subr.mxu0 0.0
    %2128 = vmatpush1.msra.mxu0 %v2111
    %2129 = vmatprep.subr.mxu0 0.0
    %2130 = vmatpush1.msra.mxu0 %v2112
    %2131 = vmatprep.subr.mxu0 0.0
    %2132 = vmatpush1.msra.mxu0 0.0
    %2133 = vmatprep.subr.mxu0 0.0
    %2134 = vmatpush1.msra.mxu0 0.0
    %2135 = vmatprep.subr.mxu0 0.0
    %2136 = vmatpush1.msra.mxu0 0.0
    %2137 = vmatprep.subr.mxu0 0.0
    %2138 = vmatpush1.msra.mxu0 0.0
    %2139 = vmatprep.subr.mxu0 0.0
    %2140 = vmatpush1.msra.mxu0 0.0
    %2141 = vmatprep.subr.mxu0 0.0
    %2142 = vmatpush1.msra.mxu0 0.0
    %2143 = vmatprep.subr.mxu0 0.0
    %2144 = vmatpush1.msra.mxu0 0.0
    %2145 = vmatprep.subr.mxu0 0.0
    %2146 = vmatpush1.msra.mxu0 0.0
    %2147 = vmatprep.subr.mxu0 0.0
    %2148 = vmatpush1.msra.mxu0 0.0
    %2149 = vmatprep.subr.mxu0 0.0
    %2150 = vmatpush1.msra.mxu0 0.0
    %2151 = vmatprep.subr.mxu0 0.0
    %2152 = vmatpush1.msra.mxu0 0.0
    %2153 = vmatprep.subr.mxu0 0.0
    %2154 = vmatpush1.msra.mxu0 0.0
    %2155 = vmatprep.subr.mxu0 0.0
    %2156 = vmatpush1.msra.mxu0 0.0
    %2157 = vmatprep.subr.mxu0 0.0
    %2158 = vmatpush1.msra.mxu0 0.0
    %2159 = vmatprep.subr.mxu0 0.0
    %2160 = vmatpush1.msra.mxu0 0.0
    %2161 = vmatprep.subr.mxu0 0.0
    %2162 = vmatpush1.msra.mxu0 0.0
    %2163 = vmatprep.subr.mxu0 0.0
    %2164 = vmatpush1.msra.mxu0 0.0
    %2165 = vmatprep.subr.mxu0 0.0
    %2166 = vmatpush1.msra.mxu0 0.0
    %2167 = vmatprep.subr.mxu0 0.0
    %2168 = vmatpush1.msra.mxu0 0.0
    %2169 = vmatprep.subr.mxu0 0.0
    %2170 = vmatpush1.msra.mxu0 0.0
    %2171 = vmatprep.subr.mxu0 0.0
    %2172 = vmatpush1.msra.mxu0 0.0
    %2173 = vmatprep.subr.mxu0 0.0
    %2174 = vmatpush1.msra.mxu0 0.0
    %2175 = vmatprep.subr.mxu0 0.0
    %2176 = vmatpush1.msra.mxu0 0.0
    %2177 = vmatprep.subr.mxu0 0.0
    %2178 = vmatpush1.msra.mxu0 0.0
    %2179 = vmatprep.subr.mxu0 0.0
    %2180 = vmatpush1.msra.mxu0 0.0
    %2181 = vmatprep.subr.mxu0 0.0
    %2182 = vmatpush1.msra.mxu0 0.0
    %2183 = vmatprep.subr.mxu0 0.0
    %2184 = vmatpush1.msra.mxu0 0.0
    %2185 = vmatprep.subr.mxu0 0.0
    %2186 = vmatpush1.msra.mxu0 0.0
    %2187 = vmatprep.mubr.f32.mxu0 0.0
    %2188 = vmatmul.mubr.f32.gmra.mrb[0].mxu0 %v2118
    %v2189 = vpop.f32.mrb[0].mxu0
    %v2190 = vadd.f32 %v2116, %v2189
    %v2191 = vpop.f32.mrb[0].mxu0
    %2192 = vmatprep.mubr.f32.mxu0 0.0
    %2193 = vmatmul.mubr.f32.gmra.mrb[0].mxu0 %v2121
    %v2194 = vpop.f32.mrb[0].mxu0
    %v2195 = vadd.f32 %v2116, %v2194
    %v2196 = vpop.f32.mrb[0].mxu0
    %2197 = vdwg.mxu0
    %v2198 = vmax.f32 %v2190, 0.0
    %v2199 = vmax.f32 %v2195, 0.0
    %v2200 = vld [vmem:[%s5] sm:$0xff]
    %v2201 = vld [vmem:[%s5 + $0x8] sm:$0xff]
    %v2202 = vld [vmem:[%s5 + $0x10] sm:$0xff]
    %v2203 = vld [vmem:[%s5 + $0x18] sm:$0xff]
    %v2204 = vld [vmem:[%s5 + $0x20] sm:$0xff]
    %v2205 = vld [vmem:[%s5 + $0x28] sm:$0xff]
    %v2206 = vld [vmem:[%s5 + $0x30] sm:$0xff]
    %v2207 = vld [vmem:[%s5 + $0x38] sm:$0xff]
    %v2208 = vlaneseq
    %v2209 = vshrl.u32 %v2208, 7
    %v2210 = vsub.s32 3, %v2209
    %v2211 = vrot.slane %v52, %v2210
    %vm2212 = vcmask 523264
    %v2214 = vsel %vm2212, %v2198, 0
    %v2217 = vsel %vm2212, %v2199, 0
    %2219 = vmatprep.subr.mxu0 0.0
    %2220 = vmatpush1.msra.mxu0 %v2200
    %2221 = vmatprep.subr.mxu0 0.0
    %2222 = vmatpush1.msra.mxu0 %v2201
    %2223 = vmatprep.subr.mxu0 0.0
    %2224 = vmatpush1.msra.mxu0 %v2202
    %2225 = vmatprep.subr.mxu0 0.0
    %2226 = vmatpush1.msra.mxu0 %v2203
    %2227 = vmatprep.subr.mxu0 0.0
    %2228 = vmatpush1.msra.mxu0 %v2204
    %2229 = vmatprep.subr.mxu0 0.0
    %2230 = vmatpush1.msra.mxu0 %v2205
    %2231 = vmatprep.subr.mxu0 0.0
    %2232 = vmatpush1.msra.mxu0 %v2206
    %2233 = vmatprep.subr.mxu0 0.0
    %2234 = vmatpush1.msra.mxu0 %v2207
    %2235 = vmatprep.subr.mxu0 0.0
    %2236 = vmatpush1.msra.mxu0 0.0
    %2237 = vmatprep.subr.mxu0 0.0
    %2238 = vmatpush1.msra.mxu0 0.0
    %2239 = vmatprep.subr.mxu0 0.0
    %2240 = vmatpush1.msra.mxu0 0.0
    %2241 = vmatprep.subr.mxu0 0.0
    %2242 = vmatpush1.msra.mxu0 0.0
    %2243 = vmatprep.subr.mxu0 0.0
    %2244 = vmatpush1.msra.mxu0 0.0
    %2245 = vmatprep.subr.mxu0 0.0
    %2246 = vmatpush1.msra.mxu0 0.0
    %2247 = vmatprep.subr.mxu0 0.0
    %2248 = vmatpush1.msra.mxu0 0.0
    %2249 = vmatprep.subr.mxu0 0.0
    %2250 = vmatpush1.msra.mxu0 0.0
    %2251 = vmatprep.subr.mxu0 0.0
    %2252 = vmatpush1.msra.mxu0 0.0
    %2253 = vmatprep.subr.mxu0 0.0
    %2254 = vmatpush1.msra.mxu0 0.0
    %2255 = vmatprep.subr.mxu0 0.0
    %2256 = vmatpush1.msra.mxu0 0.0
    %2257 = vmatprep.subr.mxu0 0.0
    %2258 = vmatpush1.msra.mxu0 0.0
    %2259 = vmatprep.subr.mxu0 0.0
    %2260 = vmatpush1.msra.mxu0 0.0
    %2261 = vmatprep.subr.mxu0 0.0
    %2262 = vmatpush1.msra.mxu0 0.0
    %2263 = vmatprep.subr.mxu0 0.0
    %2264 = vmatpush1.msra.mxu0 0.0
    %2265 = vmatprep.subr.mxu0 0.0
    %2266 = vmatpush1.msra.mxu0 0.0
    %2267 = vmatprep.subr.mxu0 0.0
    %2268 = vmatpush1.msra.mxu0 0.0
    %2269 = vmatprep.subr.mxu0 0.0
    %2270 = vmatpush1.msra.mxu0 0.0
    %2271 = vmatprep.subr.mxu0 0.0
    %2272 = vmatpush1.msra.mxu0 0.0
    %2273 = vmatprep.subr.mxu0 0.0
    %2274 = vmatpush1.msra.mxu0 0.0
    %2275 = vmatprep.subr.mxu0 0.0
    %2276 = vmatpush1.msra.mxu0 0.0
    %2277 = vmatprep.subr.mxu0 0.0
    %2278 = vmatpush1.msra.mxu0 0.0
    %2279 = vmatprep.subr.mxu0 0.0
    %2280 = vmatpush1.msra.mxu0 0.0
    %2281 = vmatprep.subr.mxu0 0.0
    %2282 = vmatpush1.msra.mxu0 0.0
    %2283 = vmatprep.mubr.f32.mxu0 0.0
    %2284 = vmatmul.mubr.f32.gmra.mrb[0].mxu0 %v2214
    %v2285 = vpop.f32.mrb[0].mxu0
    %v2286 = vadd.f32 %v2211, %v2285
    %v2287 = vpop.f32.mrb[0].mxu0
    %2288 = vmatprep.mubr.f32.mxu0 0.0
    %2289 = vmatmul.mubr.f32.gmra.mrb[0].mxu0 %v2217
    %v2290 = vpop.f32.mrb[0].mxu0
    %v2291 = vadd.f32 %v2211, %v2290
    %v2292 = vpop.f32.mrb[0].mxu0
    %2293 = vdwg.mxu0
    %v2294 = vadd.f32 %v2107, %v2286
    %v2295 = vadd.f32 %v2108, %v2291
    %v2296 = vsel %vm65, %v2294, 0.0
    %2297 = vadd.xlane.f32.xlu0 %v2296
    %v2298 = vpop.xlane.xlu0 %2297
    %v2299 = vsel %vm65, %v2295, 0.0
    %2300 = vadd.xlane.f32.xlu0 %v2299
    %v2301 = vpop.xlane.xlu0 %2300
    %v2302 = vmul.f32 %v2298, %v2076
    %v2303 = vmul.f32 %v2301, %v2076
    %v2304 = vsub.f32 %v2294, %v2302
    %v2305 = vsub.f32 %v2295, %v2303
    %v2306 = vmul.f32 %v2304, %v2304
    %v2307 = vmul.f32 %v2305, %v2305
    %v2308 = vsel %vm65, %v2306, 0.0
    %2309 = vadd.xlane.f32.xlu0 %v2308
    %v2310 = vpop.xlane.xlu0 %2309
    %v2311 = vsel %vm65, %v2307, 0.0
    %2312 = vadd.xlane.f32.xlu0 %v2311
    %v2313 = vpop.xlane.xlu0 %2312
    %v2314 = vmul.f32 %v2310, %v2076
    %v2315 = vmul.f32 %v2313, %v2076
    %v2316 = vadd.f32 %v2314, 1e-05
    %v2317 = vadd.f32 %v2315, 1e-05
    %v2318 = vrsqrt.pop %v2316
    %v2319 = vrsqrt.pop %v2317
    %v2320 = vmul.f32 %v2304, %v2318
    %v2321 = vmul.f32 %v2305, %v2319
    %v2322 = vlaneseq
    %v2323 = vshrl.u32 %v2322, 7
    %v2324 = vsub.s32 6, %v2323
    %v2325 = vrot.slane %v52, %v2324
    %v2326 = vmul.f32 %v2320, %v2325
    %v2327 = vmul.f32 %v2321, %v2325
    %v2328 = vlaneseq
    %v2329 = vshrl.u32 %v2328, 7
    %v2330 = vsub.s32 7, %v2329
    %v2331 = vrot.slane %v52, %v2330
    %v2332 = vadd.f32 %v2326, %v2331
    %v2333 = vadd.f32 %v2327, %v2331
    %s2334 = scalar_lea.vmem %s6, 8
    %v2335 = vld [vmem:[%s2334] sm:$0xff]
    %s2336 = scalar_lea.vmem %s3, 32
    %v2337 = vld [vmem:[%s2336] sm:$0xff]
    %v2338 = vld [vmem:[%s2336 + $0x8] sm:$0xff]
    %v2339 = vld [vmem:[%s2336 + $0x10] sm:$0xff]
    %v2340 = vld [vmem:[%s2336 + $0x18] sm:$0xff]
    %s2341 = scalar_lea.vmem %s2, 32
    %v2342 = vld [vmem:[%s2341] sm:$0xff]
    %v2343 = vld [vmem:[%s2341 + $0x8] sm:$0xff]
    %v2344 = vld [vmem:[%s2341 + $0x10] sm:$0xff]
    %v2345 = vld [vmem:[%s2341 + $0x18] sm:$0xff]
    %v2346 = vlaneseq
    %v2347 = vshrl.u32 %v2346, 7
    %v2348 = vsub.s32 0, %v2347
    %v2349 = vrot.slane %v2335, %v2348
    %v2351 = vsel %vm65, %v2332, 0
    %v2354 = vsel %vm65, %v2333, 0
    %2356 = vmatprep.subr.mxu0 0.0
    %2357 = vmatpush1.msra.mxu0 %v2342
    %2358 = vmatprep.subr.mxu0 0.0
    %2359 = vmatpush1.msra.mxu0 %v2343
    %2360 = vmatprep.subr.mxu0 0.0
    %2361 = vmatpush1.msra.mxu0 %v2344
    %2362 = vmatprep.subr.mxu0 0.0
    %2363 = vmatpush1.msra.mxu0 %v2345
    %2364 = vmatprep.subr.mxu0 0.0
    %2365 = vmatpush1.msra.mxu0 0.0
    %2366 = vmatprep.subr.mxu0 0.0
    %2367 = vmatpush1.msra.mxu0 0.0
    %2368 = vmatprep.subr.mxu0 0.0
    %2369 = vmatpush1.msra.mxu0 0.0
    %2370 = vmatprep.subr.mxu0 0.0
    %2371 = vmatpush1.msra.mxu0 0.0
    %2372 = vmatprep.subr.mxu0 0.0
    %2373 = vmatpush1.msra.mxu0 0.0
    %2374 = vmatprep.subr.mxu0 0.0
    %2375 = vmatpush1.msra.mxu0 0.0
    %2376 = vmatprep.subr.mxu0 0.0
    %2377 = vmatpush1.msra.mxu0 0.0
    %2378 = vmatprep.subr.mxu0 0.0
    %2379 = vmatpush1.msra.mxu0 0.0
    %2380 = vmatprep.subr.mxu0 0.0
    %2381 = vmatpush1.msra.mxu0 0.0
    %2382 = vmatprep.subr.mxu0 0.0
    %2383 = vmatpush1.msra.mxu0 0.0
    %2384 = vmatprep.subr.mxu0 0.0
    %2385 = vmatpush1.msra.mxu0 0.0
    %2386 = vmatprep.subr.mxu0 0.0
    %2387 = vmatpush1.msra.mxu0 0.0
    %2388 = vmatprep.subr.mxu0 0.0
    %2389 = vmatpush1.msra.mxu0 0.0
    %2390 = vmatprep.subr.mxu0 0.0
    %2391 = vmatpush1.msra.mxu0 0.0
    %2392 = vmatprep.subr.mxu0 0.0
    %2393 = vmatpush1.msra.mxu0 0.0
    %2394 = vmatprep.subr.mxu0 0.0
    %2395 = vmatpush1.msra.mxu0 0.0
    %2396 = vmatprep.subr.mxu0 0.0
    %2397 = vmatpush1.msra.mxu0 0.0
    %2398 = vmatprep.subr.mxu0 0.0
    %2399 = vmatpush1.msra.mxu0 0.0
    %2400 = vmatprep.subr.mxu0 0.0
    %2401 = vmatpush1.msra.mxu0 0.0
    %2402 = vmatprep.subr.mxu0 0.0
    %2403 = vmatpush1.msra.mxu0 0.0
    %2404 = vmatprep.subr.mxu0 0.0
    %2405 = vmatpush1.msra.mxu0 0.0
    %2406 = vmatprep.subr.mxu0 0.0
    %2407 = vmatpush1.msra.mxu0 0.0
    %2408 = vmatprep.subr.mxu0 0.0
    %2409 = vmatpush1.msra.mxu0 0.0
    %2410 = vmatprep.subr.mxu0 0.0
    %2411 = vmatpush1.msra.mxu0 0.0
    %2412 = vmatprep.subr.mxu0 0.0
    %2413 = vmatpush1.msra.mxu0 0.0
    %2414 = vmatprep.subr.mxu0 0.0
    %2415 = vmatpush1.msra.mxu0 0.0
    %2416 = vmatprep.subr.mxu0 0.0
    %2417 = vmatpush1.msra.mxu0 0.0
    %2418 = vmatprep.subr.mxu0 0.0
    %2419 = vmatpush1.msra.mxu0 0.0
    %2420 = vmatprep.mubr.f32.mxu0 0.0
    %2421 = vmatmul.mubr.f32.gmra.mrb[0].mxu0 %v2351
    %v2422 = vpop.f32.mrb[0].mxu0
    %v2423 = vadd.f32 %v2349, %v2422
    %v2424 = vpop.f32.mrb[0].mxu0
    %2425 = vmatprep.mubr.f32.mxu0 0.0
    %2426 = vmatmul.mubr.f32.gmra.mrb[0].mxu0 %v2354
    %v2427 = vpop.f32.mrb[0].mxu0
    %v2428 = vadd.f32 %v2349, %v2427
    %v2429 = vpop.f32.mrb[0].mxu0
    %2430 = vdwg.mxu0
    %2432 = vrot.lane.b32.xlu0 %v2423, 96
    %v2433 = vpop.permute.xlu0 %2432
    %v2434 = vsel %vm150, %v2423, 0
    %v2436 = vsel %vm150, %v2433, 0
    %2438 = vmatprep.subr.mxu0 0.0
    %2439 = vmatpush1.xpose.msra.mxu0 %v2436
    %2440 = vmatprep.subr.mxu0 0.0
    %2441 = vmatpush1.xpose.msra.mxu0 0.0
    %2442 = vmatprep.subr.mxu0 0.0
    %2443 = vmatpush1.xpose.msra.mxu0 0.0
    %2444 = vmatprep.subr.mxu0 0.0
    %2445 = vmatpush1.xpose.msra.mxu0 0.0
    %2446 = vmatprep.subr.mxu0 0.0
    %2447 = vmatpush1.xpose.msra.mxu0 0.0
    %2448 = vmatprep.subr.mxu0 0.0
    %2449 = vmatpush1.xpose.msra.mxu0 0.0
    %2450 = vmatprep.subr.mxu0 0.0
    %2451 = vmatpush1.xpose.msra.mxu0 0.0
    %2452 = vmatprep.subr.mxu0 0.0
    %2453 = vmatpush1.xpose.msra.mxu0 0.0
    %2454 = vmatprep.subr.mxu0 0.0
    %2455 = vmatpush1.xpose.msra.mxu0 0.0
    %2456 = vmatprep.subr.mxu0 0.0
    %2457 = vmatpush1.xpose.msra.mxu0 0.0
    %2458 = vmatprep.subr.mxu0 0.0
    %2459 = vmatpush1.xpose.msra.mxu0 0.0
    %2460 = vmatprep.subr.mxu0 0.0
    %2461 = vmatpush1.xpose.msra.mxu0 0.0
    %2462 = vmatprep.subr.mxu0 0.0
    %2463 = vmatpush1.xpose.msra.mxu0 0.0
    %2464 = vmatprep.subr.mxu0 0.0
    %2465 = vmatpush1.xpose.msra.mxu0 0.0
    %2466 = vmatprep.subr.mxu0 0.0
    %2467 = vmatpush1.xpose.msra.mxu0 0.0
    %2468 = vmatprep.subr.mxu0 0.0
    %2469 = vmatpush1.xpose.msra.mxu0 0.0
    %2470 = vmatprep.subr.mxu0 0.0
    %2471 = vmatpush1.xpose.msra.mxu0 0.0
    %2472 = vmatprep.subr.mxu0 0.0
    %2473 = vmatpush1.xpose.msra.mxu0 0.0
    %2474 = vmatprep.subr.mxu0 0.0
    %2475 = vmatpush1.xpose.msra.mxu0 0.0
    %2476 = vmatprep.subr.mxu0 0.0
    %2477 = vmatpush1.xpose.msra.mxu0 0.0
    %2478 = vmatprep.subr.mxu0 0.0
    %2479 = vmatpush1.xpose.msra.mxu0 0.0
    %2480 = vmatprep.subr.mxu0 0.0
    %2481 = vmatpush1.xpose.msra.mxu0 0.0
    %2482 = vmatprep.subr.mxu0 0.0
    %2483 = vmatpush1.xpose.msra.mxu0 0.0
    %2484 = vmatprep.subr.mxu0 0.0
    %2485 = vmatpush1.xpose.msra.mxu0 0.0
    %2486 = vmatprep.subr.mxu0 0.0
    %2487 = vmatpush1.xpose.msra.mxu0 0.0
    %2488 = vmatprep.subr.mxu0 0.0
    %2489 = vmatpush1.xpose.msra.mxu0 0.0
    %2490 = vmatprep.subr.mxu0 0.0
    %2491 = vmatpush1.xpose.msra.mxu0 0.0
    %2492 = vmatprep.subr.mxu0 0.0
    %2493 = vmatpush1.xpose.msra.mxu0 0.0
    %2494 = vmatprep.subr.mxu0 0.0
    %2495 = vmatpush1.xpose.msra.mxu0 0.0
    %2496 = vmatprep.subr.mxu0 0.0
    %2497 = vmatpush1.xpose.msra.mxu0 0.0
    %2498 = vmatprep.subr.mxu0 0.0
    %2499 = vmatpush1.xpose.msra.mxu0 0.0
    %2500 = vmatprep.subr.mxu0 0.0
    %2501 = vmatpush1.xpose.msra.mxu0 0.0
    %2502 = vmatprep.mubr.f32.mxu0 0.0
    %2503 = vmatmul.mubr.f32.gmra.mrb[0].mxu0 %v2434
    %v2504 = vpop.f32.mrb[0].mxu0
    %v2505 = vadd.f32 0.0, %v2504
    %v2506 = vpop.f32.mrb[0].mxu0
    %2507 = vdwg.mxu0
    %2508 = vrot.lane.b32.xlu0 %v2423, 120
    %v2509 = vpop.permute.xlu0 %2508
    %2510 = vrot.lane.b32.xlu0 %v2423, 88
    %v2511 = vpop.permute.xlu0 %2510
    %v2512 = vsel %vm150, %v2509, 0
    %v2514 = vsel %vm150, %v2511, 0
    %2516 = vmatprep.subr.mxu0 0.0
    %2517 = vmatpush1.xpose.msra.mxu0 %v2514
    %2518 = vmatprep.subr.mxu0 0.0
    %2519 = vmatpush1.xpose.msra.mxu0 0.0
    %2520 = vmatprep.subr.mxu0 0.0
    %2521 = vmatpush1.xpose.msra.mxu0 0.0
    %2522 = vmatprep.subr.mxu0 0.0
    %2523 = vmatpush1.xpose.msra.mxu0 0.0
    %2524 = vmatprep.subr.mxu0 0.0
    %2525 = vmatpush1.xpose.msra.mxu0 0.0
    %2526 = vmatprep.subr.mxu0 0.0
    %2527 = vmatpush1.xpose.msra.mxu0 0.0
    %2528 = vmatprep.subr.mxu0 0.0
    %2529 = vmatpush1.xpose.msra.mxu0 0.0
    %2530 = vmatprep.subr.mxu0 0.0
    %2531 = vmatpush1.xpose.msra.mxu0 0.0
    %2532 = vmatprep.subr.mxu0 0.0
    %2533 = vmatpush1.xpose.msra.mxu0 0.0
    %2534 = vmatprep.subr.mxu0 0.0
    %2535 = vmatpush1.xpose.msra.mxu0 0.0
    %2536 = vmatprep.subr.mxu0 0.0
    %2537 = vmatpush1.xpose.msra.mxu0 0.0
    %2538 = vmatprep.subr.mxu0 0.0
    %2539 = vmatpush1.xpose.msra.mxu0 0.0
    %2540 = vmatprep.subr.mxu0 0.0
    %2541 = vmatpush1.xpose.msra.mxu0 0.0
    %2542 = vmatprep.subr.mxu0 0.0
    %2543 = vmatpush1.xpose.msra.mxu0 0.0
    %2544 = vmatprep.subr.mxu0 0.0
    %2545 = vmatpush1.xpose.msra.mxu0 0.0
    %2546 = vmatprep.subr.mxu0 0.0
    %2547 = vmatpush1.xpose.msra.mxu0 0.0
    %2548 = vmatprep.subr.mxu0 0.0
    %2549 = vmatpush1.xpose.msra.mxu0 0.0
    %2550 = vmatprep.subr.mxu0 0.0
    %2551 = vmatpush1.xpose.msra.mxu0 0.0
    %2552 = vmatprep.subr.mxu0 0.0
    %2553 = vmatpush1.xpose.msra.mxu0 0.0
    %2554 = vmatprep.subr.mxu0 0.0
    %2555 = vmatpush1.xpose.msra.mxu0 0.0
    %2556 = vmatprep.subr.mxu0 0.0
    %2557 = vmatpush1.xpose.msra.mxu0 0.0
    %2558 = vmatprep.subr.mxu0 0.0
    %2559 = vmatpush1.xpose.msra.mxu0 0.0
    %2560 = vmatprep.subr.mxu0 0.0
    %2561 = vmatpush1.xpose.msra.mxu0 0.0
    %2562 = vmatprep.subr.mxu0 0.0
    %2563 = vmatpush1.xpose.msra.mxu0 0.0
    %2564 = vmatprep.subr.mxu0 0.0
    %2565 = vmatpush1.xpose.msra.mxu0 0.0
    %2566 = vmatprep.subr.mxu0 0.0
    %2567 = vmatpush1.xpose.msra.mxu0 0.0
    %2568 = vmatprep.subr.mxu0 0.0
    %2569 = vmatpush1.xpose.msra.mxu0 0.0
    %2570 = vmatprep.subr.mxu0 0.0
    %2571 = vmatpush1.xpose.msra.mxu0 0.0
    %2572 = vmatprep.subr.mxu0 0.0
    %2573 = vmatpush1.xpose.msra.mxu0 0.0
    %2574 = vmatprep.subr.mxu0 0.0
    %2575 = vmatpush1.xpose.msra.mxu0 0.0
    %2576 = vmatprep.subr.mxu0 0.0
    %2577 = vmatpush1.xpose.msra.mxu0 0.0
    %2578 = vmatprep.subr.mxu0 0.0
    %2579 = vmatpush1.xpose.msra.mxu0 0.0
    %2580 = vmatprep.mubr.f32.mxu0 0.0
    %2581 = vmatmul.mubr.f32.gmra.mrb[0].mxu0 %v2512
    %v2582 = vpop.f32.mrb[0].mxu0
    %v2583 = vadd.f32 0.0, %v2582
    %v2584 = vpop.f32.mrb[0].mxu0
    %2585 = vdwg.mxu0
    %2586 = vrot.lane.b32.xlu0 %v2423, 112
    %v2587 = vpop.permute.xlu0 %2586
    %2588 = vrot.lane.b32.xlu0 %v2423, 80
    %v2589 = vpop.permute.xlu0 %2588
    %v2590 = vsel %vm150, %v2587, 0
    %v2592 = vsel %vm150, %v2589, 0
    %2594 = vmatprep.subr.mxu0 0.0
    %2595 = vmatpush1.xpose.msra.mxu0 %v2592
    %2596 = vmatprep.subr.mxu0 0.0
    %2597 = vmatpush1.xpose.msra.mxu0 0.0
    %2598 = vmatprep.subr.mxu0 0.0
    %2599 = vmatpush1.xpose.msra.mxu0 0.0
    %2600 = vmatprep.subr.mxu0 0.0
    %2601 = vmatpush1.xpose.msra.mxu0 0.0
    %2602 = vmatprep.subr.mxu0 0.0
    %2603 = vmatpush1.xpose.msra.mxu0 0.0
    %2604 = vmatprep.subr.mxu0 0.0
    %2605 = vmatpush1.xpose.msra.mxu0 0.0
    %2606 = vmatprep.subr.mxu0 0.0
    %2607 = vmatpush1.xpose.msra.mxu0 0.0
    %2608 = vmatprep.subr.mxu0 0.0
    %2609 = vmatpush1.xpose.msra.mxu0 0.0
    %2610 = vmatprep.subr.mxu0 0.0
    %2611 = vmatpush1.xpose.msra.mxu0 0.0
    %2612 = vmatprep.subr.mxu0 0.0
    %2613 = vmatpush1.xpose.msra.mxu0 0.0
    %2614 = vmatprep.subr.mxu0 0.0
    %2615 = vmatpush1.xpose.msra.mxu0 0.0
    %2616 = vmatprep.subr.mxu0 0.0
    %2617 = vmatpush1.xpose.msra.mxu0 0.0
    %2618 = vmatprep.subr.mxu0 0.0
    %2619 = vmatpush1.xpose.msra.mxu0 0.0
    %2620 = vmatprep.subr.mxu0 0.0
    %2621 = vmatpush1.xpose.msra.mxu0 0.0
    %2622 = vmatprep.subr.mxu0 0.0
    %2623 = vmatpush1.xpose.msra.mxu0 0.0
    %2624 = vmatprep.subr.mxu0 0.0
    %2625 = vmatpush1.xpose.msra.mxu0 0.0
    %2626 = vmatprep.subr.mxu0 0.0
    %2627 = vmatpush1.xpose.msra.mxu0 0.0
    %2628 = vmatprep.subr.mxu0 0.0
    %2629 = vmatpush1.xpose.msra.mxu0 0.0
    %2630 = vmatprep.subr.mxu0 0.0
    %2631 = vmatpush1.xpose.msra.mxu0 0.0
    %2632 = vmatprep.subr.mxu0 0.0
    %2633 = vmatpush1.xpose.msra.mxu0 0.0
    %2634 = vmatprep.subr.mxu0 0.0
    %2635 = vmatpush1.xpose.msra.mxu0 0.0
    %2636 = vmatprep.subr.mxu0 0.0
    %2637 = vmatpush1.xpose.msra.mxu0 0.0
    %2638 = vmatprep.subr.mxu0 0.0
    %2639 = vmatpush1.xpose.msra.mxu0 0.0
    %2640 = vmatprep.subr.mxu0 0.0
    %2641 = vmatpush1.xpose.msra.mxu0 0.0
    %2642 = vmatprep.subr.mxu0 0.0
    %2643 = vmatpush1.xpose.msra.mxu0 0.0
    %2644 = vmatprep.subr.mxu0 0.0
    %2645 = vmatpush1.xpose.msra.mxu0 0.0
    %2646 = vmatprep.subr.mxu0 0.0
    %2647 = vmatpush1.xpose.msra.mxu0 0.0
    %2648 = vmatprep.subr.mxu0 0.0
    %2649 = vmatpush1.xpose.msra.mxu0 0.0
    %2650 = vmatprep.subr.mxu0 0.0
    %2651 = vmatpush1.xpose.msra.mxu0 0.0
    %2652 = vmatprep.subr.mxu0 0.0
    %2653 = vmatpush1.xpose.msra.mxu0 0.0
    %2654 = vmatprep.subr.mxu0 0.0
    %2655 = vmatpush1.xpose.msra.mxu0 0.0
    %2656 = vmatprep.subr.mxu0 0.0
    %2657 = vmatpush1.xpose.msra.mxu0 0.0
    %2658 = vmatprep.mubr.f32.mxu0 0.0
    %2659 = vmatmul.mubr.f32.gmra.mrb[0].mxu0 %v2590
    %v2660 = vpop.f32.mrb[0].mxu0
    %v2661 = vadd.f32 0.0, %v2660
    %v2662 = vpop.f32.mrb[0].mxu0
    %2663 = vdwg.mxu0
    %2664 = vrot.lane.b32.xlu0 %v2423, 104
    %v2665 = vpop.permute.xlu0 %2664
    %2666 = vrot.lane.b32.xlu0 %v2423, 72
    %v2667 = vpop.permute.xlu0 %2666
    %v2668 = vsel %vm150, %v2665, 0
    %v2670 = vsel %vm150, %v2667, 0
    %2672 = vmatprep.subr.mxu0 0.0
    %2673 = vmatpush1.xpose.msra.mxu0 %v2670
    %2674 = vmatprep.subr.mxu0 0.0
    %2675 = vmatpush1.xpose.msra.mxu0 0.0
    %2676 = vmatprep.subr.mxu0 0.0
    %2677 = vmatpush1.xpose.msra.mxu0 0.0
    %2678 = vmatprep.subr.mxu0 0.0
    %2679 = vmatpush1.xpose.msra.mxu0 0.0
    %2680 = vmatprep.subr.mxu0 0.0
    %2681 = vmatpush1.xpose.msra.mxu0 0.0
    %2682 = vmatprep.subr.mxu0 0.0
    %2683 = vmatpush1.xpose.msra.mxu0 0.0
    %2684 = vmatprep.subr.mxu0 0.0
    %2685 = vmatpush1.xpose.msra.mxu0 0.0
    %2686 = vmatprep.subr.mxu0 0.0
    %2687 = vmatpush1.xpose.msra.mxu0 0.0
    %2688 = vmatprep.subr.mxu0 0.0
    %2689 = vmatpush1.xpose.msra.mxu0 0.0
    %2690 = vmatprep.subr.mxu0 0.0
    %2691 = vmatpush1.xpose.msra.mxu0 0.0
    %2692 = vmatprep.subr.mxu0 0.0
    %2693 = vmatpush1.xpose.msra.mxu0 0.0
    %2694 = vmatprep.subr.mxu0 0.0
    %2695 = vmatpush1.xpose.msra.mxu0 0.0
    %2696 = vmatprep.subr.mxu0 0.0
    %2697 = vmatpush1.xpose.msra.mxu0 0.0
    %2698 = vmatprep.subr.mxu0 0.0
    %2699 = vmatpush1.xpose.msra.mxu0 0.0
    %2700 = vmatprep.subr.mxu0 0.0
    %2701 = vmatpush1.xpose.msra.mxu0 0.0
    %2702 = vmatprep.subr.mxu0 0.0
    %2703 = vmatpush1.xpose.msra.mxu0 0.0
    %2704 = vmatprep.subr.mxu0 0.0
    %2705 = vmatpush1.xpose.msra.mxu0 0.0
    %2706 = vmatprep.subr.mxu0 0.0
    %2707 = vmatpush1.xpose.msra.mxu0 0.0
    %2708 = vmatprep.subr.mxu0 0.0
    %2709 = vmatpush1.xpose.msra.mxu0 0.0
    %2710 = vmatprep.subr.mxu0 0.0
    %2711 = vmatpush1.xpose.msra.mxu0 0.0
    %2712 = vmatprep.subr.mxu0 0.0
    %2713 = vmatpush1.xpose.msra.mxu0 0.0
    %2714 = vmatprep.subr.mxu0 0.0
    %2715 = vmatpush1.xpose.msra.mxu0 0.0
    %2716 = vmatprep.subr.mxu0 0.0
    %2717 = vmatpush1.xpose.msra.mxu0 0.0
    %2718 = vmatprep.subr.mxu0 0.0
    %2719 = vmatpush1.xpose.msra.mxu0 0.0
    %2720 = vmatprep.subr.mxu0 0.0
    %2721 = vmatpush1.xpose.msra.mxu0 0.0
    %2722 = vmatprep.subr.mxu0 0.0
    %2723 = vmatpush1.xpose.msra.mxu0 0.0
    %2724 = vmatprep.subr.mxu0 0.0
    %2725 = vmatpush1.xpose.msra.mxu0 0.0
    %2726 = vmatprep.subr.mxu0 0.0
    %2727 = vmatpush1.xpose.msra.mxu0 0.0
    %2728 = vmatprep.subr.mxu0 0.0
    %2729 = vmatpush1.xpose.msra.mxu0 0.0
    %2730 = vmatprep.subr.mxu0 0.0
    %2731 = vmatpush1.xpose.msra.mxu0 0.0
    %2732 = vmatprep.subr.mxu0 0.0
    %2733 = vmatpush1.xpose.msra.mxu0 0.0
    %2734 = vmatprep.subr.mxu0 0.0
    %2735 = vmatpush1.xpose.msra.mxu0 0.0
    %2736 = vmatprep.mubr.f32.mxu0 0.0
    %2737 = vmatmul.mubr.f32.gmra.mrb[0].mxu0 %v2668
    %v2738 = vpop.f32.mrb[0].mxu0
    %v2739 = vadd.f32 0.0, %v2738
    %v2740 = vpop.f32.mrb[0].mxu0
    %2741 = vdwg.mxu0
    %v2742 = vadd.f32 %v2505, %v47
    %v2743 = vadd.f32 %v2583, %v47
    %v2744 = vadd.f32 %v2661, %v47
    %v2745 = vadd.f32 %v2739, %v47
    %v2746 = vsel %vm150, %v2742, -inf
    %2747 = vmax.xlane.f32.xlu0 %v2746
    %v2748 = vpop.xlane.xlu0 %2747
    %v2749 = vsel %vm150, %v2743, -inf
    %2750 = vmax.xlane.f32.xlu0 %v2749
    %v2751 = vpop.xlane.xlu0 %2750
    %v2752 = vsel %vm150, %v2744, -inf
    %2753 = vmax.xlane.f32.xlu0 %v2752
    %v2754 = vpop.xlane.xlu0 %2753
    %v2755 = vsel %vm150, %v2745, -inf
    %2756 = vmax.xlane.f32.xlu0 %v2755
    %v2757 = vpop.xlane.xlu0 %2756
    %v2758 = vsub.f32 %v2742, %v2748
    %v2759 = vsub.f32 %v2743, %v2751
    %v2760 = vsub.f32 %v2744, %v2754
    %v2761 = vsub.f32 %v2745, %v2757
    %v2762 = vmul.f32 %v2758, 1.442695
    %v2763 = vpow.pop %v2762
    %v2764 = vmul.f32 %v2759, 1.442695
    %v2765 = vpow.pop %v2764
    %v2766 = vmul.f32 %v2760, 1.442695
    %v2767 = vpow.pop %v2766
    %v2768 = vmul.f32 %v2761, 1.442695
    %v2769 = vpow.pop %v2768
    %v2770 = vsel %vm150, %v2763, 0.0
    %2771 = vadd.xlane.f32.xlu0 %v2770
    %v2772 = vpop.xlane.xlu0 %2771
    %v2773 = vsel %vm150, %v2765, 0.0
    %2774 = vadd.xlane.f32.xlu0 %v2773
    %v2775 = vpop.xlane.xlu0 %2774
    %v2776 = vsel %vm150, %v2767, 0.0
    %2777 = vadd.xlane.f32.xlu0 %v2776
    %v2778 = vpop.xlane.xlu0 %2777
    %v2779 = vsel %vm150, %v2769, 0.0
    %2780 = vadd.xlane.f32.xlu0 %v2779
    %v2781 = vpop.xlane.xlu0 %2780
    %v2782 = vrcp.pop %v2772
    %v2783 = vmul.f32 %v2763, %v2782
    %v2784 = vrcp.pop %v2775
    %v2785 = vmul.f32 %v2765, %v2784
    %v2786 = vrcp.pop %v2778
    %v2787 = vmul.f32 %v2767, %v2786
    %v2788 = vrcp.pop %v2781
    %v2789 = vmul.f32 %v2769, %v2788
    %2790 = vrot.lane.b32.xlu0 %v2423, 64
    %v2791 = vpop.permute.xlu0 %2790
    %v2794 = vsel %vm150, %v2783, 0
    %2796 = vmatprep.subr.mxu0 0.0
    %2797 = vmatpush1.msra.mxu0 %v2791
    %2798 = vmatprep.subr.mxu0 0.0
    %2799 = vmatpush1.msra.mxu0 0.0
    %2800 = vmatprep.subr.mxu0 0.0
    %2801 = vmatpush1.msra.mxu0 0.0
    %2802 = vmatprep.subr.mxu0 0.0
    %2803 = vmatpush1.msra.mxu0 0.0
    %2804 = vmatprep.subr.mxu0 0.0
    %2805 = vmatpush1.msra.mxu0 0.0
    %2806 = vmatprep.subr.mxu0 0.0
    %2807 = vmatpush1.msra.mxu0 0.0
    %2808 = vmatprep.subr.mxu0 0.0
    %2809 = vmatpush1.msra.mxu0 0.0
    %2810 = vmatprep.subr.mxu0 0.0
    %2811 = vmatpush1.msra.mxu0 0.0
    %2812 = vmatprep.subr.mxu0 0.0
    %2813 = vmatpush1.msra.mxu0 0.0
    %2814 = vmatprep.subr.mxu0 0.0
    %2815 = vmatpush1.msra.mxu0 0.0
    %2816 = vmatprep.subr.mxu0 0.0
    %2817 = vmatpush1.msra.mxu0 0.0
    %2818 = vmatprep.subr.mxu0 0.0
    %2819 = vmatpush1.msra.mxu0 0.0
    %2820 = vmatprep.subr.mxu0 0.0
    %2821 = vmatpush1.msra.mxu0 0.0
    %2822 = vmatprep.subr.mxu0 0.0
    %2823 = vmatpush1.msra.mxu0 0.0
    %2824 = vmatprep.subr.mxu0 0.0
    %2825 = vmatpush1.msra.mxu0 0.0
    %2826 = vmatprep.subr.mxu0 0.0
    %2827 = vmatpush1.msra.mxu0 0.0
    %2828 = vmatprep.subr.mxu0 0.0
    %2829 = vmatpush1.msra.mxu0 0.0
    %2830 = vmatprep.subr.mxu0 0.0
    %2831 = vmatpush1.msra.mxu0 0.0
    %2832 = vmatprep.subr.mxu0 0.0
    %2833 = vmatpush1.msra.mxu0 0.0
    %2834 = vmatprep.subr.mxu0 0.0
    %2835 = vmatpush1.msra.mxu0 0.0
    %2836 = vmatprep.subr.mxu0 0.0
    %2837 = vmatpush1.msra.mxu0 0.0
    %2838 = vmatprep.subr.mxu0 0.0
    %2839 = vmatpush1.msra.mxu0 0.0
    %2840 = vmatprep.subr.mxu0 0.0
    %2841 = vmatpush1.msra.mxu0 0.0
    %2842 = vmatprep.subr.mxu0 0.0
    %2843 = vmatpush1.msra.mxu0 0.0
    %2844 = vmatprep.subr.mxu0 0.0
    %2845 = vmatpush1.msra.mxu0 0.0
    %2846 = vmatprep.subr.mxu0 0.0
    %2847 = vmatpush1.msra.mxu0 0.0
    %2848 = vmatprep.subr.mxu0 0.0
    %2849 = vmatpush1.msra.mxu0 0.0
    %2850 = vmatprep.subr.mxu0 0.0
    %2851 = vmatpush1.msra.mxu0 0.0
    %2852 = vmatprep.subr.mxu0 0.0
    %2853 = vmatpush1.msra.mxu0 0.0
    %2854 = vmatprep.subr.mxu0 0.0
    %2855 = vmatpush1.msra.mxu0 0.0
    %2856 = vmatprep.subr.mxu0 0.0
    %2857 = vmatpush1.msra.mxu0 0.0
    %2858 = vmatprep.subr.mxu0 0.0
    %2859 = vmatpush1.msra.mxu0 0.0
    %2860 = vmatprep.mubr.f32.mxu0 0.0
    %2861 = vmatmul.mubr.f32.gmra.mrb[0].mxu0 %v2794
    %v2862 = vpop.f32.mrb[0].mxu0
    %v2863 = vadd.f32 0.0, %v2862
    %v2864 = vpop.f32.mrb[0].mxu0
    %2865 = vdwg.mxu0
    %2866 = vrot.lane.b32.xlu0 %v2423, 56
    %v2867 = vpop.permute.xlu0 %2866
    %v2870 = vsel %vm150, %v2785, 0
    %2872 = vmatprep.subr.mxu0 0.0
    %2873 = vmatpush1.msra.mxu0 %v2867
    %2874 = vmatprep.subr.mxu0 0.0
    %2875 = vmatpush1.msra.mxu0 0.0
    %2876 = vmatprep.subr.mxu0 0.0
    %2877 = vmatpush1.msra.mxu0 0.0
    %2878 = vmatprep.subr.mxu0 0.0
    %2879 = vmatpush1.msra.mxu0 0.0
    %2880 = vmatprep.subr.mxu0 0.0
    %2881 = vmatpush1.msra.mxu0 0.0
    %2882 = vmatprep.subr.mxu0 0.0
    %2883 = vmatpush1.msra.mxu0 0.0
    %2884 = vmatprep.subr.mxu0 0.0
    %2885 = vmatpush1.msra.mxu0 0.0
    %2886 = vmatprep.subr.mxu0 0.0
    %2887 = vmatpush1.msra.mxu0 0.0
    %2888 = vmatprep.subr.mxu0 0.0
    %2889 = vmatpush1.msra.mxu0 0.0
    %2890 = vmatprep.subr.mxu0 0.0
    %2891 = vmatpush1.msra.mxu0 0.0
    %2892 = vmatprep.subr.mxu0 0.0
    %2893 = vmatpush1.msra.mxu0 0.0
    %2894 = vmatprep.subr.mxu0 0.0
    %2895 = vmatpush1.msra.mxu0 0.0
    %2896 = vmatprep.subr.mxu0 0.0
    %2897 = vmatpush1.msra.mxu0 0.0
    %2898 = vmatprep.subr.mxu0 0.0
    %2899 = vmatpush1.msra.mxu0 0.0
    %2900 = vmatprep.subr.mxu0 0.0
    %2901 = vmatpush1.msra.mxu0 0.0
    %2902 = vmatprep.subr.mxu0 0.0
    %2903 = vmatpush1.msra.mxu0 0.0
    %2904 = vmatprep.subr.mxu0 0.0
    %2905 = vmatpush1.msra.mxu0 0.0
    %2906 = vmatprep.subr.mxu0 0.0
    %2907 = vmatpush1.msra.mxu0 0.0
    %2908 = vmatprep.subr.mxu0 0.0
    %2909 = vmatpush1.msra.mxu0 0.0
    %2910 = vmatprep.subr.mxu0 0.0
    %2911 = vmatpush1.msra.mxu0 0.0
    %2912 = vmatprep.subr.mxu0 0.0
    %2913 = vmatpush1.msra.mxu0 0.0
    %2914 = vmatprep.subr.mxu0 0.0
    %2915 = vmatpush1.msra.mxu0 0.0
    %2916 = vmatprep.subr.mxu0 0.0
    %2917 = vmatpush1.msra.mxu0 0.0
    %2918 = vmatprep.subr.mxu0 0.0
    %2919 = vmatpush1.msra.mxu0 0.0
    %2920 = vmatprep.subr.mxu0 0.0
    %2921 = vmatpush1.msra.mxu0 0.0
    %2922 = vmatprep.subr.mxu0 0.0
    %2923 = vmatpush1.msra.mxu0 0.0
    %2924 = vmatprep.subr.mxu0 0.0
    %2925 = vmatpush1.msra.mxu0 0.0
    %2926 = vmatprep.subr.mxu0 0.0
    %2927 = vmatpush1.msra.mxu0 0.0
    %2928 = vmatprep.subr.mxu0 0.0
    %2929 = vmatpush1.msra.mxu0 0.0
    %2930 = vmatprep.subr.mxu0 0.0
    %2931 = vmatpush1.msra.mxu0 0.0
    %2932 = vmatprep.subr.mxu0 0.0
    %2933 = vmatpush1.msra.mxu0 0.0
    %2934 = vmatprep.subr.mxu0 0.0
    %2935 = vmatpush1.msra.mxu0 0.0
    %2936 = vmatprep.mubr.f32.mxu0 0.0
    %2937 = vmatmul.mubr.f32.gmra.mrb[0].mxu0 %v2870
    %v2938 = vpop.f32.mrb[0].mxu0
    %v2939 = vadd.f32 0.0, %v2938
    %v2940 = vpop.f32.mrb[0].mxu0
    %2941 = vdwg.mxu0
    %v2943 = vsel %vm150, %v2939, 0
    %2945 = vmatprep.subr.mxu0 0.0
    %2946 = vmatpush1.msra.mxu0 %v2338
    %2947 = vmatprep.subr.mxu0 0.0
    %2948 = vmatpush1.msra.mxu0 0.0
    %2949 = vmatprep.subr.mxu0 0.0
    %2950 = vmatpush1.msra.mxu0 0.0
    %2951 = vmatprep.subr.mxu0 0.0
    %2952 = vmatpush1.msra.mxu0 0.0
    %2953 = vmatprep.subr.mxu0 0.0
    %2954 = vmatpush1.msra.mxu0 0.0
    %2955 = vmatprep.subr.mxu0 0.0
    %2956 = vmatpush1.msra.mxu0 0.0
    %2957 = vmatprep.subr.mxu0 0.0
    %2958 = vmatpush1.msra.mxu0 0.0
    %2959 = vmatprep.subr.mxu0 0.0
    %2960 = vmatpush1.msra.mxu0 0.0
    %2961 = vmatprep.subr.mxu0 0.0
    %2962 = vmatpush1.msra.mxu0 0.0
    %2963 = vmatprep.subr.mxu0 0.0
    %2964 = vmatpush1.msra.mxu0 0.0
    %2965 = vmatprep.subr.mxu0 0.0
    %2966 = vmatpush1.msra.mxu0 0.0
    %2967 = vmatprep.subr.mxu0 0.0
    %2968 = vmatpush1.msra.mxu0 0.0
    %2969 = vmatprep.subr.mxu0 0.0
    %2970 = vmatpush1.msra.mxu0 0.0
    %2971 = vmatprep.subr.mxu0 0.0
    %2972 = vmatpush1.msra.mxu0 0.0
    %2973 = vmatprep.subr.mxu0 0.0
    %2974 = vmatpush1.msra.mxu0 0.0
    %2975 = vmatprep.subr.mxu0 0.0
    %2976 = vmatpush1.msra.mxu0 0.0
    %2977 = vmatprep.subr.mxu0 0.0
    %2978 = vmatpush1.msra.mxu0 0.0
    %2979 = vmatprep.subr.mxu0 0.0
    %2980 = vmatpush1.msra.mxu0 0.0
    %2981 = vmatprep.subr.mxu0 0.0
    %2982 = vmatpush1.msra.mxu0 0.0
    %2983 = vmatprep.subr.mxu0 0.0
    %2984 = vmatpush1.msra.mxu0 0.0
    %2985 = vmatprep.subr.mxu0 0.0
    %2986 = vmatpush1.msra.mxu0 0.0
    %2987 = vmatprep.subr.mxu0 0.0
    %2988 = vmatpush1.msra.mxu0 0.0
    %2989 = vmatprep.subr.mxu0 0.0
    %2990 = vmatpush1.msra.mxu0 0.0
    %2991 = vmatprep.subr.mxu0 0.0
    %2992 = vmatpush1.msra.mxu0 0.0
    %2993 = vmatprep.subr.mxu0 0.0
    %2994 = vmatpush1.msra.mxu0 0.0
    %2995 = vmatprep.subr.mxu0 0.0
    %2996 = vmatpush1.msra.mxu0 0.0
    %2997 = vmatprep.subr.mxu0 0.0
    %2998 = vmatpush1.msra.mxu0 0.0
    %2999 = vmatprep.subr.mxu0 0.0
    %3000 = vmatpush1.msra.mxu0 0.0
    %3001 = vmatprep.subr.mxu0 0.0
    %3002 = vmatpush1.msra.mxu0 0.0
    %3003 = vmatprep.subr.mxu0 0.0
    %3004 = vmatpush1.msra.mxu0 0.0
    %3005 = vmatprep.subr.mxu0 0.0
    %3006 = vmatpush1.msra.mxu0 0.0
    %3007 = vmatprep.subr.mxu0 0.0
    %3008 = vmatpush1.msra.mxu0 0.0
    %3009 = vmatprep.mubr.f32.mxu0 0.0
    %3010 = vmatmul.mubr.f32.gmra.mrb[0].mxu0 %v2943
    %v3011 = vpop.f32.mrb[0].mxu0
    %v3012 = vadd.f32 0.0, %v3011
    %v3013 = vpop.f32.mrb[0].mxu0
    %3014 = vdwg.mxu0
    %v3016 = vsel %vm150, %v2863, 0
    %3018 = vmatprep.subr.mxu0 0.0
    %3019 = vmatpush1.msra.mxu0 %v2337
    %3020 = vmatprep.subr.mxu0 0.0
    %3021 = vmatpush1.msra.mxu0 0.0
    %3022 = vmatprep.subr.mxu0 0.0
    %3023 = vmatpush1.msra.mxu0 0.0
    %3024 = vmatprep.subr.mxu0 0.0
    %3025 = vmatpush1.msra.mxu0 0.0
    %3026 = vmatprep.subr.mxu0 0.0
    %3027 = vmatpush1.msra.mxu0 0.0
    %3028 = vmatprep.subr.mxu0 0.0
    %3029 = vmatpush1.msra.mxu0 0.0
    %3030 = vmatprep.subr.mxu0 0.0
    %3031 = vmatpush1.msra.mxu0 0.0
    %3032 = vmatprep.subr.mxu0 0.0
    %3033 = vmatpush1.msra.mxu0 0.0
    %3034 = vmatprep.subr.mxu0 0.0
    %3035 = vmatpush1.msra.mxu0 0.0
    %3036 = vmatprep.subr.mxu0 0.0
    %3037 = vmatpush1.msra.mxu0 0.0
    %3038 = vmatprep.subr.mxu0 0.0
    %3039 = vmatpush1.msra.mxu0 0.0
    %3040 = vmatprep.subr.mxu0 0.0
    %3041 = vmatpush1.msra.mxu0 0.0
    %3042 = vmatprep.subr.mxu0 0.0
    %3043 = vmatpush1.msra.mxu0 0.0
    %3044 = vmatprep.subr.mxu0 0.0
    %3045 = vmatpush1.msra.mxu0 0.0
    %3046 = vmatprep.subr.mxu0 0.0
    %3047 = vmatpush1.msra.mxu0 0.0
    %3048 = vmatprep.subr.mxu0 0.0
    %3049 = vmatpush1.msra.mxu0 0.0
    %3050 = vmatprep.subr.mxu0 0.0
    %3051 = vmatpush1.msra.mxu0 0.0
    %3052 = vmatprep.subr.mxu0 0.0
    %3053 = vmatpush1.msra.mxu0 0.0
    %3054 = vmatprep.subr.mxu0 0.0
    %3055 = vmatpush1.msra.mxu0 0.0
    %3056 = vmatprep.subr.mxu0 0.0
    %3057 = vmatpush1.msra.mxu0 0.0
    %3058 = vmatprep.subr.mxu0 0.0
    %3059 = vmatpush1.msra.mxu0 0.0
    %3060 = vmatprep.subr.mxu0 0.0
    %3061 = vmatpush1.msra.mxu0 0.0
    %3062 = vmatprep.subr.mxu0 0.0
    %3063 = vmatpush1.msra.mxu0 0.0
    %3064 = vmatprep.subr.mxu0 0.0
    %3065 = vmatpush1.msra.mxu0 0.0
    %3066 = vmatprep.subr.mxu0 0.0
    %3067 = vmatpush1.msra.mxu0 0.0
    %3068 = vmatprep.subr.mxu0 0.0
    %3069 = vmatpush1.msra.mxu0 0.0
    %3070 = vmatprep.subr.mxu0 0.0
    %3071 = vmatpush1.msra.mxu0 0.0
    %3072 = vmatprep.subr.mxu0 0.0
    %3073 = vmatpush1.msra.mxu0 0.0
    %3074 = vmatprep.subr.mxu0 0.0
    %3075 = vmatpush1.msra.mxu0 0.0
    %3076 = vmatprep.subr.mxu0 0.0
    %3077 = vmatpush1.msra.mxu0 0.0
    %3078 = vmatprep.subr.mxu0 0.0
    %3079 = vmatpush1.msra.mxu0 0.0
    %3080 = vmatprep.subr.mxu0 0.0
    %3081 = vmatpush1.msra.mxu0 0.0
    %3082 = vmatprep.mubr.f32.mxu0 0.0
    %3083 = vmatmul.mubr.f32.gmra.mrb[0].mxu0 %v3016
    %v3084 = vpop.f32.mrb[0].mxu0
    %v3085 = vadd.f32 %v3012, %v3084
    %v3086 = vpop.f32.mrb[0].mxu0
    %3087 = vdwg.mxu0
    %3088 = vrot.lane.b32.xlu0 %v2423, 48
    %v3089 = vpop.permute.xlu0 %3088
    %v3092 = vsel %vm150, %v2787, 0
    %3094 = vmatprep.subr.mxu0 0.0
    %3095 = vmatpush1.msra.mxu0 %v3089
    %3096 = vmatprep.subr.mxu0 0.0
    %3097 = vmatpush1.msra.mxu0 0.0
    %3098 = vmatprep.subr.mxu0 0.0
    %3099 = vmatpush1.msra.mxu0 0.0
    %3100 = vmatprep.subr.mxu0 0.0
    %3101 = vmatpush1.msra.mxu0 0.0
    %3102 = vmatprep.subr.mxu0 0.0
    %3103 = vmatpush1.msra.mxu0 0.0
    %3104 = vmatprep.subr.mxu0 0.0
    %3105 = vmatpush1.msra.mxu0 0.0
    %3106 = vmatprep.subr.mxu0 0.0
    %3107 = vmatpush1.msra.mxu0 0.0
    %3108 = vmatprep.subr.mxu0 0.0
    %3109 = vmatpush1.msra.mxu0 0.0
    %3110 = vmatprep.subr.mxu0 0.0
    %3111 = vmatpush1.msra.mxu0 0.0
    %3112 = vmatprep.subr.mxu0 0.0
    %3113 = vmatpush1.msra.mxu0 0.0
    %3114 = vmatprep.subr.mxu0 0.0
    %3115 = vmatpush1.msra.mxu0 0.0
    %3116 = vmatprep.subr.mxu0 0.0
    %3117 = vmatpush1.msra.mxu0 0.0
    %3118 = vmatprep.subr.mxu0 0.0
    %3119 = vmatpush1.msra.mxu0 0.0
    %3120 = vmatprep.subr.mxu0 0.0
    %3121 = vmatpush1.msra.mxu0 0.0
    %3122 = vmatprep.subr.mxu0 0.0
    %3123 = vmatpush1.msra.mxu0 0.0
    %3124 = vmatprep.subr.mxu0 0.0
    %3125 = vmatpush1.msra.mxu0 0.0
    %3126 = vmatprep.subr.mxu0 0.0
    %3127 = vmatpush1.msra.mxu0 0.0
    %3128 = vmatprep.subr.mxu0 0.0
    %3129 = vmatpush1.msra.mxu0 0.0
    %3130 = vmatprep.subr.mxu0 0.0
    %3131 = vmatpush1.msra.mxu0 0.0
    %3132 = vmatprep.subr.mxu0 0.0
    %3133 = vmatpush1.msra.mxu0 0.0
    %3134 = vmatprep.subr.mxu0 0.0
    %3135 = vmatpush1.msra.mxu0 0.0
    %3136 = vmatprep.subr.mxu0 0.0
    %3137 = vmatpush1.msra.mxu0 0.0
    %3138 = vmatprep.subr.mxu0 0.0
    %3139 = vmatpush1.msra.mxu0 0.0
    %3140 = vmatprep.subr.mxu0 0.0
    %3141 = vmatpush1.msra.mxu0 0.0
    %3142 = vmatprep.subr.mxu0 0.0
    %3143 = vmatpush1.msra.mxu0 0.0
    %3144 = vmatprep.subr.mxu0 0.0
    %3145 = vmatpush1.msra.mxu0 0.0
    %3146 = vmatprep.subr.mxu0 0.0
    %3147 = vmatpush1.msra.mxu0 0.0
    %3148 = vmatprep.subr.mxu0 0.0
    %3149 = vmatpush1.msra.mxu0 0.0
    %3150 = vmatprep.subr.mxu0 0.0
    %3151 = vmatpush1.msra.mxu0 0.0
    %3152 = vmatprep.subr.mxu0 0.0
    %3153 = vmatpush1.msra.mxu0 0.0
    %3154 = vmatprep.subr.mxu0 0.0
    %3155 = vmatpush1.msra.mxu0 0.0
    %3156 = vmatprep.subr.mxu0 0.0
    %3157 = vmatpush1.msra.mxu0 0.0
    %3158 = vmatprep.mubr.f32.mxu0 0.0
    %3159 = vmatmul.mubr.f32.gmra.mrb[0].mxu0 %v3092
    %v3160 = vpop.f32.mrb[0].mxu0
    %v3161 = vadd.f32 0.0, %v3160
    %v3162 = vpop.f32.mrb[0].mxu0
    %3163 = vdwg.mxu0
    %v3165 = vsel %vm150, %v3161, 0
    %3167 = vmatprep.subr.mxu0 0.0
    %3168 = vmatpush1.msra.mxu0 %v2339
    %3169 = vmatprep.subr.mxu0 0.0
    %3170 = vmatpush1.msra.mxu0 0.0
    %3171 = vmatprep.subr.mxu0 0.0
    %3172 = vmatpush1.msra.mxu0 0.0
    %3173 = vmatprep.subr.mxu0 0.0
    %3174 = vmatpush1.msra.mxu0 0.0
    %3175 = vmatprep.subr.mxu0 0.0
    %3176 = vmatpush1.msra.mxu0 0.0
    %3177 = vmatprep.subr.mxu0 0.0
    %3178 = vmatpush1.msra.mxu0 0.0
    %3179 = vmatprep.subr.mxu0 0.0
    %3180 = vmatpush1.msra.mxu0 0.0
    %3181 = vmatprep.subr.mxu0 0.0
    %3182 = vmatpush1.msra.mxu0 0.0
    %3183 = vmatprep.subr.mxu0 0.0
    %3184 = vmatpush1.msra.mxu0 0.0
    %3185 = vmatprep.subr.mxu0 0.0
    %3186 = vmatpush1.msra.mxu0 0.0
    %3187 = vmatprep.subr.mxu0 0.0
    %3188 = vmatpush1.msra.mxu0 0.0
    %3189 = vmatprep.subr.mxu0 0.0
    %3190 = vmatpush1.msra.mxu0 0.0
    %3191 = vmatprep.subr.mxu0 0.0
    %3192 = vmatpush1.msra.mxu0 0.0
    %3193 = vmatprep.subr.mxu0 0.0
    %3194 = vmatpush1.msra.mxu0 0.0
    %3195 = vmatprep.subr.mxu0 0.0
    %3196 = vmatpush1.msra.mxu0 0.0
    %3197 = vmatprep.subr.mxu0 0.0
    %3198 = vmatpush1.msra.mxu0 0.0
    %3199 = vmatprep.subr.mxu0 0.0
    %3200 = vmatpush1.msra.mxu0 0.0
    %3201 = vmatprep.subr.mxu0 0.0
    %3202 = vmatpush1.msra.mxu0 0.0
    %3203 = vmatprep.subr.mxu0 0.0
    %3204 = vmatpush1.msra.mxu0 0.0
    %3205 = vmatprep.subr.mxu0 0.0
    %3206 = vmatpush1.msra.mxu0 0.0
    %3207 = vmatprep.subr.mxu0 0.0
    %3208 = vmatpush1.msra.mxu0 0.0
    %3209 = vmatprep.subr.mxu0 0.0
    %3210 = vmatpush1.msra.mxu0 0.0
    %3211 = vmatprep.subr.mxu0 0.0
    %3212 = vmatpush1.msra.mxu0 0.0
    %3213 = vmatprep.subr.mxu0 0.0
    %3214 = vmatpush1.msra.mxu0 0.0
    %3215 = vmatprep.subr.mxu0 0.0
    %3216 = vmatpush1.msra.mxu0 0.0
    %3217 = vmatprep.subr.mxu0 0.0
    %3218 = vmatpush1.msra.mxu0 0.0
    %3219 = vmatprep.subr.mxu0 0.0
    %3220 = vmatpush1.msra.mxu0 0.0
    %3221 = vmatprep.subr.mxu0 0.0
    %3222 = vmatpush1.msra.mxu0 0.0
    %3223 = vmatprep.subr.mxu0 0.0
    %3224 = vmatpush1.msra.mxu0 0.0
    %3225 = vmatprep.subr.mxu0 0.0
    %3226 = vmatpush1.msra.mxu0 0.0
    %3227 = vmatprep.subr.mxu0 0.0
    %3228 = vmatpush1.msra.mxu0 0.0
    %3229 = vmatprep.subr.mxu0 0.0
    %3230 = vmatpush1.msra.mxu0 0.0
    %3231 = vmatprep.mubr.f32.mxu0 0.0
    %3232 = vmatmul.mubr.f32.gmra.mrb[0].mxu0 %v3165
    %v3233 = vpop.f32.mrb[0].mxu0
    %v3234 = vadd.f32 0.0, %v3233
    %v3235 = vpop.f32.mrb[0].mxu0
    %3236 = vdwg.mxu0
    %v3237 = vadd.f32 %v3085, %v3234
    %3238 = vrot.lane.b32.xlu0 %v2423, 40
    %v3239 = vpop.permute.xlu0 %3238
    %v3242 = vsel %vm150, %v2789, 0
    %3244 = vmatprep.subr.mxu0 0.0
    %3245 = vmatpush1.msra.mxu0 %v3239
    %3246 = vmatprep.subr.mxu0 0.0
    %3247 = vmatpush1.msra.mxu0 0.0
    %3248 = vmatprep.subr.mxu0 0.0
    %3249 = vmatpush1.msra.mxu0 0.0
    %3250 = vmatprep.subr.mxu0 0.0
    %3251 = vmatpush1.msra.mxu0 0.0
    %3252 = vmatprep.subr.mxu0 0.0
    %3253 = vmatpush1.msra.mxu0 0.0
    %3254 = vmatprep.subr.mxu0 0.0
    %3255 = vmatpush1.msra.mxu0 0.0
    %3256 = vmatprep.subr.mxu0 0.0
    %3257 = vmatpush1.msra.mxu0 0.0
    %3258 = vmatprep.subr.mxu0 0.0
    %3259 = vmatpush1.msra.mxu0 0.0
    %3260 = vmatprep.subr.mxu0 0.0
    %3261 = vmatpush1.msra.mxu0 0.0
    %3262 = vmatprep.subr.mxu0 0.0
    %3263 = vmatpush1.msra.mxu0 0.0
    %3264 = vmatprep.subr.mxu0 0.0
    %3265 = vmatpush1.msra.mxu0 0.0
    %3266 = vmatprep.subr.mxu0 0.0
    %3267 = vmatpush1.msra.mxu0 0.0
    %3268 = vmatprep.subr.mxu0 0.0
    %3269 = vmatpush1.msra.mxu0 0.0
    %3270 = vmatprep.subr.mxu0 0.0
    %3271 = vmatpush1.msra.mxu0 0.0
    %3272 = vmatprep.subr.mxu0 0.0
    %3273 = vmatpush1.msra.mxu0 0.0
    %3274 = vmatprep.subr.mxu0 0.0
    %3275 = vmatpush1.msra.mxu0 0.0
    %3276 = vmatprep.subr.mxu0 0.0
    %3277 = vmatpush1.msra.mxu0 0.0
    %3278 = vmatprep.subr.mxu0 0.0
    %3279 = vmatpush1.msra.mxu0 0.0
    %3280 = vmatprep.subr.mxu0 0.0
    %3281 = vmatpush1.msra.mxu0 0.0
    %3282 = vmatprep.subr.mxu0 0.0
    %3283 = vmatpush1.msra.mxu0 0.0
    %3284 = vmatprep.subr.mxu0 0.0
    %3285 = vmatpush1.msra.mxu0 0.0
    %3286 = vmatprep.subr.mxu0 0.0
    %3287 = vmatpush1.msra.mxu0 0.0
    %3288 = vmatprep.subr.mxu0 0.0
    %3289 = vmatpush1.msra.mxu0 0.0
    %3290 = vmatprep.subr.mxu0 0.0
    %3291 = vmatpush1.msra.mxu0 0.0
    %3292 = vmatprep.subr.mxu0 0.0
    %3293 = vmatpush1.msra.mxu0 0.0
    %3294 = vmatprep.subr.mxu0 0.0
    %3295 = vmatpush1.msra.mxu0 0.0
    %3296 = vmatprep.subr.mxu0 0.0
    %3297 = vmatpush1.msra.mxu0 0.0
    %3298 = vmatprep.subr.mxu0 0.0
    %3299 = vmatpush1.msra.mxu0 0.0
    %3300 = vmatprep.subr.mxu0 0.0
    %3301 = vmatpush1.msra.mxu0 0.0
    %3302 = vmatprep.subr.mxu0 0.0
    %3303 = vmatpush1.msra.mxu0 0.0
    %3304 = vmatprep.subr.mxu0 0.0
    %3305 = vmatpush1.msra.mxu0 0.0
    %3306 = vmatprep.subr.mxu0 0.0
    %3307 = vmatpush1.msra.mxu0 0.0
    %3308 = vmatprep.mubr.f32.mxu0 0.0
    %3309 = vmatmul.mubr.f32.gmra.mrb[0].mxu0 %v3242
    %v3310 = vpop.f32.mrb[0].mxu0
    %v3311 = vadd.f32 0.0, %v3310
    %v3312 = vpop.f32.mrb[0].mxu0
    %3313 = vdwg.mxu0
    %v3315 = vsel %vm150, %v3311, 0
    %3317 = vmatprep.subr.mxu0 0.0
    %3318 = vmatpush1.msra.mxu0 %v2340
    %3319 = vmatprep.subr.mxu0 0.0
    %3320 = vmatpush1.msra.mxu0 0.0
    %3321 = vmatprep.subr.mxu0 0.0
    %3322 = vmatpush1.msra.mxu0 0.0
    %3323 = vmatprep.subr.mxu0 0.0
    %3324 = vmatpush1.msra.mxu0 0.0
    %3325 = vmatprep.subr.mxu0 0.0
    %3326 = vmatpush1.msra.mxu0 0.0
    %3327 = vmatprep.subr.mxu0 0.0
    %3328 = vmatpush1.msra.mxu0 0.0
    %3329 = vmatprep.subr.mxu0 0.0
    %3330 = vmatpush1.msra.mxu0 0.0
    %3331 = vmatprep.subr.mxu0 0.0
    %3332 = vmatpush1.msra.mxu0 0.0
    %3333 = vmatprep.subr.mxu0 0.0
    %3334 = vmatpush1.msra.mxu0 0.0
    %3335 = vmatprep.subr.mxu0 0.0
    %3336 = vmatpush1.msra.mxu0 0.0
    %3337 = vmatprep.subr.mxu0 0.0
    %3338 = vmatpush1.msra.mxu0 0.0
    %3339 = vmatprep.subr.mxu0 0.0
    %3340 = vmatpush1.msra.mxu0 0.0
    %3341 = vmatprep.subr.mxu0 0.0
    %3342 = vmatpush1.msra.mxu0 0.0
    %3343 = vmatprep.subr.mxu0 0.0
    %3344 = vmatpush1.msra.mxu0 0.0
    %3345 = vmatprep.subr.mxu0 0.0
    %3346 = vmatpush1.msra.mxu0 0.0
    %3347 = vmatprep.subr.mxu0 0.0
    %3348 = vmatpush1.msra.mxu0 0.0
    %3349 = vmatprep.subr.mxu0 0.0
    %3350 = vmatpush1.msra.mxu0 0.0
    %3351 = vmatprep.subr.mxu0 0.0
    %3352 = vmatpush1.msra.mxu0 0.0
    %3353 = vmatprep.subr.mxu0 0.0
    %3354 = vmatpush1.msra.mxu0 0.0
    %3355 = vmatprep.subr.mxu0 0.0
    %3356 = vmatpush1.msra.mxu0 0.0
    %3357 = vmatprep.subr.mxu0 0.0
    %3358 = vmatpush1.msra.mxu0 0.0
    %3359 = vmatprep.subr.mxu0 0.0
    %3360 = vmatpush1.msra.mxu0 0.0
    %3361 = vmatprep.subr.mxu0 0.0
    %3362 = vmatpush1.msra.mxu0 0.0
    %3363 = vmatprep.subr.mxu0 0.0
    %3364 = vmatpush1.msra.mxu0 0.0
    %3365 = vmatprep.subr.mxu0 0.0
    %3366 = vmatpush1.msra.mxu0 0.0
    %3367 = vmatprep.subr.mxu0 0.0
    %3368 = vmatpush1.msra.mxu0 0.0
    %3369 = vmatprep.subr.mxu0 0.0
    %3370 = vmatpush1.msra.mxu0 0.0
    %3371 = vmatprep.subr.mxu0 0.0
    %3372 = vmatpush1.msra.mxu0 0.0
    %3373 = vmatprep.subr.mxu0 0.0
    %3374 = vmatpush1.msra.mxu0 0.0
    %3375 = vmatprep.subr.mxu0 0.0
    %3376 = vmatpush1.msra.mxu0 0.0
    %3377 = vmatprep.subr.mxu0 0.0
    %3378 = vmatpush1.msra.mxu0 0.0
    %3379 = vmatprep.subr.mxu0 0.0
    %3380 = vmatpush1.msra.mxu0 0.0
    %3381 = vmatprep.mubr.f32.mxu0 0.0
    %3382 = vmatmul.mubr.f32.gmra.mrb[0].mxu0 %v3315
    %v3383 = vpop.f32.mrb[0].mxu0
    %v3384 = vadd.f32 0.0, %v3383
    %v3385 = vpop.f32.mrb[0].mxu0
    %3386 = vdwg.mxu0
    %v3387 = vadd.f32 %v3237, %v3384
    %3389 = vrot.lane.b32.xlu0 %v2428, 96
    %v3390 = vpop.permute.xlu0 %3389
    %v3391 = vsel %vm150, %v2428, 0
    %v3393 = vsel %vm150, %v3390, 0
    %3395 = vmatprep.subr.mxu0 0.0
    %3396 = vmatpush1.xpose.msra.mxu0 %v3393
    %3397 = vmatprep.subr.mxu0 0.0
    %3398 = vmatpush1.xpose.msra.mxu0 0.0
    %3399 = vmatprep.subr.mxu0 0.0
    %3400 = vmatpush1.xpose.msra.mxu0 0.0
    %3401 = vmatprep.subr.mxu0 0.0
    %3402 = vmatpush1.xpose.msra.mxu0 0.0
    %3403 = vmatprep.subr.mxu0 0.0
    %3404 = vmatpush1.xpose.msra.mxu0 0.0
    %3405 = vmatprep.subr.mxu0 0.0
    %3406 = vmatpush1.xpose.msra.mxu0 0.0
    %3407 = vmatprep.subr.mxu0 0.0
    %3408 = vmatpush1.xpose.msra.mxu0 0.0
    %3409 = vmatprep.subr.mxu0 0.0
    %3410 = vmatpush1.xpose.msra.mxu0 0.0
    %3411 = vmatprep.subr.mxu0 0.0
    %3412 = vmatpush1.xpose.msra.mxu0 0.0
    %3413 = vmatprep.subr.mxu0 0.0
    %3414 = vmatpush1.xpose.msra.mxu0 0.0
    %3415 = vmatprep.subr.mxu0 0.0
    %3416 = vmatpush1.xpose.msra.mxu0 0.0
    %3417 = vmatprep.subr.mxu0 0.0
    %3418 = vmatpush1.xpose.msra.mxu0 0.0
    %3419 = vmatprep.subr.mxu0 0.0
    %3420 = vmatpush1.xpose.msra.mxu0 0.0
    %3421 = vmatprep.subr.mxu0 0.0
    %3422 = vmatpush1.xpose.msra.mxu0 0.0
    %3423 = vmatprep.subr.mxu0 0.0
    %3424 = vmatpush1.xpose.msra.mxu0 0.0
    %3425 = vmatprep.subr.mxu0 0.0
    %3426 = vmatpush1.xpose.msra.mxu0 0.0
    %3427 = vmatprep.subr.mxu0 0.0
    %3428 = vmatpush1.xpose.msra.mxu0 0.0
    %3429 = vmatprep.subr.mxu0 0.0
    %3430 = vmatpush1.xpose.msra.mxu0 0.0
    %3431 = vmatprep.subr.mxu0 0.0
    %3432 = vmatpush1.xpose.msra.mxu0 0.0
    %3433 = vmatprep.subr.mxu0 0.0
    %3434 = vmatpush1.xpose.msra.mxu0 0.0
    %3435 = vmatprep.subr.mxu0 0.0
    %3436 = vmatpush1.xpose.msra.mxu0 0.0
    %3437 = vmatprep.subr.mxu0 0.0
    %3438 = vmatpush1.xpose.msra.mxu0 0.0
    %3439 = vmatprep.subr.mxu0 0.0
    %3440 = vmatpush1.xpose.msra.mxu0 0.0
    %3441 = vmatprep.subr.mxu0 0.0
    %3442 = vmatpush1.xpose.msra.mxu0 0.0
    %3443 = vmatprep.subr.mxu0 0.0
    %3444 = vmatpush1.xpose.msra.mxu0 0.0
    %3445 = vmatprep.subr.mxu0 0.0
    %3446 = vmatpush1.xpose.msra.mxu0 0.0
    %3447 = vmatprep.subr.mxu0 0.0
    %3448 = vmatpush1.xpose.msra.mxu0 0.0
    %3449 = vmatprep.subr.mxu0 0.0
    %3450 = vmatpush1.xpose.msra.mxu0 0.0
    %3451 = vmatprep.subr.mxu0 0.0
    %3452 = vmatpush1.xpose.msra.mxu0 0.0
    %3453 = vmatprep.subr.mxu0 0.0
    %3454 = vmatpush1.xpose.msra.mxu0 0.0
    %3455 = vmatprep.subr.mxu0 0.0
    %3456 = vmatpush1.xpose.msra.mxu0 0.0
    %3457 = vmatprep.subr.mxu0 0.0
    %3458 = vmatpush1.xpose.msra.mxu0 0.0
    %3459 = vmatprep.mubr.f32.mxu0 0.0
    %3460 = vmatmul.mubr.f32.gmra.mrb[0].mxu0 %v3391
    %v3461 = vpop.f32.mrb[0].mxu0
    %v3462 = vadd.f32 0.0, %v3461
    %v3463 = vpop.f32.mrb[0].mxu0
    %3464 = vdwg.mxu0
    %3465 = vrot.lane.b32.xlu0 %v2428, 120
    %v3466 = vpop.permute.xlu0 %3465
    %3467 = vrot.lane.b32.xlu0 %v2428, 88
    %v3468 = vpop.permute.xlu0 %3467
    %v3469 = vsel %vm150, %v3466, 0
    %v3471 = vsel %vm150, %v3468, 0
    %3473 = vmatprep.subr.mxu0 0.0
    %3474 = vmatpush1.xpose.msra.mxu0 %v3471
    %3475 = vmatprep.subr.mxu0 0.0
    %3476 = vmatpush1.xpose.msra.mxu0 0.0
    %3477 = vmatprep.subr.mxu0 0.0
    %3478 = vmatpush1.xpose.msra.mxu0 0.0
    %3479 = vmatprep.subr.mxu0 0.0
    %3480 = vmatpush1.xpose.msra.mxu0 0.0
    %3481 = vmatprep.subr.mxu0 0.0
    %3482 = vmatpush1.xpose.msra.mxu0 0.0
    %3483 = vmatprep.subr.mxu0 0.0
    %3484 = vmatpush1.xpose.msra.mxu0 0.0
    %3485 = vmatprep.subr.mxu0 0.0
    %3486 = vmatpush1.xpose.msra.mxu0 0.0
    %3487 = vmatprep.subr.mxu0 0.0
    %3488 = vmatpush1.xpose.msra.mxu0 0.0
    %3489 = vmatprep.subr.mxu0 0.0
    %3490 = vmatpush1.xpose.msra.mxu0 0.0
    %3491 = vmatprep.subr.mxu0 0.0
    %3492 = vmatpush1.xpose.msra.mxu0 0.0
    %3493 = vmatprep.subr.mxu0 0.0
    %3494 = vmatpush1.xpose.msra.mxu0 0.0
    %3495 = vmatprep.subr.mxu0 0.0
    %3496 = vmatpush1.xpose.msra.mxu0 0.0
    %3497 = vmatprep.subr.mxu0 0.0
    %3498 = vmatpush1.xpose.msra.mxu0 0.0
    %3499 = vmatprep.subr.mxu0 0.0
    %3500 = vmatpush1.xpose.msra.mxu0 0.0
    %3501 = vmatprep.subr.mxu0 0.0
    %3502 = vmatpush1.xpose.msra.mxu0 0.0
    %3503 = vmatprep.subr.mxu0 0.0
    %3504 = vmatpush1.xpose.msra.mxu0 0.0
    %3505 = vmatprep.subr.mxu0 0.0
    %3506 = vmatpush1.xpose.msra.mxu0 0.0
    %3507 = vmatprep.subr.mxu0 0.0
    %3508 = vmatpush1.xpose.msra.mxu0 0.0
    %3509 = vmatprep.subr.mxu0 0.0
    %3510 = vmatpush1.xpose.msra.mxu0 0.0
    %3511 = vmatprep.subr.mxu0 0.0
    %3512 = vmatpush1.xpose.msra.mxu0 0.0
    %3513 = vmatprep.subr.mxu0 0.0
    %3514 = vmatpush1.xpose.msra.mxu0 0.0
    %3515 = vmatprep.subr.mxu0 0.0
    %3516 = vmatpush1.xpose.msra.mxu0 0.0
    %3517 = vmatprep.subr.mxu0 0.0
    %3518 = vmatpush1.xpose.msra.mxu0 0.0
    %3519 = vmatprep.subr.mxu0 0.0
    %3520 = vmatpush1.xpose.msra.mxu0 0.0
    %3521 = vmatprep.subr.mxu0 0.0
    %3522 = vmatpush1.xpose.msra.mxu0 0.0
    %3523 = vmatprep.subr.mxu0 0.0
    %3524 = vmatpush1.xpose.msra.mxu0 0.0
    %3525 = vmatprep.subr.mxu0 0.0
    %3526 = vmatpush1.xpose.msra.mxu0 0.0
    %3527 = vmatprep.subr.mxu0 0.0
    %3528 = vmatpush1.xpose.msra.mxu0 0.0
    %3529 = vmatprep.subr.mxu0 0.0
    %3530 = vmatpush1.xpose.msra.mxu0 0.0
    %3531 = vmatprep.subr.mxu0 0.0
    %3532 = vmatpush1.xpose.msra.mxu0 0.0
    %3533 = vmatprep.subr.mxu0 0.0
    %3534 = vmatpush1.xpose.msra.mxu0 0.0
    %3535 = vmatprep.subr.mxu0 0.0
    %3536 = vmatpush1.xpose.msra.mxu0 0.0
    %3537 = vmatprep.mubr.f32.mxu0 0.0
    %3538 = vmatmul.mubr.f32.gmra.mrb[0].mxu0 %v3469
    %v3539 = vpop.f32.mrb[0].mxu0
    %v3540 = vadd.f32 0.0, %v3539
    %v3541 = vpop.f32.mrb[0].mxu0
    %3542 = vdwg.mxu0
    %3543 = vrot.lane.b32.xlu0 %v2428, 112
    %v3544 = vpop.permute.xlu0 %3543
    %3545 = vrot.lane.b32.xlu0 %v2428, 80
    %v3546 = vpop.permute.xlu0 %3545
    %v3547 = vsel %vm150, %v3544, 0
    %v3549 = vsel %vm150, %v3546, 0
    %3551 = vmatprep.subr.mxu0 0.0
    %3552 = vmatpush1.xpose.msra.mxu0 %v3549
    %3553 = vmatprep.subr.mxu0 0.0
    %3554 = vmatpush1.xpose.msra.mxu0 0.0
    %3555 = vmatprep.subr.mxu0 0.0
    %3556 = vmatpush1.xpose.msra.mxu0 0.0
    %3557 = vmatprep.subr.mxu0 0.0
    %3558 = vmatpush1.xpose.msra.mxu0 0.0
    %3559 = vmatprep.subr.mxu0 0.0
    %3560 = vmatpush1.xpose.msra.mxu0 0.0
    %3561 = vmatprep.subr.mxu0 0.0
    %3562 = vmatpush1.xpose.msra.mxu0 0.0
    %3563 = vmatprep.subr.mxu0 0.0
    %3564 = vmatpush1.xpose.msra.mxu0 0.0
    %3565 = vmatprep.subr.mxu0 0.0
    %3566 = vmatpush1.xpose.msra.mxu0 0.0
    %3567 = vmatprep.subr.mxu0 0.0
    %3568 = vmatpush1.xpose.msra.mxu0 0.0
    %3569 = vmatprep.subr.mxu0 0.0
    %3570 = vmatpush1.xpose.msra.mxu0 0.0
    %3571 = vmatprep.subr.mxu0 0.0
    %3572 = vmatpush1.xpose.msra.mxu0 0.0
    %3573 = vmatprep.subr.mxu0 0.0
    %3574 = vmatpush1.xpose.msra.mxu0 0.0
    %3575 = vmatprep.subr.mxu0 0.0
    %3576 = vmatpush1.xpose.msra.mxu0 0.0
    %3577 = vmatprep.subr.mxu0 0.0
    %3578 = vmatpush1.xpose.msra.mxu0 0.0
    %3579 = vmatprep.subr.mxu0 0.0
    %3580 = vmatpush1.xpose.msra.mxu0 0.0
    %3581 = vmatprep.subr.mxu0 0.0
    %3582 = vmatpush1.xpose.msra.mxu0 0.0
    %3583 = vmatprep.subr.mxu0 0.0
    %3584 = vmatpush1.xpose.msra.mxu0 0.0
    %3585 = vmatprep.subr.mxu0 0.0
    %3586 = vmatpush1.xpose.msra.mxu0 0.0
    %3587 = vmatprep.subr.mxu0 0.0
    %3588 = vmatpush1.xpose.msra.mxu0 0.0
    %3589 = vmatprep.subr.mxu0 0.0
    %3590 = vmatpush1.xpose.msra.mxu0 0.0
    %3591 = vmatprep.subr.mxu0 0.0
    %3592 = vmatpush1.xpose.msra.mxu0 0.0
    %3593 = vmatprep.subr.mxu0 0.0
    %3594 = vmatpush1.xpose.msra.mxu0 0.0
    %3595 = vmatprep.subr.mxu0 0.0
    %3596 = vmatpush1.xpose.msra.mxu0 0.0
    %3597 = vmatprep.subr.mxu0 0.0
    %3598 = vmatpush1.xpose.msra.mxu0 0.0
    %3599 = vmatprep.subr.mxu0 0.0
    %3600 = vmatpush1.xpose.msra.mxu0 0.0
    %3601 = vmatprep.subr.mxu0 0.0
    %3602 = vmatpush1.xpose.msra.mxu0 0.0
    %3603 = vmatprep.subr.mxu0 0.0
    %3604 = vmatpush1.xpose.msra.mxu0 0.0
    %3605 = vmatprep.subr.mxu0 0.0
    %3606 = vmatpush1.xpose.msra.mxu0 0.0
    %3607 = vmatprep.subr.mxu0 0.0
    %3608 = vmatpush1.xpose.msra.mxu0 0.0
    %3609 = vmatprep.subr.mxu0 0.0
    %3610 = vmatpush1.xpose.msra.mxu0 0.0
    %3611 = vmatprep.subr.mxu0 0.0
    %3612 = vmatpush1.xpose.msra.mxu0 0.0
    %3613 = vmatprep.subr.mxu0 0.0
    %3614 = vmatpush1.xpose.msra.mxu0 0.0
    %3615 = vmatprep.mubr.f32.mxu0 0.0
    %3616 = vmatmul.mubr.f32.gmra.mrb[0].mxu0 %v3547
    %v3617 = vpop.f32.mrb[0].mxu0
    %v3618 = vadd.f32 0.0, %v3617
    %v3619 = vpop.f32.mrb[0].mxu0
    %3620 = vdwg.mxu0
    %3621 = vrot.lane.b32.xlu0 %v2428, 104
    %v3622 = vpop.permute.xlu0 %3621
    %3623 = vrot.lane.b32.xlu0 %v2428, 72
    %v3624 = vpop.permute.xlu0 %3623
    %v3625 = vsel %vm150, %v3622, 0
    %v3627 = vsel %vm150, %v3624, 0
    %3629 = vmatprep.subr.mxu0 0.0
    %3630 = vmatpush1.xpose.msra.mxu0 %v3627
    %3631 = vmatprep.subr.mxu0 0.0
    %3632 = vmatpush1.xpose.msra.mxu0 0.0
    %3633 = vmatprep.subr.mxu0 0.0
    %3634 = vmatpush1.xpose.msra.mxu0 0.0
    %3635 = vmatprep.subr.mxu0 0.0
    %3636 = vmatpush1.xpose.msra.mxu0 0.0
    %3637 = vmatprep.subr.mxu0 0.0
    %3638 = vmatpush1.xpose.msra.mxu0 0.0
    %3639 = vmatprep.subr.mxu0 0.0
    %3640 = vmatpush1.xpose.msra.mxu0 0.0
    %3641 = vmatprep.subr.mxu0 0.0
    %3642 = vmatpush1.xpose.msra.mxu0 0.0
    %3643 = vmatprep.subr.mxu0 0.0
    %3644 = vmatpush1.xpose.msra.mxu0 0.0
    %3645 = vmatprep.subr.mxu0 0.0
    %3646 = vmatpush1.xpose.msra.mxu0 0.0
    %3647 = vmatprep.subr.mxu0 0.0
    %3648 = vmatpush1.xpose.msra.mxu0 0.0
    %3649 = vmatprep.subr.mxu0 0.0
    %3650 = vmatpush1.xpose.msra.mxu0 0.0
    %3651 = vmatprep.subr.mxu0 0.0
    %3652 = vmatpush1.xpose.msra.mxu0 0.0
    %3653 = vmatprep.subr.mxu0 0.0
    %3654 = vmatpush1.xpose.msra.mxu0 0.0
    %3655 = vmatprep.subr.mxu0 0.0
    %3656 = vmatpush1.xpose.msra.mxu0 0.0
    %3657 = vmatprep.subr.mxu0 0.0
    %3658 = vmatpush1.xpose.msra.mxu0 0.0
    %3659 = vmatprep.subr.mxu0 0.0
    %3660 = vmatpush1.xpose.msra.mxu0 0.0
    %3661 = vmatprep.subr.mxu0 0.0
    %3662 = vmatpush1.xpose.msra.mxu0 0.0
    %3663 = vmatprep.subr.mxu0 0.0
    %3664 = vmatpush1.xpose.msra.mxu0 0.0
    %3665 = vmatprep.subr.mxu0 0.0
    %3666 = vmatpush1.xpose.msra.mxu0 0.0
    %3667 = vmatprep.subr.mxu0 0.0
    %3668 = vmatpush1.xpose.msra.mxu0 0.0
    %3669 = vmatprep.subr.mxu0 0.0
    %3670 = vmatpush1.xpose.msra.mxu0 0.0
    %3671 = vmatprep.subr.mxu0 0.0
    %3672 = vmatpush1.xpose.msra.mxu0 0.0
    %3673 = vmatprep.subr.mxu0 0.0
    %3674 = vmatpush1.xpose.msra.mxu0 0.0
    %3675 = vmatprep.subr.mxu0 0.0
    %3676 = vmatpush1.xpose.msra.mxu0 0.0
    %3677 = vmatprep.subr.mxu0 0.0
    %3678 = vmatpush1.xpose.msra.mxu0 0.0
    %3679 = vmatprep.subr.mxu0 0.0
    %3680 = vmatpush1.xpose.msra.mxu0 0.0
    %3681 = vmatprep.subr.mxu0 0.0
    %3682 = vmatpush1.xpose.msra.mxu0 0.0
    %3683 = vmatprep.subr.mxu0 0.0
    %3684 = vmatpush1.xpose.msra.mxu0 0.0
    %3685 = vmatprep.subr.mxu0 0.0
    %3686 = vmatpush1.xpose.msra.mxu0 0.0
    %3687 = vmatprep.subr.mxu0 0.0
    %3688 = vmatpush1.xpose.msra.mxu0 0.0
    %3689 = vmatprep.subr.mxu0 0.0
    %3690 = vmatpush1.xpose.msra.mxu0 0.0
    %3691 = vmatprep.subr.mxu0 0.0
    %3692 = vmatpush1.xpose.msra.mxu0 0.0
    %3693 = vmatprep.mubr.f32.mxu0 0.0
    %3694 = vmatmul.mubr.f32.gmra.mrb[0].mxu0 %v3625
    %v3695 = vpop.f32.mrb[0].mxu0
    %v3696 = vadd.f32 0.0, %v3695
    %v3697 = vpop.f32.mrb[0].mxu0
    %3698 = vdwg.mxu0
    %v3699 = vadd.f32 %v3462, %v51
    %v3700 = vadd.f32 %v3540, %v51
    %v3701 = vadd.f32 %v3618, %v51
    %v3702 = vadd.f32 %v3696, %v51
    %v3703 = vsel %vm150, %v3699, -inf
    %3704 = vmax.xlane.f32.xlu0 %v3703
    %v3705 = vpop.xlane.xlu0 %3704
    %v3706 = vsel %vm150, %v3700, -inf
    %3707 = vmax.xlane.f32.xlu0 %v3706
    %v3708 = vpop.xlane.xlu0 %3707
    %v3709 = vsel %vm150, %v3701, -inf
    %3710 = vmax.xlane.f32.xlu0 %v3709
    %v3711 = vpop.xlane.xlu0 %3710
    %v3712 = vsel %vm150, %v3702, -inf
    %3713 = vmax.xlane.f32.xlu0 %v3712
    %v3714 = vpop.xlane.xlu0 %3713
    %v3715 = vsub.f32 %v3699, %v3705
    %v3716 = vsub.f32 %v3700, %v3708
    %v3717 = vsub.f32 %v3701, %v3711
    %v3718 = vsub.f32 %v3702, %v3714
    %v3719 = vmul.f32 %v3715, 1.442695
    %v3720 = vpow.pop %v3719
    %v3721 = vmul.f32 %v3716, 1.442695
    %v3722 = vpow.pop %v3721
    %v3723 = vmul.f32 %v3717, 1.442695
    %v3724 = vpow.pop %v3723
    %v3725 = vmul.f32 %v3718, 1.442695
    %v3726 = vpow.pop %v3725
    %v3727 = vsel %vm150, %v3720, 0.0
    %3728 = vadd.xlane.f32.xlu0 %v3727
    %v3729 = vpop.xlane.xlu0 %3728
    %v3730 = vsel %vm150, %v3722, 0.0
    %3731 = vadd.xlane.f32.xlu0 %v3730
    %v3732 = vpop.xlane.xlu0 %3731
    %v3733 = vsel %vm150, %v3724, 0.0
    %3734 = vadd.xlane.f32.xlu0 %v3733
    %v3735 = vpop.xlane.xlu0 %3734
    %v3736 = vsel %vm150, %v3726, 0.0
    %3737 = vadd.xlane.f32.xlu0 %v3736
    %v3738 = vpop.xlane.xlu0 %3737
    %v3739 = vrcp.pop %v3729
    %v3740 = vmul.f32 %v3720, %v3739
    %v3741 = vrcp.pop %v3732
    %v3742 = vmul.f32 %v3722, %v3741
    %v3743 = vrcp.pop %v3735
    %v3744 = vmul.f32 %v3724, %v3743
    %v3745 = vrcp.pop %v3738
    %v3746 = vmul.f32 %v3726, %v3745
    %3747 = vrot.lane.b32.xlu0 %v2428, 64
    %v3748 = vpop.permute.xlu0 %3747
    %v3751 = vsel %vm150, %v3740, 0
    %3753 = vmatprep.subr.mxu0 0.0
    %3754 = vmatpush1.msra.mxu0 %v3748
    %3755 = vmatprep.subr.mxu0 0.0
    %3756 = vmatpush1.msra.mxu0 0.0
    %3757 = vmatprep.subr.mxu0 0.0
    %3758 = vmatpush1.msra.mxu0 0.0
    %3759 = vmatprep.subr.mxu0 0.0
    %3760 = vmatpush1.msra.mxu0 0.0
    %3761 = vmatprep.subr.mxu0 0.0
    %3762 = vmatpush1.msra.mxu0 0.0
    %3763 = vmatprep.subr.mxu0 0.0
    %3764 = vmatpush1.msra.mxu0 0.0
    %3765 = vmatprep.subr.mxu0 0.0
    %3766 = vmatpush1.msra.mxu0 0.0
    %3767 = vmatprep.subr.mxu0 0.0
    %3768 = vmatpush1.msra.mxu0 0.0
    %3769 = vmatprep.subr.mxu0 0.0
    %3770 = vmatpush1.msra.mxu0 0.0
    %3771 = vmatprep.subr.mxu0 0.0
    %3772 = vmatpush1.msra.mxu0 0.0
    %3773 = vmatprep.subr.mxu0 0.0
    %3774 = vmatpush1.msra.mxu0 0.0
    %3775 = vmatprep.subr.mxu0 0.0
    %3776 = vmatpush1.msra.mxu0 0.0
    %3777 = vmatprep.subr.mxu0 0.0
    %3778 = vmatpush1.msra.mxu0 0.0
    %3779 = vmatprep.subr.mxu0 0.0
    %3780 = vmatpush1.msra.mxu0 0.0
    %3781 = vmatprep.subr.mxu0 0.0
    %3782 = vmatpush1.msra.mxu0 0.0
    %3783 = vmatprep.subr.mxu0 0.0
    %3784 = vmatpush1.msra.mxu0 0.0
    %3785 = vmatprep.subr.mxu0 0.0
    %3786 = vmatpush1.msra.mxu0 0.0
    %3787 = vmatprep.subr.mxu0 0.0
    %3788 = vmatpush1.msra.mxu0 0.0
    %3789 = vmatprep.subr.mxu0 0.0
    %3790 = vmatpush1.msra.mxu0 0.0
    %3791 = vmatprep.subr.mxu0 0.0
    %3792 = vmatpush1.msra.mxu0 0.0
    %3793 = vmatprep.subr.mxu0 0.0
    %3794 = vmatpush1.msra.mxu0 0.0
    %3795 = vmatprep.subr.mxu0 0.0
    %3796 = vmatpush1.msra.mxu0 0.0
    %3797 = vmatprep.subr.mxu0 0.0
    %3798 = vmatpush1.msra.mxu0 0.0
    %3799 = vmatprep.subr.mxu0 0.0
    %3800 = vmatpush1.msra.mxu0 0.0
    %3801 = vmatprep.subr.mxu0 0.0
    %3802 = vmatpush1.msra.mxu0 0.0
    %3803 = vmatprep.subr.mxu0 0.0
    %3804 = vmatpush1.msra.mxu0 0.0
    %3805 = vmatprep.subr.mxu0 0.0
    %3806 = vmatpush1.msra.mxu0 0.0
    %3807 = vmatprep.subr.mxu0 0.0
    %3808 = vmatpush1.msra.mxu0 0.0
    %3809 = vmatprep.subr.mxu0 0.0
    %3810 = vmatpush1.msra.mxu0 0.0
    %3811 = vmatprep.subr.mxu0 0.0
    %3812 = vmatpush1.msra.mxu0 0.0
    %3813 = vmatprep.subr.mxu0 0.0
    %3814 = vmatpush1.msra.mxu0 0.0
    %3815 = vmatprep.subr.mxu0 0.0
    %3816 = vmatpush1.msra.mxu0 0.0
    %3817 = vmatprep.mubr.f32.mxu0 0.0
    %3818 = vmatmul.mubr.f32.gmra.mrb[0].mxu0 %v3751
    %v3819 = vpop.f32.mrb[0].mxu0
    %v3820 = vadd.f32 0.0, %v3819
    %v3821 = vpop.f32.mrb[0].mxu0
    %3822 = vdwg.mxu0
    %3823 = vrot.lane.b32.xlu0 %v2428, 56
    %v3824 = vpop.permute.xlu0 %3823
    %v3827 = vsel %vm150, %v3742, 0
    %3829 = vmatprep.subr.mxu0 0.0
    %3830 = vmatpush1.msra.mxu0 %v3824
    %3831 = vmatprep.subr.mxu0 0.0
    %3832 = vmatpush1.msra.mxu0 0.0
    %3833 = vmatprep.subr.mxu0 0.0
    %3834 = vmatpush1.msra.mxu0 0.0
    %3835 = vmatprep.subr.mxu0 0.0
    %3836 = vmatpush1.msra.mxu0 0.0
    %3837 = vmatprep.subr.mxu0 0.0
    %3838 = vmatpush1.msra.mxu0 0.0
    %3839 = vmatprep.subr.mxu0 0.0
    %3840 = vmatpush1.msra.mxu0 0.0
    %3841 = vmatprep.subr.mxu0 0.0
    %3842 = vmatpush1.msra.mxu0 0.0
    %3843 = vmatprep.subr.mxu0 0.0
    %3844 = vmatpush1.msra.mxu0 0.0
    %3845 = vmatprep.subr.mxu0 0.0
    %3846 = vmatpush1.msra.mxu0 0.0
    %3847 = vmatprep.subr.mxu0 0.0
    %3848 = vmatpush1.msra.mxu0 0.0
    %3849 = vmatprep.subr.mxu0 0.0
    %3850 = vmatpush1.msra.mxu0 0.0
    %3851 = vmatprep.subr.mxu0 0.0
    %3852 = vmatpush1.msra.mxu0 0.0
    %3853 = vmatprep.subr.mxu0 0.0
    %3854 = vmatpush1.msra.mxu0 0.0
    %3855 = vmatprep.subr.mxu0 0.0
    %3856 = vmatpush1.msra.mxu0 0.0
    %3857 = vmatprep.subr.mxu0 0.0
    %3858 = vmatpush1.msra.mxu0 0.0
    %3859 = vmatprep.subr.mxu0 0.0
    %3860 = vmatpush1.msra.mxu0 0.0
    %3861 = vmatprep.subr.mxu0 0.0
    %3862 = vmatpush1.msra.mxu0 0.0
    %3863 = vmatprep.subr.mxu0 0.0
    %3864 = vmatpush1.msra.mxu0 0.0
    %3865 = vmatprep.subr.mxu0 0.0
    %3866 = vmatpush1.msra.mxu0 0.0
    %3867 = vmatprep.subr.mxu0 0.0
    %3868 = vmatpush1.msra.mxu0 0.0
    %3869 = vmatprep.subr.mxu0 0.0
    %3870 = vmatpush1.msra.mxu0 0.0
    %3871 = vmatprep.subr.mxu0 0.0
    %3872 = vmatpush1.msra.mxu0 0.0
    %3873 = vmatprep.subr.mxu0 0.0
    %3874 = vmatpush1.msra.mxu0 0.0
    %3875 = vmatprep.subr.mxu0 0.0
    %3876 = vmatpush1.msra.mxu0 0.0
    %3877 = vmatprep.subr.mxu0 0.0
    %3878 = vmatpush1.msra.mxu0 0.0
    %3879 = vmatprep.subr.mxu0 0.0
    %3880 = vmatpush1.msra.mxu0 0.0
    %3881 = vmatprep.subr.mxu0 0.0
    %3882 = vmatpush1.msra.mxu0 0.0
    %3883 = vmatprep.subr.mxu0 0.0
    %3884 = vmatpush1.msra.mxu0 0.0
    %3885 = vmatprep.subr.mxu0 0.0
    %3886 = vmatpush1.msra.mxu0 0.0
    %3887 = vmatprep.subr.mxu0 0.0
    %3888 = vmatpush1.msra.mxu0 0.0
    %3889 = vmatprep.subr.mxu0 0.0
    %3890 = vmatpush1.msra.mxu0 0.0
    %3891 = vmatprep.subr.mxu0 0.0
    %3892 = vmatpush1.msra.mxu0 0.0
    %3893 = vmatprep.mubr.f32.mxu0 0.0
    %3894 = vmatmul.mubr.f32.gmra.mrb[0].mxu0 %v3827
    %v3895 = vpop.f32.mrb[0].mxu0
    %v3896 = vadd.f32 0.0, %v3895
    %v3897 = vpop.f32.mrb[0].mxu0
    %3898 = vdwg.mxu0
    %v3900 = vsel %vm150, %v3896, 0
    %3902 = vmatprep.subr.mxu0 0.0
    %3903 = vmatpush1.msra.mxu0 %v2338
    %3904 = vmatprep.subr.mxu0 0.0
    %3905 = vmatpush1.msra.mxu0 0.0
    %3906 = vmatprep.subr.mxu0 0.0
    %3907 = vmatpush1.msra.mxu0 0.0
    %3908 = vmatprep.subr.mxu0 0.0
    %3909 = vmatpush1.msra.mxu0 0.0
    %3910 = vmatprep.subr.mxu0 0.0
    %3911 = vmatpush1.msra.mxu0 0.0
    %3912 = vmatprep.subr.mxu0 0.0
    %3913 = vmatpush1.msra.mxu0 0.0
    %3914 = vmatprep.subr.mxu0 0.0
    %3915 = vmatpush1.msra.mxu0 0.0
    %3916 = vmatprep.subr.mxu0 0.0
    %3917 = vmatpush1.msra.mxu0 0.0
    %3918 = vmatprep.subr.mxu0 0.0
    %3919 = vmatpush1.msra.mxu0 0.0
    %3920 = vmatprep.subr.mxu0 0.0
    %3921 = vmatpush1.msra.mxu0 0.0
    %3922 = vmatprep.subr.mxu0 0.0
    %3923 = vmatpush1.msra.mxu0 0.0
    %3924 = vmatprep.subr.mxu0 0.0
    %3925 = vmatpush1.msra.mxu0 0.0
    %3926 = vmatprep.subr.mxu0 0.0
    %3927 = vmatpush1.msra.mxu0 0.0
    %3928 = vmatprep.subr.mxu0 0.0
    %3929 = vmatpush1.msra.mxu0 0.0
    %3930 = vmatprep.subr.mxu0 0.0
    %3931 = vmatpush1.msra.mxu0 0.0
    %3932 = vmatprep.subr.mxu0 0.0
    %3933 = vmatpush1.msra.mxu0 0.0
    %3934 = vmatprep.subr.mxu0 0.0
    %3935 = vmatpush1.msra.mxu0 0.0
    %3936 = vmatprep.subr.mxu0 0.0
    %3937 = vmatpush1.msra.mxu0 0.0
    %3938 = vmatprep.subr.mxu0 0.0
    %3939 = vmatpush1.msra.mxu0 0.0
    %3940 = vmatprep.subr.mxu0 0.0
    %3941 = vmatpush1.msra.mxu0 0.0
    %3942 = vmatprep.subr.mxu0 0.0
    %3943 = vmatpush1.msra.mxu0 0.0
    %3944 = vmatprep.subr.mxu0 0.0
    %3945 = vmatpush1.msra.mxu0 0.0
    %3946 = vmatprep.subr.mxu0 0.0
    %3947 = vmatpush1.msra.mxu0 0.0
    %3948 = vmatprep.subr.mxu0 0.0
    %3949 = vmatpush1.msra.mxu0 0.0
    %3950 = vmatprep.subr.mxu0 0.0
    %3951 = vmatpush1.msra.mxu0 0.0
    %3952 = vmatprep.subr.mxu0 0.0
    %3953 = vmatpush1.msra.mxu0 0.0
    %3954 = vmatprep.subr.mxu0 0.0
    %3955 = vmatpush1.msra.mxu0 0.0
    %3956 = vmatprep.subr.mxu0 0.0
    %3957 = vmatpush1.msra.mxu0 0.0
    %3958 = vmatprep.subr.mxu0 0.0
    %3959 = vmatpush1.msra.mxu0 0.0
    %3960 = vmatprep.subr.mxu0 0.0
    %3961 = vmatpush1.msra.mxu0 0.0
    %3962 = vmatprep.subr.mxu0 0.0
    %3963 = vmatpush1.msra.mxu0 0.0
    %3964 = vmatprep.subr.mxu0 0.0
    %3965 = vmatpush1.msra.mxu0 0.0
    %3966 = vmatprep.mubr.f32.mxu0 0.0
    %3967 = vmatmul.mubr.f32.gmra.mrb[0].mxu0 %v3900
    %v3968 = vpop.f32.mrb[0].mxu0
    %v3969 = vadd.f32 0.0, %v3968
    %v3970 = vpop.f32.mrb[0].mxu0
    %3971 = vdwg.mxu0
    %v3973 = vsel %vm150, %v3820, 0
    %3975 = vmatprep.subr.mxu0 0.0
    %3976 = vmatpush1.msra.mxu0 %v2337
    %3977 = vmatprep.subr.mxu0 0.0
    %3978 = vmatpush1.msra.mxu0 0.0
    %3979 = vmatprep.subr.mxu0 0.0
    %3980 = vmatpush1.msra.mxu0 0.0
    %3981 = vmatprep.subr.mxu0 0.0
    %3982 = vmatpush1.msra.mxu0 0.0
    %3983 = vmatprep.subr.mxu0 0.0
    %3984 = vmatpush1.msra.mxu0 0.0
    %3985 = vmatprep.subr.mxu0 0.0
    %3986 = vmatpush1.msra.mxu0 0.0
    %3987 = vmatprep.subr.mxu0 0.0
    %3988 = vmatpush1.msra.mxu0 0.0
    %3989 = vmatprep.subr.mxu0 0.0
    %3990 = vmatpush1.msra.mxu0 0.0
    %3991 = vmatprep.subr.mxu0 0.0
    %3992 = vmatpush1.msra.mxu0 0.0
    %3993 = vmatprep.subr.mxu0 0.0
    %3994 = vmatpush1.msra.mxu0 0.0
    %3995 = vmatprep.subr.mxu0 0.0
    %3996 = vmatpush1.msra.mxu0 0.0
    %3997 = vmatprep.subr.mxu0 0.0
    %3998 = vmatpush1.msra.mxu0 0.0
    %3999 = vmatprep.subr.mxu0 0.0
    %4000 = vmatpush1.msra.mxu0 0.0
    %4001 = vmatprep.subr.mxu0 0.0
    %4002 = vmatpush1.msra.mxu0 0.0
    %4003 = vmatprep.subr.mxu0 0.0
    %4004 = vmatpush1.msra.mxu0 0.0
    %4005 = vmatprep.subr.mxu0 0.0
    %4006 = vmatpush1.msra.mxu0 0.0
    %4007 = vmatprep.subr.mxu0 0.0
    %4008 = vmatpush1.msra.mxu0 0.0
    %4009 = vmatprep.subr.mxu0 0.0
    %4010 = vmatpush1.msra.mxu0 0.0
    %4011 = vmatprep.subr.mxu0 0.0
    %4012 = vmatpush1.msra.mxu0 0.0
    %4013 = vmatprep.subr.mxu0 0.0
    %4014 = vmatpush1.msra.mxu0 0.0
    %4015 = vmatprep.subr.mxu0 0.0
    %4016 = vmatpush1.msra.mxu0 0.0
    %4017 = vmatprep.subr.mxu0 0.0
    %4018 = vmatpush1.msra.mxu0 0.0
    %4019 = vmatprep.subr.mxu0 0.0
    %4020 = vmatpush1.msra.mxu0 0.0
    %4021 = vmatprep.subr.mxu0 0.0
    %4022 = vmatpush1.msra.mxu0 0.0
    %4023 = vmatprep.subr.mxu0 0.0
    %4024 = vmatpush1.msra.mxu0 0.0
    %4025 = vmatprep.subr.mxu0 0.0
    %4026 = vmatpush1.msra.mxu0 0.0
    %4027 = vmatprep.subr.mxu0 0.0
    %4028 = vmatpush1.msra.mxu0 0.0
    %4029 = vmatprep.subr.mxu0 0.0
    %4030 = vmatpush1.msra.mxu0 0.0
    %4031 = vmatprep.subr.mxu0 0.0
    %4032 = vmatpush1.msra.mxu0 0.0
    %4033 = vmatprep.subr.mxu0 0.0
    %4034 = vmatpush1.msra.mxu0 0.0
    %4035 = vmatprep.subr.mxu0 0.0
    %4036 = vmatpush1.msra.mxu0 0.0
    %4037 = vmatprep.subr.mxu0 0.0
    %4038 = vmatpush1.msra.mxu0 0.0
    %4039 = vmatprep.mubr.f32.mxu0 0.0
    %4040 = vmatmul.mubr.f32.gmra.mrb[0].mxu0 %v3973
    %v4041 = vpop.f32.mrb[0].mxu0
    %v4042 = vadd.f32 %v3969, %v4041
    %v4043 = vpop.f32.mrb[0].mxu0
    %4044 = vdwg.mxu0
    %4045 = vrot.lane.b32.xlu0 %v2428, 48
    %v4046 = vpop.permute.xlu0 %4045
    %v4049 = vsel %vm150, %v3744, 0
    %4051 = vmatprep.subr.mxu0 0.0
    %4052 = vmatpush1.msra.mxu0 %v4046
    %4053 = vmatprep.subr.mxu0 0.0
    %4054 = vmatpush1.msra.mxu0 0.0
    %4055 = vmatprep.subr.mxu0 0.0
    %4056 = vmatpush1.msra.mxu0 0.0
    %4057 = vmatprep.subr.mxu0 0.0
    %4058 = vmatpush1.msra.mxu0 0.0
    %4059 = vmatprep.subr.mxu0 0.0
    %4060 = vmatpush1.msra.mxu0 0.0
    %4061 = vmatprep.subr.mxu0 0.0
    %4062 = vmatpush1.msra.mxu0 0.0
    %4063 = vmatprep.subr.mxu0 0.0
    %4064 = vmatpush1.msra.mxu0 0.0
    %4065 = vmatprep.subr.mxu0 0.0
    %4066 = vmatpush1.msra.mxu0 0.0
    %4067 = vmatprep.subr.mxu0 0.0
    %4068 = vmatpush1.msra.mxu0 0.0
    %4069 = vmatprep.subr.mxu0 0.0
    %4070 = vmatpush1.msra.mxu0 0.0
    %4071 = vmatprep.subr.mxu0 0.0
    %4072 = vmatpush1.msra.mxu0 0.0
    %4073 = vmatprep.subr.mxu0 0.0
    %4074 = vmatpush1.msra.mxu0 0.0
    %4075 = vmatprep.subr.mxu0 0.0
    %4076 = vmatpush1.msra.mxu0 0.0
    %4077 = vmatprep.subr.mxu0 0.0
    %4078 = vmatpush1.msra.mxu0 0.0
    %4079 = vmatprep.subr.mxu0 0.0
    %4080 = vmatpush1.msra.mxu0 0.0
    %4081 = vmatprep.subr.mxu0 0.0
    %4082 = vmatpush1.msra.mxu0 0.0
    %4083 = vmatprep.subr.mxu0 0.0
    %4084 = vmatpush1.msra.mxu0 0.0
    %4085 = vmatprep.subr.mxu0 0.0
    %4086 = vmatpush1.msra.mxu0 0.0
    %4087 = vmatprep.subr.mxu0 0.0
    %4088 = vmatpush1.msra.mxu0 0.0
    %4089 = vmatprep.subr.mxu0 0.0
    %4090 = vmatpush1.msra.mxu0 0.0
    %4091 = vmatprep.subr.mxu0 0.0
    %4092 = vmatpush1.msra.mxu0 0.0
    %4093 = vmatprep.subr.mxu0 0.0
    %4094 = vmatpush1.msra.mxu0 0.0
    %4095 = vmatprep.subr.mxu0 0.0
    %4096 = vmatpush1.msra.mxu0 0.0
    %4097 = vmatprep.subr.mxu0 0.0
    %4098 = vmatpush1.msra.mxu0 0.0
    %4099 = vmatprep.subr.mxu0 0.0
    %4100 = vmatpush1.msra.mxu0 0.0
    %4101 = vmatprep.subr.mxu0 0.0
    %4102 = vmatpush1.msra.mxu0 0.0
    %4103 = vmatprep.subr.mxu0 0.0
    %4104 = vmatpush1.msra.mxu0 0.0
    %4105 = vmatprep.subr.mxu0 0.0
    %4106 = vmatpush1.msra.mxu0 0.0
    %4107 = vmatprep.subr.mxu0 0.0
    %4108 = vmatpush1.msra.mxu0 0.0
    %4109 = vmatprep.subr.mxu0 0.0
    %4110 = vmatpush1.msra.mxu0 0.0
    %4111 = vmatprep.subr.mxu0 0.0
    %4112 = vmatpush1.msra.mxu0 0.0
    %4113 = vmatprep.subr.mxu0 0.0
    %4114 = vmatpush1.msra.mxu0 0.0
    %4115 = vmatprep.mubr.f32.mxu0 0.0
    %4116 = vmatmul.mubr.f32.gmra.mrb[0].mxu0 %v4049
    %v4117 = vpop.f32.mrb[0].mxu0
    %v4118 = vadd.f32 0.0, %v4117
    %v4119 = vpop.f32.mrb[0].mxu0
    %4120 = vdwg.mxu0
    %v4122 = vsel %vm150, %v4118, 0
    %4124 = vmatprep.subr.mxu0 0.0
    %4125 = vmatpush1.msra.mxu0 %v2339
    %4126 = vmatprep.subr.mxu0 0.0
    %4127 = vmatpush1.msra.mxu0 0.0
    %4128 = vmatprep.subr.mxu0 0.0
    %4129 = vmatpush1.msra.mxu0 0.0
    %4130 = vmatprep.subr.mxu0 0.0
    %4131 = vmatpush1.msra.mxu0 0.0
    %4132 = vmatprep.subr.mxu0 0.0
    %4133 = vmatpush1.msra.mxu0 0.0
    %4134 = vmatprep.subr.mxu0 0.0
    %4135 = vmatpush1.msra.mxu0 0.0
    %4136 = vmatprep.subr.mxu0 0.0
    %4137 = vmatpush1.msra.mxu0 0.0
    %4138 = vmatprep.subr.mxu0 0.0
    %4139 = vmatpush1.msra.mxu0 0.0
    %4140 = vmatprep.subr.mxu0 0.0
    %4141 = vmatpush1.msra.mxu0 0.0
    %4142 = vmatprep.subr.mxu0 0.0
    %4143 = vmatpush1.msra.mxu0 0.0
    %4144 = vmatprep.subr.mxu0 0.0
    %4145 = vmatpush1.msra.mxu0 0.0
    %4146 = vmatprep.subr.mxu0 0.0
    %4147 = vmatpush1.msra.mxu0 0.0
    %4148 = vmatprep.subr.mxu0 0.0
    %4149 = vmatpush1.msra.mxu0 0.0
    %4150 = vmatprep.subr.mxu0 0.0
    %4151 = vmatpush1.msra.mxu0 0.0
    %4152 = vmatprep.subr.mxu0 0.0
    %4153 = vmatpush1.msra.mxu0 0.0
    %4154 = vmatprep.subr.mxu0 0.0
    %4155 = vmatpush1.msra.mxu0 0.0
    %4156 = vmatprep.subr.mxu0 0.0
    %4157 = vmatpush1.msra.mxu0 0.0
    %4158 = vmatprep.subr.mxu0 0.0
    %4159 = vmatpush1.msra.mxu0 0.0
    %4160 = vmatprep.subr.mxu0 0.0
    %4161 = vmatpush1.msra.mxu0 0.0
    %4162 = vmatprep.subr.mxu0 0.0
    %4163 = vmatpush1.msra.mxu0 0.0
    %4164 = vmatprep.subr.mxu0 0.0
    %4165 = vmatpush1.msra.mxu0 0.0
    %4166 = vmatprep.subr.mxu0 0.0
    %4167 = vmatpush1.msra.mxu0 0.0
    %4168 = vmatprep.subr.mxu0 0.0
    %4169 = vmatpush1.msra.mxu0 0.0
    %4170 = vmatprep.subr.mxu0 0.0
    %4171 = vmatpush1.msra.mxu0 0.0
    %4172 = vmatprep.subr.mxu0 0.0
    %4173 = vmatpush1.msra.mxu0 0.0
    %4174 = vmatprep.subr.mxu0 0.0
    %4175 = vmatpush1.msra.mxu0 0.0
    %4176 = vmatprep.subr.mxu0 0.0
    %4177 = vmatpush1.msra.mxu0 0.0
    %4178 = vmatprep.subr.mxu0 0.0
    %4179 = vmatpush1.msra.mxu0 0.0
    %4180 = vmatprep.subr.mxu0 0.0
    %4181 = vmatpush1.msra.mxu0 0.0
    %4182 = vmatprep.subr.mxu0 0.0
    %4183 = vmatpush1.msra.mxu0 0.0
    %4184 = vmatprep.subr.mxu0 0.0
    %4185 = vmatpush1.msra.mxu0 0.0
    %4186 = vmatprep.subr.mxu0 0.0
    %4187 = vmatpush1.msra.mxu0 0.0
    %4188 = vmatprep.mubr.f32.mxu0 0.0
    %4189 = vmatmul.mubr.f32.gmra.mrb[0].mxu0 %v4122
    %v4190 = vpop.f32.mrb[0].mxu0
    %v4191 = vadd.f32 0.0, %v4190
    %v4192 = vpop.f32.mrb[0].mxu0
    %4193 = vdwg.mxu0
    %v4194 = vadd.f32 %v4042, %v4191
    %4195 = vrot.lane.b32.xlu0 %v2428, 40
    %v4196 = vpop.permute.xlu0 %4195
    %v4199 = vsel %vm150, %v3746, 0
    %4201 = vmatprep.subr.mxu0 0.0
    %4202 = vmatpush1.msra.mxu0 %v4196
    %4203 = vmatprep.subr.mxu0 0.0
    %4204 = vmatpush1.msra.mxu0 0.0
    %4205 = vmatprep.subr.mxu0 0.0
    %4206 = vmatpush1.msra.mxu0 0.0
    %4207 = vmatprep.subr.mxu0 0.0
    %4208 = vmatpush1.msra.mxu0 0.0
    %4209 = vmatprep.subr.mxu0 0.0
    %4210 = vmatpush1.msra.mxu0 0.0
    %4211 = vmatprep.subr.mxu0 0.0
    %4212 = vmatpush1.msra.mxu0 0.0
    %4213 = vmatprep.subr.mxu0 0.0
    %4214 = vmatpush1.msra.mxu0 0.0
    %4215 = vmatprep.subr.mxu0 0.0
    %4216 = vmatpush1.msra.mxu0 0.0
    %4217 = vmatprep.subr.mxu0 0.0
    %4218 = vmatpush1.msra.mxu0 0.0
    %4219 = vmatprep.subr.mxu0 0.0
    %4220 = vmatpush1.msra.mxu0 0.0
    %4221 = vmatprep.subr.mxu0 0.0
    %4222 = vmatpush1.msra.mxu0 0.0
    %4223 = vmatprep.subr.mxu0 0.0
    %4224 = vmatpush1.msra.mxu0 0.0
    %4225 = vmatprep.subr.mxu0 0.0
    %4226 = vmatpush1.msra.mxu0 0.0
    %4227 = vmatprep.subr.mxu0 0.0
    %4228 = vmatpush1.msra.mxu0 0.0
    %4229 = vmatprep.subr.mxu0 0.0
    %4230 = vmatpush1.msra.mxu0 0.0
    %4231 = vmatprep.subr.mxu0 0.0
    %4232 = vmatpush1.msra.mxu0 0.0
    %4233 = vmatprep.subr.mxu0 0.0
    %4234 = vmatpush1.msra.mxu0 0.0
    %4235 = vmatprep.subr.mxu0 0.0
    %4236 = vmatpush1.msra.mxu0 0.0
    %4237 = vmatprep.subr.mxu0 0.0
    %4238 = vmatpush1.msra.mxu0 0.0
    %4239 = vmatprep.subr.mxu0 0.0
    %4240 = vmatpush1.msra.mxu0 0.0
    %4241 = vmatprep.subr.mxu0 0.0
    %4242 = vmatpush1.msra.mxu0 0.0
    %4243 = vmatprep.subr.mxu0 0.0
    %4244 = vmatpush1.msra.mxu0 0.0
    %4245 = vmatprep.subr.mxu0 0.0
    %4246 = vmatpush1.msra.mxu0 0.0
    %4247 = vmatprep.subr.mxu0 0.0
    %4248 = vmatpush1.msra.mxu0 0.0
    %4249 = vmatprep.subr.mxu0 0.0
    %4250 = vmatpush1.msra.mxu0 0.0
    %4251 = vmatprep.subr.mxu0 0.0
    %4252 = vmatpush1.msra.mxu0 0.0
    %4253 = vmatprep.subr.mxu0 0.0
    %4254 = vmatpush1.msra.mxu0 0.0
    %4255 = vmatprep.subr.mxu0 0.0
    %4256 = vmatpush1.msra.mxu0 0.0
    %4257 = vmatprep.subr.mxu0 0.0
    %4258 = vmatpush1.msra.mxu0 0.0
    %4259 = vmatprep.subr.mxu0 0.0
    %4260 = vmatpush1.msra.mxu0 0.0
    %4261 = vmatprep.subr.mxu0 0.0
    %4262 = vmatpush1.msra.mxu0 0.0
    %4263 = vmatprep.subr.mxu0 0.0
    %4264 = vmatpush1.msra.mxu0 0.0
    %4265 = vmatprep.mubr.f32.mxu0 0.0
    %4266 = vmatmul.mubr.f32.gmra.mrb[0].mxu0 %v4199
    %v4267 = vpop.f32.mrb[0].mxu0
    %v4268 = vadd.f32 0.0, %v4267
    %v4269 = vpop.f32.mrb[0].mxu0
    %4270 = vdwg.mxu0
    %v4272 = vsel %vm150, %v4268, 0
    %4274 = vmatprep.subr.mxu0 0.0
    %4275 = vmatpush1.msra.mxu0 %v2340
    %4276 = vmatprep.subr.mxu0 0.0
    %4277 = vmatpush1.msra.mxu0 0.0
    %4278 = vmatprep.subr.mxu0 0.0
    %4279 = vmatpush1.msra.mxu0 0.0
    %4280 = vmatprep.subr.mxu0 0.0
    %4281 = vmatpush1.msra.mxu0 0.0
    %4282 = vmatprep.subr.mxu0 0.0
    %4283 = vmatpush1.msra.mxu0 0.0
    %4284 = vmatprep.subr.mxu0 0.0
    %4285 = vmatpush1.msra.mxu0 0.0
    %4286 = vmatprep.subr.mxu0 0.0
    %4287 = vmatpush1.msra.mxu0 0.0
    %4288 = vmatprep.subr.mxu0 0.0
    %4289 = vmatpush1.msra.mxu0 0.0
    %4290 = vmatprep.subr.mxu0 0.0
    %4291 = vmatpush1.msra.mxu0 0.0
    %4292 = vmatprep.subr.mxu0 0.0
    %4293 = vmatpush1.msra.mxu0 0.0
    %4294 = vmatprep.subr.mxu0 0.0
    %4295 = vmatpush1.msra.mxu0 0.0
    %4296 = vmatprep.subr.mxu0 0.0
    %4297 = vmatpush1.msra.mxu0 0.0
    %4298 = vmatprep.subr.mxu0 0.0
    %4299 = vmatpush1.msra.mxu0 0.0
    %4300 = vmatprep.subr.mxu0 0.0
    %4301 = vmatpush1.msra.mxu0 0.0
    %4302 = vmatprep.subr.mxu0 0.0
    %4303 = vmatpush1.msra.mxu0 0.0
    %4304 = vmatprep.subr.mxu0 0.0
    %4305 = vmatpush1.msra.mxu0 0.0
    %4306 = vmatprep.subr.mxu0 0.0
    %4307 = vmatpush1.msra.mxu0 0.0
    %4308 = vmatprep.subr.mxu0 0.0
    %4309 = vmatpush1.msra.mxu0 0.0
    %4310 = vmatprep.subr.mxu0 0.0
    %4311 = vmatpush1.msra.mxu0 0.0
    %4312 = vmatprep.subr.mxu0 0.0
    %4313 = vmatpush1.msra.mxu0 0.0
    %4314 = vmatprep.subr.mxu0 0.0
    %4315 = vmatpush1.msra.mxu0 0.0
    %4316 = vmatprep.subr.mxu0 0.0
    %4317 = vmatpush1.msra.mxu0 0.0
    %4318 = vmatprep.subr.mxu0 0.0
    %4319 = vmatpush1.msra.mxu0 0.0
    %4320 = vmatprep.subr.mxu0 0.0
    %4321 = vmatpush1.msra.mxu0 0.0
    %4322 = vmatprep.subr.mxu0 0.0
    %4323 = vmatpush1.msra.mxu0 0.0
    %4324 = vmatprep.subr.mxu0 0.0
    %4325 = vmatpush1.msra.mxu0 0.0
    %4326 = vmatprep.subr.mxu0 0.0
    %4327 = vmatpush1.msra.mxu0 0.0
    %4328 = vmatprep.subr.mxu0 0.0
    %4329 = vmatpush1.msra.mxu0 0.0
    %4330 = vmatprep.subr.mxu0 0.0
    %4331 = vmatpush1.msra.mxu0 0.0
    %4332 = vmatprep.subr.mxu0 0.0
    %4333 = vmatpush1.msra.mxu0 0.0
    %4334 = vmatprep.subr.mxu0 0.0
    %4335 = vmatpush1.msra.mxu0 0.0
    %4336 = vmatprep.subr.mxu0 0.0
    %4337 = vmatpush1.msra.mxu0 0.0
    %4338 = vmatprep.mubr.f32.mxu0 0.0
    %4339 = vmatmul.mubr.f32.gmra.mrb[0].mxu0 %v4272
    %v4340 = vpop.f32.mrb[0].mxu0
    %v4341 = vadd.f32 0.0, %v4340
    %v4342 = vpop.f32.mrb[0].mxu0
    %4343 = vdwg.mxu0
    %v4344 = vadd.f32 %v4194, %v4341
    %v4345 = vlaneseq
    %v4346 = vshrl.u32 %v4345, 7
    %v4347 = vsub.s32 1, %v4346
    %v4348 = vrot.slane %v2335, %v4347
    %v4349 = vadd.f32 %v3387, %v4348
    %v4350 = vadd.f32 %v4344, %v4348
    %v4351 = vadd.f32 %v2332, %v4349
    %v4352 = vadd.f32 %v2333, %v4350
    %v4353 = vsel %vm65, %v4351, 0.0
    %4354 = vadd.xlane.f32.xlu0 %v4353
    %v4355 = vpop.xlane.xlu0 %4354
    %v4356 = vsel %vm65, %v4352, 0.0
    %4357 = vadd.xlane.f32.xlu0 %v4356
    %v4358 = vpop.xlane.xlu0 %4357
    %v4359 = vmul.f32 %v4355, %v2076
    %v4360 = vmul.f32 %v4358, %v2076
    %v4361 = vsub.f32 %v4351, %v4359
    %v4362 = vsub.f32 %v4352, %v4360
    %v4363 = vmul.f32 %v4361, %v4361
    %v4364 = vmul.f32 %v4362, %v4362
    %v4365 = vsel %vm65, %v4363, 0.0
    %4366 = vadd.xlane.f32.xlu0 %v4365
    %v4367 = vpop.xlane.xlu0 %4366
    %v4368 = vsel %vm65, %v4364, 0.0
    %4369 = vadd.xlane.f32.xlu0 %v4368
    %v4370 = vpop.xlane.xlu0 %4369
    %v4371 = vmul.f32 %v4367, %v2076
    %v4372 = vmul.f32 %v4370, %v2076
    %v4373 = vadd.f32 %v4371, 1e-05
    %v4374 = vadd.f32 %v4372, 1e-05
    %v4375 = vrsqrt.pop %v4373
    %v4376 = vrsqrt.pop %v4374
    %v4377 = vmul.f32 %v4361, %v4375
    %v4378 = vmul.f32 %v4362, %v4376
    %v4379 = vlaneseq
    %v4380 = vshrl.u32 %v4379, 7
    %v4381 = vsub.s32 4, %v4380
    %v4382 = vrot.slane %v2335, %v4381
    %v4383 = vmul.f32 %v4377, %v4382
    %v4384 = vmul.f32 %v4378, %v4382
    %v4385 = vlaneseq
    %v4386 = vshrl.u32 %v4385, 7
    %v4387 = vsub.s32 5, %v4386
    %v4388 = vrot.slane %v2335, %v4387
    %v4389 = vadd.f32 %v4383, %v4388
    %v4390 = vadd.f32 %v4384, %v4388
    %s4391 = scalar_lea.vmem %s4, 32
    %v4392 = vld [vmem:[%s4391] sm:$0xff]
    %v4393 = vld [vmem:[%s4391 + $0x8] sm:$0xff]
    %v4394 = vld [vmem:[%s4391 + $0x10] sm:$0xff]
    %v4395 = vld [vmem:[%s4391 + $0x18] sm:$0xff]
    %v4396 = vlaneseq
    %v4397 = vshrl.u32 %v4396, 7
    %v4398 = vsub.s32 2, %v4397
    %v4399 = vrot.slane %v2335, %v4398
    %v4401 = vsel %vm65, %v4389, 0
    %v4404 = vsel %vm65, %v4390, 0
    %4406 = vmatprep.subr.mxu0 0.0
    %4407 = vmatpush1.msra.mxu0 %v4392
    %4408 = vmatprep.subr.mxu0 0.0
    %4409 = vmatpush1.msra.mxu0 %v4393
    %4410 = vmatprep.subr.mxu0 0.0
    %4411 = vmatpush1.msra.mxu0 %v4394
    %4412 = vmatprep.subr.mxu0 0.0
    %4413 = vmatpush1.msra.mxu0 %v4395
    %4414 = vmatprep.subr.mxu0 0.0
    %4415 = vmatpush1.msra.mxu0 0.0
    %4416 = vmatprep.subr.mxu0 0.0
    %4417 = vmatpush1.msra.mxu0 0.0
    %4418 = vmatprep.subr.mxu0 0.0
    %4419 = vmatpush1.msra.mxu0 0.0
    %4420 = vmatprep.subr.mxu0 0.0
    %4421 = vmatpush1.msra.mxu0 0.0
    %4422 = vmatprep.subr.mxu0 0.0
    %4423 = vmatpush1.msra.mxu0 0.0
    %4424 = vmatprep.subr.mxu0 0.0
    %4425 = vmatpush1.msra.mxu0 0.0
    %4426 = vmatprep.subr.mxu0 0.0
    %4427 = vmatpush1.msra.mxu0 0.0
    %4428 = vmatprep.subr.mxu0 0.0
    %4429 = vmatpush1.msra.mxu0 0.0
    %4430 = vmatprep.subr.mxu0 0.0
    %4431 = vmatpush1.msra.mxu0 0.0
    %4432 = vmatprep.subr.mxu0 0.0
    %4433 = vmatpush1.msra.mxu0 0.0
    %4434 = vmatprep.subr.mxu0 0.0
    %4435 = vmatpush1.msra.mxu0 0.0
    %4436 = vmatprep.subr.mxu0 0.0
    %4437 = vmatpush1.msra.mxu0 0.0
    %4438 = vmatprep.subr.mxu0 0.0
    %4439 = vmatpush1.msra.mxu0 0.0
    %4440 = vmatprep.subr.mxu0 0.0
    %4441 = vmatpush1.msra.mxu0 0.0
    %4442 = vmatprep.subr.mxu0 0.0
    %4443 = vmatpush1.msra.mxu0 0.0
    %4444 = vmatprep.subr.mxu0 0.0
    %4445 = vmatpush1.msra.mxu0 0.0
    %4446 = vmatprep.subr.mxu0 0.0
    %4447 = vmatpush1.msra.mxu0 0.0
    %4448 = vmatprep.subr.mxu0 0.0
    %4449 = vmatpush1.msra.mxu0 0.0
    %4450 = vmatprep.subr.mxu0 0.0
    %4451 = vmatpush1.msra.mxu0 0.0
    %4452 = vmatprep.subr.mxu0 0.0
    %4453 = vmatpush1.msra.mxu0 0.0
    %4454 = vmatprep.subr.mxu0 0.0
    %4455 = vmatpush1.msra.mxu0 0.0
    %4456 = vmatprep.subr.mxu0 0.0
    %4457 = vmatpush1.msra.mxu0 0.0
    %4458 = vmatprep.subr.mxu0 0.0
    %4459 = vmatpush1.msra.mxu0 0.0
    %4460 = vmatprep.subr.mxu0 0.0
    %4461 = vmatpush1.msra.mxu0 0.0
    %4462 = vmatprep.subr.mxu0 0.0
    %4463 = vmatpush1.msra.mxu0 0.0
    %4464 = vmatprep.subr.mxu0 0.0
    %4465 = vmatpush1.msra.mxu0 0.0
    %4466 = vmatprep.subr.mxu0 0.0
    %4467 = vmatpush1.msra.mxu0 0.0
    %4468 = vmatprep.subr.mxu0 0.0
    %4469 = vmatpush1.msra.mxu0 0.0
    %4470 = vmatprep.mubr.f32.mxu0 0.0
    %4471 = vmatmul.mubr.f32.gmra.mrb[0].mxu0 %v4401
    %v4472 = vpop.f32.mrb[0].mxu0
    %v4473 = vadd.f32 %v4399, %v4472
    %v4474 = vpop.f32.mrb[0].mxu0
    %4475 = vmatprep.mubr.f32.mxu0 0.0
    %4476 = vmatmul.mubr.f32.gmra.mrb[0].mxu0 %v4404
    %v4477 = vpop.f32.mrb[0].mxu0
    %v4478 = vadd.f32 %v4399, %v4477
    %v4479 = vpop.f32.mrb[0].mxu0
    %4480 = vdwg.mxu0
    %v4481 = vmax.f32 %v4473, 0.0
    %v4482 = vmax.f32 %v4478, 0.0
    %s4483 = scalar_lea.vmem %s5, 64
    %v4484 = vld [vmem:[%s4483] sm:$0xff]
    %v4485 = vld [vmem:[%s4483 + $0x8] sm:$0xff]
    %v4486 = vld [vmem:[%s4483 + $0x10] sm:$0xff]
    %v4487 = vld [vmem:[%s4483 + $0x18] sm:$0xff]
    %v4488 = vld [vmem:[%s4483 + $0x20] sm:$0xff]
    %v4489 = vld [vmem:[%s4483 + $0x28] sm:$0xff]
    %v4490 = vld [vmem:[%s4483 + $0x30] sm:$0xff]
    %v4491 = vld [vmem:[%s4483 + $0x38] sm:$0xff]
    %v4492 = vlaneseq
    %v4493 = vshrl.u32 %v4492, 7
    %v4494 = vsub.s32 3, %v4493
    %v4495 = vrot.slane %v2335, %v4494
    %v4497 = vsel %vm2212, %v4481, 0
    %v4500 = vsel %vm2212, %v4482, 0
    %4502 = vmatprep.subr.mxu0 0.0
    %4503 = vmatpush1.msra.mxu0 %v4484
    %4504 = vmatprep.subr.mxu0 0.0
    %4505 = vmatpush1.msra.mxu0 %v4485
    %4506 = vmatprep.subr.mxu0 0.0
    %4507 = vmatpush1.msra.mxu0 %v4486
    %4508 = vmatprep.subr.mxu0 0.0
    %4509 = vmatpush1.msra.mxu0 %v4487
    %4510 = vmatprep.subr.mxu0 0.0
    %4511 = vmatpush1.msra.mxu0 %v4488
    %4512 = vmatprep.subr.mxu0 0.0
    %4513 = vmatpush1.msra.mxu0 %v4489
    %4514 = vmatprep.subr.mxu0 0.0
    %4515 = vmatpush1.msra.mxu0 %v4490
    %4516 = vmatprep.subr.mxu0 0.0
    %4517 = vmatpush1.msra.mxu0 %v4491
    %4518 = vmatprep.subr.mxu0 0.0
    %4519 = vmatpush1.msra.mxu0 0.0
    %4520 = vmatprep.subr.mxu0 0.0
    %4521 = vmatpush1.msra.mxu0 0.0
    %4522 = vmatprep.subr.mxu0 0.0
    %4523 = vmatpush1.msra.mxu0 0.0
    %4524 = vmatprep.subr.mxu0 0.0
    %4525 = vmatpush1.msra.mxu0 0.0
    %4526 = vmatprep.subr.mxu0 0.0
    %4527 = vmatpush1.msra.mxu0 0.0
    %4528 = vmatprep.subr.mxu0 0.0
    %4529 = vmatpush1.msra.mxu0 0.0
    %4530 = vmatprep.subr.mxu0 0.0
    %4531 = vmatpush1.msra.mxu0 0.0
    %4532 = vmatprep.subr.mxu0 0.0
    %4533 = vmatpush1.msra.mxu0 0.0
    %4534 = vmatprep.subr.mxu0 0.0
    %4535 = vmatpush1.msra.mxu0 0.0
    %4536 = vmatprep.subr.mxu0 0.0
    %4537 = vmatpush1.msra.mxu0 0.0
    %4538 = vmatprep.subr.mxu0 0.0
    %4539 = vmatpush1.msra.mxu0 0.0
    %4540 = vmatprep.subr.mxu0 0.0
    %4541 = vmatpush1.msra.mxu0 0.0
    %4542 = vmatprep.subr.mxu0 0.0
    %4543 = vmatpush1.msra.mxu0 0.0
    %4544 = vmatprep.subr.mxu0 0.0
    %4545 = vmatpush1.msra.mxu0 0.0
    %4546 = vmatprep.subr.mxu0 0.0
    %4547 = vmatpush1.msra.mxu0 0.0
    %4548 = vmatprep.subr.mxu0 0.0
    %4549 = vmatpush1.msra.mxu0 0.0
    %4550 = vmatprep.subr.mxu0 0.0
    %4551 = vmatpush1.msra.mxu0 0.0
    %4552 = vmatprep.subr.mxu0 0.0
    %4553 = vmatpush1.msra.mxu0 0.0
    %4554 = vmatprep.subr.mxu0 0.0
    %4555 = vmatpush1.msra.mxu0 0.0
    %4556 = vmatprep.subr.mxu0 0.0
    %4557 = vmatpush1.msra.mxu0 0.0
    %4558 = vmatprep.subr.mxu0 0.0
    %4559 = vmatpush1.msra.mxu0 0.0
    %4560 = vmatprep.subr.mxu0 0.0
    %4561 = vmatpush1.msra.mxu0 0.0
    %4562 = vmatprep.subr.mxu0 0.0
    %4563 = vmatpush1.msra.mxu0 0.0
    %4564 = vmatprep.subr.mxu0 0.0
    %4565 = vmatpush1.msra.mxu0 0.0
    %4566 = vmatprep.mubr.f32.mxu0 0.0
    %4567 = vmatmul.mubr.f32.gmra.mrb[0].mxu0 %v4497
    %v4568 = vpop.f32.mrb[0].mxu0
    %v4569 = vadd.f32 %v4495, %v4568
    %v4570 = vpop.f32.mrb[0].mxu0
    %4571 = vmatprep.mubr.f32.mxu0 0.0
    %4572 = vmatmul.mubr.f32.gmra.mrb[0].mxu0 %v4500
    %v4573 = vpop.f32.mrb[0].mxu0
    %v4574 = vadd.f32 %v4495, %v4573
    %v4575 = vpop.f32.mrb[0].mxu0
    %4576 = vdwg.mxu0
    %v4577 = vadd.f32 %v4389, %v4569
    %v4578 = vadd.f32 %v4390, %v4574
    %v4579 = vsel %vm65, %v4577, 0.0
    %4580 = vadd.xlane.f32.xlu0 %v4579
    %v4581 = vpop.xlane.xlu0 %4580
    %v4582 = vsel %vm65, %v4578, 0.0
    %4583 = vadd.xlane.f32.xlu0 %v4582
    %v4584 = vpop.xlane.xlu0 %4583
    %v4585 = vmul.f32 %v4581, %v2076
    %v4586 = vmul.f32 %v4584, %v2076
    %v4587 = vsub.f32 %v4577, %v4585
    %v4588 = vsub.f32 %v4578, %v4586
    %v4589 = vmul.f32 %v4587, %v4587
    %v4590 = vmul.f32 %v4588, %v4588
    %v4591 = vsel %vm65, %v4589, 0.0
    %4592 = vadd.xlane.f32.xlu0 %v4591
    %v4593 = vpop.xlane.xlu0 %4592
    %v4594 = vsel %vm65, %v4590, 0.0
    %4595 = vadd.xlane.f32.xlu0 %v4594
    %v4596 = vpop.xlane.xlu0 %4595
    %v4597 = vmul.f32 %v4593, %v2076
    %v4598 = vmul.f32 %v4596, %v2076
    %v4599 = vadd.f32 %v4597, 1e-05
    %v4600 = vadd.f32 %v4598, 1e-05
    %v4601 = vrsqrt.pop %v4599
    %v4602 = vrsqrt.pop %v4600
    %v4603 = vmul.f32 %v4587, %v4601
    %v4604 = vmul.f32 %v4588, %v4602
    %v4605 = vlaneseq
    %v4606 = vshrl.u32 %v4605, 7
    %v4607 = vsub.s32 6, %v4606
    %v4608 = vrot.slane %v2335, %v4607
    %v4609 = vmul.f32 %v4603, %v4608
    %v4610 = vmul.f32 %v4604, %v4608
    %v4611 = vlaneseq
    %v4612 = vshrl.u32 %v4611, 7
    %v4613 = vsub.s32 7, %v4612
    %v4614 = vrot.slane %v2335, %v4613
    %v4615 = vadd.f32 %v4609, %v4614
    %v4616 = vadd.f32 %v4610, %v4614
    %v4617 = vsel %vm65, %v4615, 0.0
    %v4618 = vrot.slane %v4617, 4
    %v4619 = vadd.f32 %v4617, %v4618
    %v4620 = vrot.slane %v4619, 2
    %v4621 = vadd.f32 %v4619, %v4620
    %v4622 = vrot.slane %v4621, 1
    %v4623 = vadd.f32 %v4621, %v4622
    %v4624 = vsel %vm65, %v4616, 0.0
    %v4625 = vrot.slane %v4624, 4
    %v4626 = vadd.f32 %v4624, %v4625
    %v4627 = vrot.slane %v4626, 2
    %v4628 = vadd.f32 %v4626, %v4627
    %v4629 = vrot.slane %v4628, 1
    %v4630 = vadd.f32 %v4628, %v4629
    %vm4631 = vcmask 1040384
    %v4632 = vsel %vm4631, %v4623, %v4630
    %vm4633 = vcmask 254976
    %4634 = vst.msk [vmem:[#allocation5] sm:$0x3] %vm4633, %v4632
    // Predicated region
    $region34: #{tpu_custom_call.1} parent=1 // pred_check
      _
    $region35: #{tpu_custom_call.1} parent=1 // pred_check_branch
      %4636 = sbr.rel (0) target = $region37
    $region36: #{tpu_custom_call.1} parent=1 // pred_region
      %s4638 = ssub.s32 32, 32
      %4639 = vsyncadd [#allocation4], %s4638
      %s4641 = sshll.u32 [#allocation5], 4
      %s4642 = int_to_ptr.vmem [resolvable:$true] %s4641
      %4644 = dma.vmem_to_hbm [thread:$0]  %s4642, 32, %s7, [#allocation4]
    $region37: #{tpu_custom_call.1} parent=1 // pred_fallthru
      _
    // Predicated region
    $region38: #{tpu_custom_call.1} parent=1 // pred_check
      _
    $region39: #{tpu_custom_call.1} parent=1 // pred_check_branch
      %4646 = sbr.rel (0) target = $region41
    $region40: #{tpu_custom_call.1} parent=1 // pred_region
      %4647 = dma.done [#allocation4], 32
    $region41: #{tpu_custom_call.1} parent=1 // pred_fallthru
      _
    %4648 = vsyncpa [#allocation3], 1
    %4649 = vsyncpa [#allocation4], 1

</llo_original>
